<compile_context>
chip_gen: v5e
topology: v5e:2x2
jax: 0.10.0
libtpu: 0.0.40
codegen_flags: <defaults>
</compile_context>

<pallas_src>
import functools

import jax
import jax.numpy as jnp
from jax.experimental import pallas as pl
from jax.experimental.pallas import tpu as pltpu

LRELU_SLOPE = 0.01  # nn.LeakyReLU default negative_slope
_TAPS = tuple((dy, dx) for dy in range(3) for dx in range(3))  # ky-major tap order


def _lrelu(x):
    return jnp.where(x >= 0.0, x, LRELU_SLOPE * x)


def _fused_disc_kernel(ho, wo,
                       xpar_ref, w1_ref, b1_ref, wr1_ref, br1_ref,
                       wr2_ref, br2_ref, wct_ref, bc_ref, out_ref,
                       pad_a, pad_b):
    """Whole GAN_dis_AE_patch forward for ONE image (grid axis = batch).

    Flat layout: a padded (Ho+2, Wp=Wo+2, C) map is stored as ((Ho+2)*Wp, C)
    rows; for output flat index q = oy*Wp + ox, tap (dy, dx) reads row
    q + dy*Wp + dx, so every tap is a contiguous row-slab -> one MXU matmul.
    The last two columns of every output row are out-of-image and masked to
    zero before being stored back (they land on the zero borders).
    """
    wp = wo + 2
    mq = ho * wp                       # flat rows computed per stage
    c1 = b1_ref.shape[-1]

    # Zero ONLY the never-written border strips (top pad row + row-1 left pad,
    # and the bottom pad rows). Done every step (2*(wp+1) tiny rows per buffer)
    # so correctness holds when the parallel batch axis is sharded across cores.
    zstrip = jnp.zeros((wp + 1, c1), pad_a.dtype)
    for buf in (pad_a, pad_b):
        buf[pl.ds(0, wp + 1), :] = zstrip
        buf[pl.ds((ho + 1) * wp + 1, wp + 1), :] = zstrip

    # Column-validity mask over the flat rows, shared by all stages.
    col = jax.lax.broadcasted_iota(jnp.int32, (mq, 1), 0) % wp
    valid = col < wo

    def conv3x3(tap_load, w_ref):
        acc = jnp.zeros((mq, c1), jnp.float32)
        for t, (dy, dx) in enumerate(_TAPS):
            acc = acc + jnp.dot(tap_load(dy, dx), w_ref[t],
                                preferred_element_type=jnp.float32)
        return acc

    # ---- stage 1: Conv2d(n_in, n_out, k=3, s=2, p=1) + LeakyReLU -------------
    # sub-pixel decomposition: x_pad[2*oy+dy, 2*ox+dx] ==
    #   parity[2*(dy%2)+(dx%2)][oy + dy//2, ox + dx//2]
    def s1_tap(dy, dx):
        p = 2 * (dy % 2) + (dx % 2)
        off = (dy // 2) * wp + (dx // 2)
        return xpar_ref[0, p, pl.ds(off, mq), :]          # (Mq, Cin) bf16 slab

    f1 = _lrelu(conv3x3(s1_tap, w1_ref) + b1_ref[...])     # (Mq, C1) f32
    pad_a[pl.ds(wp + 1, mq), :] = jnp.where(valid, f1, 0.0).astype(pad_a.dtype)

    # ---- residual block, conv 1: Conv2d(n_out, n_out, 3, 1, 1) + LeakyReLU ---
    def a_tap(dy, dx):
        return pad_a[pl.ds(dy * wp + dx, mq), :]

    h = _lrelu(conv3x3(a_tap, wr1_ref) + br1_ref[...])
    pad_b[pl.ds(wp + 1, mq), :] = jnp.where(valid, h, 0.0).astype(pad_b.dtype)

    # ---- residual block, conv 2 + skip (skip re-read from pad_a interior) ----
    def b_tap(dy, dx):
        return pad_b[pl.ds(dy * wp + dx, mq), :]

    feat = (conv3x3(b_tap, wr2_ref) + br2_ref[...]
            + pad_a[pl.ds(wp + 1, mq), :].astype(jnp.float32))   # (Mq, C1)

    # ---- 1x1 conv head + sigmoid, (cluster, Mq) lane-dense store -------------
    logits = jax.lax.dot_general(wct_ref[...], feat,
                                 (((1,), (1,)), ((), ())),
                                 preferred_element_type=jnp.float32)  # (cluster, Mq)
    out_ref[0] = 1.0 / (1.0 + jnp.exp(-(logits + bc_ref[...])))


def _const_spec(shape):
    rank = len(shape)

    def imap(i):
        return (0,) * rank

    return pl.BlockSpec(shape, imap)


def gan_dis_ae_patch_forward(rois_features, params):
    """rois_features: (N, n_in, H, W) NCHW -> (N, cluster_num, H//2, W//2) probs."""
    n, cin, hh, ww = rois_features.shape
    assert hh % 2 == 0 and ww % 2 == 0, "k=3,s=2,p=1 parity split assumes even H,W"
    c1 = params["b1"].shape[-1]
    cluster = params["bc"].shape[0]
    ho, wo = hh // 2, ww // 2
    wp = wo + 2
    mq = ho * wp
    p1 = (ho + 2) * wp          # flat rows per parity tensor (incl. 1 slack row/col)

    # Wrapper layout glue (bf16 to halve the HBM traffic of these copies):
    # NCHW -> NHWC, one asymmetric pad that also supplies the slack row/column
    # each parity tensor needs, then split into the 4 stride-2 parities and
    # flatten each to (rows, Cin).
    x = jnp.transpose(rois_features, (0, 2, 3, 1)).astype(jnp.bfloat16)
    xpad = jnp.pad(x, ((0, 0), (1, 3), (1, 3), (0, 0)))           # (N, H+4, W+4, Cin)
    xpar = (xpad.reshape(n, ho + 2, 2, wo + 2, 2, cin)
                .transpose(0, 2, 4, 1, 3, 5)                       # (N,2,2,Ho+2,Wo+2,Cin)
                .reshape(n, 4, p1, cin))

    kernel = functools.partial(_fused_disc_kernel, ho, wo)

    in_specs = [
        pl.BlockSpec((1, 4, p1, cin), lambda i: (i, 0, 0, 0)),     # per-image input
        _const_spec(params["w1"].shape),                           # weights: constant
        _const_spec(params["b1"].shape),                           # index maps -> DMA'd
        _const_spec(params["wr1"].shape),                          # once, VMEM-resident
        _const_spec(params["br1"].shape),
        _const_spec(params["wr2"].shape),
        _const_spec(params["br2"].shape),
        _const_spec(params["wct"].shape),
        _const_spec(params["bc"].shape),
    ]
    out_spec = pl.BlockSpec((1, cluster, mq), lambda i: (i, 0, 0))

    out = pl.pallas_call(
        kernel,
        out_shape=jax.ShapeDtypeStruct((n, cluster, mq), jnp.float32),
        grid=(n,),
        in_specs=in_specs,
        out_specs=out_spec,
        scratch_shapes=[
            pltpu.VMEM(((ho + 3) * wp, c1), jnp.bfloat16),   # pad_a (stage-1 act, skip)
            pltpu.VMEM(((ho + 3) * wp, c1), jnp.bfloat16),   # pad_b (res-conv-1 act)
        ],
        compiler_params=pltpu.CompilerParams(
            dimension_semantics=("parallel",),
            vmem_limit_bytes=32 * 1024 * 1024,
        ),
    )(xpar, params["w1"], params["b1"], params["wr1"], params["br1"],
      params["wr2"], params["br2"], params["wct"], params["bc"])

    # (N, cluster, Ho*Wp) -> drop the 2 garbage columns per row -> NCHW
    return out.reshape(n, cluster, ho, wp)[:, :, :, :wo]


# ------------------------------ parameter glue --------------------------------

def conv_w_to_taps(w):
    """nn.Conv2d weight (Cout, Cin, 3, 3) -> (9, Cin, Cout), tap order (ky, kx)."""
    cout, cin = w.shape[0], w.shape[1]
    return jnp.transpose(w, (2, 3, 1, 0)).reshape(9, cin, cout)


def init_params(key, n_in, n_out, cluster_num, conv_dtype=jnp.bfloat16):
    ks = jax.random.split(key, 8)

    def nrm(k, shape):  # gaussian_weights_init: N(0, 0.02)
        return jax.random.normal(k, shape, jnp.float32) * 0.02

    w1 = nrm(ks[0], (n_out, n_in, 3, 3))
    wr1 = nrm(ks[2], (n_out, n_out, 3, 3))
    wr2 = nrm(ks[4], (n_out, n_out, 3, 3))
    wc = nrm(ks[6], (cluster_num, n_out, 1, 1))   # 1x1 conv head
    return {
        # 3x3 conv weights in bf16 (MXU operands); biases + tiny head in f32.
        "w1": conv_w_to_taps(w1).astype(conv_dtype),   "b1": nrm(ks[1], (1, n_out)),
        "wr1": conv_w_to_taps(wr1).astype(conv_dtype), "br1": nrm(ks[3], (1, n_out)),
        "wr2": conv_w_to_taps(wr2).astype(conv_dtype), "br2": nrm(ks[5], (1, n_out)),
        "wct": wc[:, :, 0, 0],                         # (cluster, n_out) f32
        "bc": nrm(ks[7], (cluster_num, 1)),
    }


if __name__ == "__main__":
    # Small shapes consistent with the module (its defaults are n_in=128,
    # n_out=256, cluster_num=4; the module accepts a params dict, so we run a
    # scaled-down configuration for the example).
    N, N_IN, N_OUT, CLUSTER, H, W = 2, 16, 32, 4, 16, 16

    key = jax.random.PRNGKey(0)
    k_x, k_p = jax.random.split(key)
    rois_features = jax.random.normal(k_x, (N, N_IN, H, W), jnp.float32)
    params = init_params(k_p, N_IN, N_OUT, CLUSTER)

    fwd = jax.jit(gan_dis_ae_patch_forward)
    out = fwd(rois_features, params)
    jax.block_until_ready(out)

    assert out.shape == (N, CLUSTER, H // 2, W // 2), out.shape
    assert bool(jnp.all(jnp.isfinite(out)))
    assert bool(jnp.all((out > 0.0) & (out < 1.0)))   # sigmoid range
    print("KERNEL_OK")
</pallas_src>

<mosaic_0001>
module attributes {stable_mosaic.version = 11 : i64} {
  func.func @_fused_disc_kernel(%arg0: i32, %arg1: memref<1x4x100x16xbf16, #tpu.memory_space<vmem>>, %arg2: memref<9x16x32xbf16, #tpu.memory_space<vmem>>, %arg3: memref<1x32xf32, #tpu.memory_space<vmem>>, %arg4: memref<9x32x32xbf16, #tpu.memory_space<vmem>>, %arg5: memref<1x32xf32, #tpu.memory_space<vmem>>, %arg6: memref<9x32x32xbf16, #tpu.memory_space<vmem>>, %arg7: memref<1x32xf32, #tpu.memory_space<vmem>>, %arg8: memref<4x32xf32, #tpu.memory_space<vmem>>, %arg9: memref<4x1xf32, #tpu.memory_space<vmem>>, %arg10: memref<1x4x80xf32, #tpu.memory_space<vmem>>, %arg11: memref<110x32xbf16, #tpu.memory_space<vmem>>, %arg12: memref<110x32xbf16, #tpu.memory_space<vmem>>) attributes {dimension_semantics = [#tpu.dimension_semantics<parallel>], iteration_bounds = array<i64: 2>, scalar_prefetch = 0 : i64, scratch_operands = 2 : i64, tpu.core_type = #tpu.core_type<tc>, window_params = [{transform_indices = @transform_0, window_bounds = array<i64: 1, 4, 100, 16>}, {pipeline_mode = #tpu.pipeline_mode<synchronous>, transform_indices = @transform_1, window_bounds = array<i64: 9, 16, 32>}, {pipeline_mode = #tpu.pipeline_mode<synchronous>, transform_indices = @transform_2, window_bounds = array<i64: 1, 32>}, {pipeline_mode = #tpu.pipeline_mode<synchronous>, transform_indices = @transform_3, window_bounds = array<i64: 9, 32, 32>}, {pipeline_mode = #tpu.pipeline_mode<synchronous>, transform_indices = @transform_4, window_bounds = array<i64: 1, 32>}, {pipeline_mode = #tpu.pipeline_mode<synchronous>, transform_indices = @transform_5, window_bounds = array<i64: 9, 32, 32>}, {pipeline_mode = #tpu.pipeline_mode<synchronous>, transform_indices = @transform_6, window_bounds = array<i64: 1, 32>}, {pipeline_mode = #tpu.pipeline_mode<synchronous>, transform_indices = @transform_7, window_bounds = array<i64: 4, 32>}, {pipeline_mode = #tpu.pipeline_mode<synchronous>, transform_indices = @transform_8, window_bounds = array<i64: 4, 1>}, {transform_indices = @transform_9, window_bounds = array<i64: 1, 4, 80>}]} {
    %cst = arith.constant 0.000000e+00 : bf16
    %0 = vector.broadcast %cst : bf16 to vector<11x32xbf16>
    %c0 = arith.constant 0 : index
    %c0_0 = arith.constant 0 : index
    %1 = vector.load %arg11[%c0, %c0_0] : memref<110x32xbf16, #tpu.memory_space<vmem>>, vector<11x32xbf16>
    tpu.vector_store %arg11[%c0, %c0_0], %0 {strides = array<i32>} : memref<110x32xbf16, #tpu.memory_space<vmem>>, vector<11x32xbf16>,
    %c91 = arith.constant 91 : index
    %c0_1 = arith.constant 0 : index
    %2 = vector.load %arg11[%c91, %c0_1] : memref<110x32xbf16, #tpu.memory_space<vmem>>, vector<11x32xbf16>
    tpu.vector_store %arg11[%c91, %c0_1], %0 {strides = array<i32>} : memref<110x32xbf16, #tpu.memory_space<vmem>>, vector<11x32xbf16>,
    %c0_2 = arith.constant 0 : index
    %c0_3 = arith.constant 0 : index
    %3 = vector.load %arg12[%c0_2, %c0_3] : memref<110x32xbf16, #tpu.memory_space<vmem>>, vector<11x32xbf16>
    tpu.vector_store %arg12[%c0_2, %c0_3], %0 {strides = array<i32>} : memref<110x32xbf16, #tpu.memory_space<vmem>>, vector<11x32xbf16>,
    %c91_4 = arith.constant 91 : index
    %c0_5 = arith.constant 0 : index
    %4 = vector.load %arg12[%c91_4, %c0_5] : memref<110x32xbf16, #tpu.memory_space<vmem>>, vector<11x32xbf16>
    tpu.vector_store %arg12[%c91_4, %c0_5], %0 {strides = array<i32>} : memref<110x32xbf16, #tpu.memory_space<vmem>>, vector<11x32xbf16>,
    %5 = tpu.iota {dimensions = array<i32: 0>} : vector<80x1xi32>
    %c10_i32 = arith.constant 10 : i32
    %c0_i32 = arith.constant 0 : i32
    %6 = arith.cmpi eq, %c10_i32, %c0_i32 : i32
    %c1_i32 = arith.constant 1 : i32
    %7 = arith.select %6, %c1_i32, %c10_i32 : i32
    %8 = vector.broadcast %7 : i32 to vector<80x1xi32>
    %9 = arith.remsi %5, %8 : vector<80x1xi32>
    %c0_i32_6 = arith.constant 0 : i32
    %10 = vector.broadcast %c0_i32_6 : i32 to vector<80x1xi32>
    %11 = arith.cmpi ne, %9, %10 : vector<80x1xi32>
    %c0_i32_7 = arith.constant 0 : i32
    %12 = vector.broadcast %c0_i32_7 : i32 to vector<80x1xi32>
    %13 = arith.cmpi slt, %9, %12 : vector<80x1xi32>
    %c0_i32_8 = arith.constant 0 : i32
    %14 = arith.cmpi slt, %7, %c0_i32_8 : i32
    %15 = vector.broadcast %14 : i1 to vector<80x1xi1>
    %16 = vector.broadcast %15 : vector<80x1xi1> to vector<80x1xi1>
    %17 = arith.xori %13, %16 : vector<80x1xi1>
    %18 = arith.andi %17, %11 : vector<80x1xi1>
    %19 = vector.broadcast %7 : i32 to vector<80x1xi32>
    %20 = arith.addi %9, %19 : vector<80x1xi32>
    %21 = arith.select %18, %20, %9 : vector<80x1xi1>, vector<80x1xi32>
    %c8_i32 = arith.constant 8 : i32
    %22 = vector.broadcast %c8_i32 : i32 to vector<80x1xi32>
    %23 = arith.cmpi slt, %21, %22 : vector<80x1xi32>
    %cst_9 = arith.constant 0.000000e+00 : f32
    %24 = vector.broadcast %cst_9 : f32 to vector<80x32xf32>
    %c0_10 = arith.constant 0 : index
    %c0_11 = arith.constant 0 : index
    %c0_12 = arith.constant 0 : index
    %c0_13 = arith.constant 0 : index
    %25 = vector.load %arg1[%c0_10, %c0_11, %c0_12, %c0_13] : memref<1x4x100x16xbf16, #tpu.memory_space<vmem>>, vector<1x1x80x16xbf16>
    %26 = vector.shape_cast %25 : vector<1x1x80x16xbf16> to vector<80x16xbf16>
    %c0_14 = arith.constant 0 : index
    %c0_15 = arith.constant 0 : index
    %c0_16 = arith.constant 0 : index
    %27 = vector.load %arg2[%c0_14, %c0_15, %c0_16] : memref<9x16x32xbf16, #tpu.memory_space<vmem>>, vector<1x16x32xbf16>
    %28 = vector.shape_cast %27 : vector<1x16x32xbf16> to vector<16x32xbf16>
    %cst_17 = arith.constant dense<0.000000e+00> : vector<80x32xf32>
    %29 = tpu.matmul %26, %28, %cst_17 {dimension_numbers = #tpu.dot_dimension_numbers<[1], [0], [0], [1], [0, 0, 1, 1], [], []>} : vector<80x16xbf16>, vector<16x32xbf16>, vector<80x32xf32> -> vector<80x32xf32>
    %30 = arith.addf %24, %29 : vector<80x32xf32>
    %c0_18 = arith.constant 0 : index
    %c1 = arith.constant 1 : index
    %c0_19 = arith.constant 0 : index
    %c0_20 = arith.constant 0 : index
    %31 = vector.load %arg1[%c0_18, %c1, %c0_19, %c0_20] : memref<1x4x100x16xbf16, #tpu.memory_space<vmem>>, vector<1x1x80x16xbf16>
    %32 = vector.shape_cast %31 : vector<1x1x80x16xbf16> to vector<80x16xbf16>
    %c1_21 = arith.constant 1 : index
    %c0_22 = arith.constant 0 : index
    %c0_23 = arith.constant 0 : index
    %33 = vector.load %arg2[%c1_21, %c0_22, %c0_23] : memref<9x16x32xbf16, #tpu.memory_space<vmem>>, vector<1x16x32xbf16>
    %34 = vector.shape_cast %33 : vector<1x16x32xbf16> to vector<16x32xbf16>
    %cst_24 = arith.constant dense<0.000000e+00> : vector<80x32xf32>
    %35 = tpu.matmul %32, %34, %cst_24 {dimension_numbers = #tpu.dot_dimension_numbers<[1], [0], [0], [1], [0, 0, 1, 1], [], []>} : vector<80x16xbf16>, vector<16x32xbf16>, vector<80x32xf32> -> vector<80x32xf32>
    %36 = arith.addf %30, %35 : vector<80x32xf32>
    %c0_25 = arith.constant 0 : index
    %c0_26 = arith.constant 0 : index
    %c1_27 = arith.constant 1 : index
    %c0_28 = arith.constant 0 : index
    %37 = vector.load %arg1[%c0_25, %c0_26, %c1_27, %c0_28] : memref<1x4x100x16xbf16, #tpu.memory_space<vmem>>, vector<1x1x80x16xbf16>
    %38 = vector.shape_cast %37 : vector<1x1x80x16xbf16> to vector<80x16xbf16>
    %c2 = arith.constant 2 : index
    %c0_29 = arith.constant 0 : index
    %c0_30 = arith.constant 0 : index
    %39 = vector.load %arg2[%c2, %c0_29, %c0_30] : memref<9x16x32xbf16, #tpu.memory_space<vmem>>, vector<1x16x32xbf16>
    %40 = vector.shape_cast %39 : vector<1x16x32xbf16> to vector<16x32xbf16>
    %cst_31 = arith.constant dense<0.000000e+00> : vector<80x32xf32>
    %41 = tpu.matmul %38, %40, %cst_31 {dimension_numbers = #tpu.dot_dimension_numbers<[1], [0], [0], [1], [0, 0, 1, 1], [], []>} : vector<80x16xbf16>, vector<16x32xbf16>, vector<80x32xf32> -> vector<80x32xf32>
    %42 = arith.addf %36, %41 : vector<80x32xf32>
    %c0_32 = arith.constant 0 : index
    %c2_33 = arith.constant 2 : index
    %c0_34 = arith.constant 0 : index
    %c0_35 = arith.constant 0 : index
    %43 = vector.load %arg1[%c0_32, %c2_33, %c0_34, %c0_35] : memref<1x4x100x16xbf16, #tpu.memory_space<vmem>>, vector<1x1x80x16xbf16>
    %44 = vector.shape_cast %43 : vector<1x1x80x16xbf16> to vector<80x16xbf16>
    %c3 = arith.constant 3 : index
    %c0_36 = arith.constant 0 : index
    %c0_37 = arith.constant 0 : index
    %45 = vector.load %arg2[%c3, %c0_36, %c0_37] : memref<9x16x32xbf16, #tpu.memory_space<vmem>>, vector<1x16x32xbf16>
    %46 = vector.shape_cast %45 : vector<1x16x32xbf16> to vector<16x32xbf16>
    %cst_38 = arith.constant dense<0.000000e+00> : vector<80x32xf32>
    %47 = tpu.matmul %44, %46, %cst_38 {dimension_numbers = #tpu.dot_dimension_numbers<[1], [0], [0], [1], [0, 0, 1, 1], [], []>} : vector<80x16xbf16>, vector<16x32xbf16>, vector<80x32xf32> -> vector<80x32xf32>
    %48 = arith.addf %42, %47 : vector<80x32xf32>
    %c0_39 = arith.constant 0 : index
    %c3_40 = arith.constant 3 : index
    %c0_41 = arith.constant 0 : index
    %c0_42 = arith.constant 0 : index
    %49 = vector.load %arg1[%c0_39, %c3_40, %c0_41, %c0_42] : memref<1x4x100x16xbf16, #tpu.memory_space<vmem>>, vector<1x1x80x16xbf16>
    %50 = vector.shape_cast %49 : vector<1x1x80x16xbf16> to vector<80x16xbf16>
    %c4 = arith.constant 4 : index
    %c0_43 = arith.constant 0 : index
    %c0_44 = arith.constant 0 : index
    %51 = vector.load %arg2[%c4, %c0_43, %c0_44] : memref<9x16x32xbf16, #tpu.memory_space<vmem>>, vector<1x16x32xbf16>
    %52 = vector.shape_cast %51 : vector<1x16x32xbf16> to vector<16x32xbf16>
    %cst_45 = arith.constant dense<0.000000e+00> : vector<80x32xf32>
    %53 = tpu.matmul %50, %52, %cst_45 {dimension_numbers = #tpu.dot_dimension_numbers<[1], [0], [0], [1], [0, 0, 1, 1], [], []>} : vector<80x16xbf16>, vector<16x32xbf16>, vector<80x32xf32> -> vector<80x32xf32>
    %54 = arith.addf %48, %53 : vector<80x32xf32>
    %c0_46 = arith.constant 0 : index
    %c2_47 = arith.constant 2 : index
    %c1_48 = arith.constant 1 : index
    %c0_49 = arith.constant 0 : index
    %55 = vector.load %arg1[%c0_46, %c2_47, %c1_48, %c0_49] : memref<1x4x100x16xbf16, #tpu.memory_space<vmem>>, vector<1x1x80x16xbf16>
    %56 = vector.shape_cast %55 : vector<1x1x80x16xbf16> to vector<80x16xbf16>
    %c5 = arith.constant 5 : index
    %c0_50 = arith.constant 0 : index
    %c0_51 = arith.constant 0 : index
    %57 = vector.load %arg2[%c5, %c0_50, %c0_51] : memref<9x16x32xbf16, #tpu.memory_space<vmem>>, vector<1x16x32xbf16>
    %58 = vector.shape_cast %57 : vector<1x16x32xbf16> to vector<16x32xbf16>
    %cst_52 = arith.constant dense<0.000000e+00> : vector<80x32xf32>
    %59 = tpu.matmul %56, %58, %cst_52 {dimension_numbers = #tpu.dot_dimension_numbers<[1], [0], [0], [1], [0, 0, 1, 1], [], []>} : vector<80x16xbf16>, vector<16x32xbf16>, vector<80x32xf32> -> vector<80x32xf32>
    %60 = arith.addf %54, %59 : vector<80x32xf32>
    %c0_53 = arith.constant 0 : index
    %c0_54 = arith.constant 0 : index
    %c10 = arith.constant 10 : index
    %c0_55 = arith.constant 0 : index
    %61 = vector.load %arg1[%c0_53, %c0_54, %c10, %c0_55] : memref<1x4x100x16xbf16, #tpu.memory_space<vmem>>, vector<1x1x80x16xbf16>
    %62 = vector.shape_cast %61 : vector<1x1x80x16xbf16> to vector<80x16xbf16>
    %c6 = arith.constant 6 : index
    %c0_56 = arith.constant 0 : index
    %c0_57 = arith.constant 0 : index
    %63 = vector.load %arg2[%c6, %c0_56, %c0_57] : memref<9x16x32xbf16, #tpu.memory_space<vmem>>, vector<1x16x32xbf16>
    %64 = vector.shape_cast %63 : vector<1x16x32xbf16> to vector<16x32xbf16>
    %cst_58 = arith.constant dense<0.000000e+00> : vector<80x32xf32>
    %65 = tpu.matmul %62, %64, %cst_58 {dimension_numbers = #tpu.dot_dimension_numbers<[1], [0], [0], [1], [0, 0, 1, 1], [], []>} : vector<80x16xbf16>, vector<16x32xbf16>, vector<80x32xf32> -> vector<80x32xf32>
    %66 = arith.addf %60, %65 : vector<80x32xf32>
    %c0_59 = arith.constant 0 : index
    %c1_60 = arith.constant 1 : index
    %c10_61 = arith.constant 10 : index
    %c0_62 = arith.constant 0 : index
    %67 = vector.load %arg1[%c0_59, %c1_60, %c10_61, %c0_62] : memref<1x4x100x16xbf16, #tpu.memory_space<vmem>>, vector<1x1x80x16xbf16>
    %68 = vector.shape_cast %67 : vector<1x1x80x16xbf16> to vector<80x16xbf16>
    %c7 = arith.constant 7 : index
    %c0_63 = arith.constant 0 : index
    %c0_64 = arith.constant 0 : index
    %69 = vector.load %arg2[%c7, %c0_63, %c0_64] : memref<9x16x32xbf16, #tpu.memory_space<vmem>>, vector<1x16x32xbf16>
    %70 = vector.shape_cast %69 : vector<1x16x32xbf16> to vector<16x32xbf16>
    %cst_65 = arith.constant dense<0.000000e+00> : vector<80x32xf32>
    %71 = tpu.matmul %68, %70, %cst_65 {dimension_numbers = #tpu.dot_dimension_numbers<[1], [0], [0], [1], [0, 0, 1, 1], [], []>} : vector<80x16xbf16>, vector<16x32xbf16>, vector<80x32xf32> -> vector<80x32xf32>
    %72 = arith.addf %66, %71 : vector<80x32xf32>
    %c0_66 = arith.constant 0 : index
    %c0_67 = arith.constant 0 : index
    %c11 = arith.constant 11 : index
    %c0_68 = arith.constant 0 : index
    %73 = vector.load %arg1[%c0_66, %c0_67, %c11, %c0_68] : memref<1x4x100x16xbf16, #tpu.memory_space<vmem>>, vector<1x1x80x16xbf16>
    %74 = vector.shape_cast %73 : vector<1x1x80x16xbf16> to vector<80x16xbf16>
    %c8 = arith.constant 8 : index
    %c0_69 = arith.constant 0 : index
    %c0_70 = arith.constant 0 : index
    %75 = vector.load %arg2[%c8, %c0_69, %c0_70] : memref<9x16x32xbf16, #tpu.memory_space<vmem>>, vector<1x16x32xbf16>
    %76 = vector.shape_cast %75 : vector<1x16x32xbf16> to vector<16x32xbf16>
    %cst_71 = arith.constant dense<0.000000e+00> : vector<80x32xf32>
    %77 = tpu.matmul %74, %76, %cst_71 {dimension_numbers = #tpu.dot_dimension_numbers<[1], [0], [0], [1], [0, 0, 1, 1], [], []>} : vector<80x16xbf16>, vector<16x32xbf16>, vector<80x32xf32> -> vector<80x32xf32>
    %78 = arith.addf %72, %77 : vector<80x32xf32>
    %c0_72 = arith.constant 0 : index
    %c0_73 = arith.constant 0 : index
    %79 = vector.load %arg3[%c0_72, %c0_73] : memref<1x32xf32, #tpu.memory_space<vmem>>, vector<1x32xf32>
    %80 = vector.broadcast %79 : vector<1x32xf32> to vector<80x32xf32>
    %81 = arith.addf %78, %80 : vector<80x32xf32>
    %cst_74 = arith.constant 0.000000e+00 : f32
    %82 = vector.broadcast %cst_74 : f32 to vector<80x32xf32>
    %83 = arith.cmpf oge, %81, %82 : vector<80x32xf32>
    %cst_75 = arith.constant 0.00999999977 : f32
    %84 = vector.broadcast %cst_75 : f32 to vector<80x32xf32>
    %85 = arith.mulf %84, %81 : vector<80x32xf32>
    %86 = arith.select %83, %81, %85 : vector<80x32xi1>, vector<80x32xf32>
    %cst_76 = arith.constant 0.000000e+00 : f32
    %87 = vector.shape_cast %23 : vector<80x1xi1> to vector<80x1xi1>
    %88 = vector.broadcast %87 : vector<80x1xi1> to vector<80x32xi1>
    %89 = vector.broadcast %cst_76 : f32 to vector<80x32xf32>
    %90 = arith.select %88, %86, %89 : vector<80x32xi1>, vector<80x32xf32>
    %91 = arith.truncf %90 : vector<80x32xf32> to vector<80x32xbf16>
    %c11_77 = arith.constant 11 : index
    %c0_78 = arith.constant 0 : index
    %92 = vector.load %arg11[%c11_77, %c0_78] : memref<110x32xbf16, #tpu.memory_space<vmem>>, vector<80x32xbf16>
    tpu.vector_store %arg11[%c11_77, %c0_78], %91 {strides = array<i32>} : memref<110x32xbf16, #tpu.memory_space<vmem>>, vector<80x32xbf16>,
    %cst_79 = arith.constant 0.000000e+00 : f32
    %93 = vector.broadcast %cst_79 : f32 to vector<80x32xf32>
    %c0_80 = arith.constant 0 : index
    %c0_81 = arith.constant 0 : index
    %94 = vector.load %arg11[%c0_80, %c0_81] : memref<110x32xbf16, #tpu.memory_space<vmem>>, vector<80x32xbf16>
    %c0_82 = arith.constant 0 : index
    %c0_83 = arith.constant 0 : index
    %c0_84 = arith.constant 0 : index
    %95 = vector.load %arg4[%c0_82, %c0_83, %c0_84] : memref<9x32x32xbf16, #tpu.memory_space<vmem>>, vector<1x32x32xbf16>
    %96 = vector.shape_cast %95 : vector<1x32x32xbf16> to vector<32x32xbf16>
    %cst_85 = arith.constant dense<0.000000e+00> : vector<80x32xf32>
    %97 = tpu.matmul %94, %96, %cst_85 {dimension_numbers = #tpu.dot_dimension_numbers<[1], [0], [0], [1], [0, 0, 1, 1], [], []>} : vector<80x32xbf16>, vector<32x32xbf16>, vector<80x32xf32> -> vector<80x32xf32>
    %98 = arith.addf %93, %97 : vector<80x32xf32>
    %c1_86 = arith.constant 1 : index
    %c0_87 = arith.constant 0 : index
    %99 = vector.load %arg11[%c1_86, %c0_87] : memref<110x32xbf16, #tpu.memory_space<vmem>>, vector<80x32xbf16>
    %c1_88 = arith.constant 1 : index
    %c0_89 = arith.constant 0 : index
    %c0_90 = arith.constant 0 : index
    %100 = vector.load %arg4[%c1_88, %c0_89, %c0_90] : memref<9x32x32xbf16, #tpu.memory_space<vmem>>, vector<1x32x32xbf16>
    %101 = vector.shape_cast %100 : vector<1x32x32xbf16> to vector<32x32xbf16>
    %cst_91 = arith.constant dense<0.000000e+00> : vector<80x32xf32>
    %102 = tpu.matmul %99, %101, %cst_91 {dimension_numbers = #tpu.dot_dimension_numbers<[1], [0], [0], [1], [0, 0, 1, 1], [], []>} : vector<80x32xbf16>, vector<32x32xbf16>, vector<80x32xf32> -> vector<80x32xf32>
    %103 = arith.addf %98, %102 : vector<80x32xf32>
    %c2_92 = arith.constant 2 : index
    %c0_93 = arith.constant 0 : index
    %104 = vector.load %arg11[%c2_92, %c0_93] : memref<110x32xbf16, #tpu.memory_space<vmem>>, vector<80x32xbf16>
    %c2_94 = arith.constant 2 : index
    %c0_95 = arith.constant 0 : index
    %c0_96 = arith.constant 0 : index
    %105 = vector.load %arg4[%c2_94, %c0_95, %c0_96] : memref<9x32x32xbf16, #tpu.memory_space<vmem>>, vector<1x32x32xbf16>
    %106 = vector.shape_cast %105 : vector<1x32x32xbf16> to vector<32x32xbf16>
    %cst_97 = arith.constant dense<0.000000e+00> : vector<80x32xf32>
    %107 = tpu.matmul %104, %106, %cst_97 {dimension_numbers = #tpu.dot_dimension_numbers<[1], [0], [0], [1], [0, 0, 1, 1], [], []>} : vector<80x32xbf16>, vector<32x32xbf16>, vector<80x32xf32> -> vector<80x32xf32>
    %108 = arith.addf %103, %107 : vector<80x32xf32>
    %c10_98 = arith.constant 10 : index
    %c0_99 = arith.constant 0 : index
    %109 = vector.load %arg11[%c10_98, %c0_99] : memref<110x32xbf16, #tpu.memory_space<vmem>>, vector<80x32xbf16>
    %c3_100 = arith.constant 3 : index
    %c0_101 = arith.constant 0 : index
    %c0_102 = arith.constant 0 : index
    %110 = vector.load %arg4[%c3_100, %c0_101, %c0_102] : memref<9x32x32xbf16, #tpu.memory_space<vmem>>, vector<1x32x32xbf16>
    %111 = vector.shape_cast %110 : vector<1x32x32xbf16> to vector<32x32xbf16>
    %cst_103 = arith.constant dense<0.000000e+00> : vector<80x32xf32>
    %112 = tpu.matmul %109, %111, %cst_103 {dimension_numbers = #tpu.dot_dimension_numbers<[1], [0], [0], [1], [0, 0, 1, 1], [], []>} : vector<80x32xbf16>, vector<32x32xbf16>, vector<80x32xf32> -> vector<80x32xf32>
    %113 = arith.addf %108, %112 : vector<80x32xf32>
    %c11_104 = arith.constant 11 : index
    %c0_105 = arith.constant 0 : index
    %114 = vector.load %arg11[%c11_104, %c0_105] : memref<110x32xbf16, #tpu.memory_space<vmem>>, vector<80x32xbf16>
    %c4_106 = arith.constant 4 : index
    %c0_107 = arith.constant 0 : index
    %c0_108 = arith.constant 0 : index
    %115 = vector.load %arg4[%c4_106, %c0_107, %c0_108] : memref<9x32x32xbf16, #tpu.memory_space<vmem>>, vector<1x32x32xbf16>
    %116 = vector.shape_cast %115 : vector<1x32x32xbf16> to vector<32x32xbf16>
    %cst_109 = arith.constant dense<0.000000e+00> : vector<80x32xf32>
    %117 = tpu.matmul %114, %116, %cst_109 {dimension_numbers = #tpu.dot_dimension_numbers<[1], [0], [0], [1], [0, 0, 1, 1], [], []>} : vector<80x32xbf16>, vector<32x32xbf16>, vector<80x32xf32> -> vector<80x32xf32>
    %118 = arith.addf %113, %117 : vector<80x32xf32>
    %c12 = arith.constant 12 : index
    %c0_110 = arith.constant 0 : index
    %119 = vector.load %arg11[%c12, %c0_110] : memref<110x32xbf16, #tpu.memory_space<vmem>>, vector<80x32xbf16>
    %c5_111 = arith.constant 5 : index
    %c0_112 = arith.constant 0 : index
    %c0_113 = arith.constant 0 : index
    %120 = vector.load %arg4[%c5_111, %c0_112, %c0_113] : memref<9x32x32xbf16, #tpu.memory_space<vmem>>, vector<1x32x32xbf16>
    %121 = vector.shape_cast %120 : vector<1x32x32xbf16> to vector<32x32xbf16>
    %cst_114 = arith.constant dense<0.000000e+00> : vector<80x32xf32>
    %122 = tpu.matmul %119, %121, %cst_114 {dimension_numbers = #tpu.dot_dimension_numbers<[1], [0], [0], [1], [0, 0, 1, 1], [], []>} : vector<80x32xbf16>, vector<32x32xbf16>, vector<80x32xf32> -> vector<80x32xf32>
    %123 = arith.addf %118, %122 : vector<80x32xf32>
    %c20 = arith.constant 20 : index
    %c0_115 = arith.constant 0 : index
    %124 = vector.load %arg11[%c20, %c0_115] : memref<110x32xbf16, #tpu.memory_space<vmem>>, vector<80x32xbf16>
    %c6_116 = arith.constant 6 : index
    %c0_117 = arith.constant 0 : index
    %c0_118 = arith.constant 0 : index
    %125 = vector.load %arg4[%c6_116, %c0_117, %c0_118] : memref<9x32x32xbf16, #tpu.memory_space<vmem>>, vector<1x32x32xbf16>
    %126 = vector.shape_cast %125 : vector<1x32x32xbf16> to vector<32x32xbf16>
    %cst_119 = arith.constant dense<0.000000e+00> : vector<80x32xf32>
    %127 = tpu.matmul %124, %126, %cst_119 {dimension_numbers = #tpu.dot_dimension_numbers<[1], [0], [0], [1], [0, 0, 1, 1], [], []>} : vector<80x32xbf16>, vector<32x32xbf16>, vector<80x32xf32> -> vector<80x32xf32>
    %128 = arith.addf %123, %127 : vector<80x32xf32>
    %c21 = arith.constant 21 : index
    %c0_120 = arith.constant 0 : index
    %129 = vector.load %arg11[%c21, %c0_120] : memref<110x32xbf16, #tpu.memory_space<vmem>>, vector<80x32xbf16>
    %c7_121 = arith.constant 7 : index
    %c0_122 = arith.constant 0 : index
    %c0_123 = arith.constant 0 : index
    %130 = vector.load %arg4[%c7_121, %c0_122, %c0_123] : memref<9x32x32xbf16, #tpu.memory_space<vmem>>, vector<1x32x32xbf16>
    %131 = vector.shape_cast %130 : vector<1x32x32xbf16> to vector<32x32xbf16>
    %cst_124 = arith.constant dense<0.000000e+00> : vector<80x32xf32>
    %132 = tpu.matmul %129, %131, %cst_124 {dimension_numbers = #tpu.dot_dimension_numbers<[1], [0], [0], [1], [0, 0, 1, 1], [], []>} : vector<80x32xbf16>, vector<32x32xbf16>, vector<80x32xf32> -> vector<80x32xf32>
    %133 = arith.addf %128, %132 : vector<80x32xf32>
    %c22 = arith.constant 22 : index
    %c0_125 = arith.constant 0 : index
    %134 = vector.load %arg11[%c22, %c0_125] : memref<110x32xbf16, #tpu.memory_space<vmem>>, vector<80x32xbf16>
    %c8_126 = arith.constant 8 : index
    %c0_127 = arith.constant 0 : index
    %c0_128 = arith.constant 0 : index
    %135 = vector.load %arg4[%c8_126, %c0_127, %c0_128] : memref<9x32x32xbf16, #tpu.memory_space<vmem>>, vector<1x32x32xbf16>
    %136 = vector.shape_cast %135 : vector<1x32x32xbf16> to vector<32x32xbf16>
    %cst_129 = arith.constant dense<0.000000e+00> : vector<80x32xf32>
    %137 = tpu.matmul %134, %136, %cst_129 {dimension_numbers = #tpu.dot_dimension_numbers<[1], [0], [0], [1], [0, 0, 1, 1], [], []>} : vector<80x32xbf16>, vector<32x32xbf16>, vector<80x32xf32> -> vector<80x32xf32>
    %138 = arith.addf %133, %137 : vector<80x32xf32>
    %c0_130 = arith.constant 0 : index
    %c0_131 = arith.constant 0 : index
    %139 = vector.load %arg5[%c0_130, %c0_131] : memref<1x32xf32, #tpu.memory_space<vmem>>, vector<1x32xf32>
    %140 = vector.broadcast %139 : vector<1x32xf32> to vector<80x32xf32>
    %141 = arith.addf %138, %140 : vector<80x32xf32>
    %cst_132 = arith.constant 0.000000e+00 : f32
    %142 = vector.broadcast %cst_132 : f32 to vector<80x32xf32>
    %143 = arith.cmpf oge, %141, %142 : vector<80x32xf32>
    %cst_133 = arith.constant 0.00999999977 : f32
    %144 = vector.broadcast %cst_133 : f32 to vector<80x32xf32>
    %145 = arith.mulf %144, %141 : vector<80x32xf32>
    %146 = arith.select %143, %141, %145 : vector<80x32xi1>, vector<80x32xf32>
    %cst_134 = arith.constant 0.000000e+00 : f32
    %147 = vector.shape_cast %23 : vector<80x1xi1> to vector<80x1xi1>
    %148 = vector.broadcast %147 : vector<80x1xi1> to vector<80x32xi1>
    %149 = vector.broadcast %cst_134 : f32 to vector<80x32xf32>
    %150 = arith.select %148, %146, %149 : vector<80x32xi1>, vector<80x32xf32>
    %151 = arith.truncf %150 : vector<80x32xf32> to vector<80x32xbf16>
    %c11_135 = arith.constant 11 : index
    %c0_136 = arith.constant 0 : index
    %152 = vector.load %arg12[%c11_135, %c0_136] : memref<110x32xbf16, #tpu.memory_space<vmem>>, vector<80x32xbf16>
    tpu.vector_store %arg12[%c11_135, %c0_136], %151 {strides = array<i32>} : memref<110x32xbf16, #tpu.memory_space<vmem>>, vector<80x32xbf16>,
    %cst_137 = arith.constant 0.000000e+00 : f32
    %153 = vector.broadcast %cst_137 : f32 to vector<80x32xf32>
    %c0_138 = arith.constant 0 : index
    %c0_139 = arith.constant 0 : index
    %154 = vector.load %arg12[%c0_138, %c0_139] : memref<110x32xbf16, #tpu.memory_space<vmem>>, vector<80x32xbf16>
    %c0_140 = arith.constant 0 : index
    %c0_141 = arith.constant 0 : index
    %c0_142 = arith.constant 0 : index
    %155 = vector.load %arg6[%c0_140, %c0_141, %c0_142] : memref<9x32x32xbf16, #tpu.memory_space<vmem>>, vector<1x32x32xbf16>
    %156 = vector.shape_cast %155 : vector<1x32x32xbf16> to vector<32x32xbf16>
    %cst_143 = arith.constant dense<0.000000e+00> : vector<80x32xf32>
    %157 = tpu.matmul %154, %156, %cst_143 {dimension_numbers = #tpu.dot_dimension_numbers<[1], [0], [0], [1], [0, 0, 1, 1], [], []>} : vector<80x32xbf16>, vector<32x32xbf16>, vector<80x32xf32> -> vector<80x32xf32>
    %158 = arith.addf %153, %157 : vector<80x32xf32>
    %c1_144 = arith.constant 1 : index
    %c0_145 = arith.constant 0 : index
    %159 = vector.load %arg12[%c1_144, %c0_145] : memref<110x32xbf16, #tpu.memory_space<vmem>>, vector<80x32xbf16>
    %c1_146 = arith.constant 1 : index
    %c0_147 = arith.constant 0 : index
    %c0_148 = arith.constant 0 : index
    %160 = vector.load %arg6[%c1_146, %c0_147, %c0_148] : memref<9x32x32xbf16, #tpu.memory_space<vmem>>, vector<1x32x32xbf16>
    %161 = vector.shape_cast %160 : vector<1x32x32xbf16> to vector<32x32xbf16>
    %cst_149 = arith.constant dense<0.000000e+00> : vector<80x32xf32>
    %162 = tpu.matmul %159, %161, %cst_149 {dimension_numbers = #tpu.dot_dimension_numbers<[1], [0], [0], [1], [0, 0, 1, 1], [], []>} : vector<80x32xbf16>, vector<32x32xbf16>, vector<80x32xf32> -> vector<80x32xf32>
    %163 = arith.addf %158, %162 : vector<80x32xf32>
    %c2_150 = arith.constant 2 : index
    %c0_151 = arith.constant 0 : index
    %164 = vector.load %arg12[%c2_150, %c0_151] : memref<110x32xbf16, #tpu.memory_space<vmem>>, vector<80x32xbf16>
    %c2_152 = arith.constant 2 : index
    %c0_153 = arith.constant 0 : index
    %c0_154 = arith.constant 0 : index
    %165 = vector.load %arg6[%c2_152, %c0_153, %c0_154] : memref<9x32x32xbf16, #tpu.memory_space<vmem>>, vector<1x32x32xbf16>
    %166 = vector.shape_cast %165 : vector<1x32x32xbf16> to vector<32x32xbf16>
    %cst_155 = arith.constant dense<0.000000e+00> : vector<80x32xf32>
    %167 = tpu.matmul %164, %166, %cst_155 {dimension_numbers = #tpu.dot_dimension_numbers<[1], [0], [0], [1], [0, 0, 1, 1], [], []>} : vector<80x32xbf16>, vector<32x32xbf16>, vector<80x32xf32> -> vector<80x32xf32>
    %168 = arith.addf %163, %167 : vector<80x32xf32>
    %c10_156 = arith.constant 10 : index
    %c0_157 = arith.constant 0 : index
    %169 = vector.load %arg12[%c10_156, %c0_157] : memref<110x32xbf16, #tpu.memory_space<vmem>>, vector<80x32xbf16>
    %c3_158 = arith.constant 3 : index
    %c0_159 = arith.constant 0 : index
    %c0_160 = arith.constant 0 : index
    %170 = vector.load %arg6[%c3_158, %c0_159, %c0_160] : memref<9x32x32xbf16, #tpu.memory_space<vmem>>, vector<1x32x32xbf16>
    %171 = vector.shape_cast %170 : vector<1x32x32xbf16> to vector<32x32xbf16>
    %cst_161 = arith.constant dense<0.000000e+00> : vector<80x32xf32>
    %172 = tpu.matmul %169, %171, %cst_161 {dimension_numbers = #tpu.dot_dimension_numbers<[1], [0], [0], [1], [0, 0, 1, 1], [], []>} : vector<80x32xbf16>, vector<32x32xbf16>, vector<80x32xf32> -> vector<80x32xf32>
    %173 = arith.addf %168, %172 : vector<80x32xf32>
    %c11_162 = arith.constant 11 : index
    %c0_163 = arith.constant 0 : index
    %174 = vector.load %arg12[%c11_162, %c0_163] : memref<110x32xbf16, #tpu.memory_space<vmem>>, vector<80x32xbf16>
    %c4_164 = arith.constant 4 : index
    %c0_165 = arith.constant 0 : index
    %c0_166 = arith.constant 0 : index
    %175 = vector.load %arg6[%c4_164, %c0_165, %c0_166] : memref<9x32x32xbf16, #tpu.memory_space<vmem>>, vector<1x32x32xbf16>
    %176 = vector.shape_cast %175 : vector<1x32x32xbf16> to vector<32x32xbf16>
    %cst_167 = arith.constant dense<0.000000e+00> : vector<80x32xf32>
    %177 = tpu.matmul %174, %176, %cst_167 {dimension_numbers = #tpu.dot_dimension_numbers<[1], [0], [0], [1], [0, 0, 1, 1], [], []>} : vector<80x32xbf16>, vector<32x32xbf16>, vector<80x32xf32> -> vector<80x32xf32>
    %178 = arith.addf %173, %177 : vector<80x32xf32>
    %c12_168 = arith.constant 12 : index
    %c0_169 = arith.constant 0 : index
    %179 = vector.load %arg12[%c12_168, %c0_169] : memref<110x32xbf16, #tpu.memory_space<vmem>>, vector<80x32xbf16>
    %c5_170 = arith.constant 5 : index
    %c0_171 = arith.constant 0 : index
    %c0_172 = arith.constant 0 : index
    %180 = vector.load %arg6[%c5_170, %c0_171, %c0_172] : memref<9x32x32xbf16, #tpu.memory_space<vmem>>, vector<1x32x32xbf16>
    %181 = vector.shape_cast %180 : vector<1x32x32xbf16> to vector<32x32xbf16>
    %cst_173 = arith.constant dense<0.000000e+00> : vector<80x32xf32>
    %182 = tpu.matmul %179, %181, %cst_173 {dimension_numbers = #tpu.dot_dimension_numbers<[1], [0], [0], [1], [0, 0, 1, 1], [], []>} : vector<80x32xbf16>, vector<32x32xbf16>, vector<80x32xf32> -> vector<80x32xf32>
    %183 = arith.addf %178, %182 : vector<80x32xf32>
    %c20_174 = arith.constant 20 : index
    %c0_175 = arith.constant 0 : index
    %184 = vector.load %arg12[%c20_174, %c0_175] : memref<110x32xbf16, #tpu.memory_space<vmem>>, vector<80x32xbf16>
    %c6_176 = arith.constant 6 : index
    %c0_177 = arith.constant 0 : index
    %c0_178 = arith.constant 0 : index
    %185 = vector.load %arg6[%c6_176, %c0_177, %c0_178] : memref<9x32x32xbf16, #tpu.memory_space<vmem>>, vector<1x32x32xbf16>
    %186 = vector.shape_cast %185 : vector<1x32x32xbf16> to vector<32x32xbf16>
    %cst_179 = arith.constant dense<0.000000e+00> : vector<80x32xf32>
    %187 = tpu.matmul %184, %186, %cst_179 {dimension_numbers = #tpu.dot_dimension_numbers<[1], [0], [0], [1], [0, 0, 1, 1], [], []>} : vector<80x32xbf16>, vector<32x32xbf16>, vector<80x32xf32> -> vector<80x32xf32>
    %188 = arith.addf %183, %187 : vector<80x32xf32>
    %c21_180 = arith.constant 21 : index
    %c0_181 = arith.constant 0 : index
    %189 = vector.load %arg12[%c21_180, %c0_181] : memref<110x32xbf16, #tpu.memory_space<vmem>>, vector<80x32xbf16>
    %c7_182 = arith.constant 7 : index
    %c0_183 = arith.constant 0 : index
    %c0_184 = arith.constant 0 : index
    %190 = vector.load %arg6[%c7_182, %c0_183, %c0_184] : memref<9x32x32xbf16, #tpu.memory_space<vmem>>, vector<1x32x32xbf16>
    %191 = vector.shape_cast %190 : vector<1x32x32xbf16> to vector<32x32xbf16>
    %cst_185 = arith.constant dense<0.000000e+00> : vector<80x32xf32>
    %192 = tpu.matmul %189, %191, %cst_185 {dimension_numbers = #tpu.dot_dimension_numbers<[1], [0], [0], [1], [0, 0, 1, 1], [], []>} : vector<80x32xbf16>, vector<32x32xbf16>, vector<80x32xf32> -> vector<80x32xf32>
    %193 = arith.addf %188, %192 : vector<80x32xf32>
    %c22_186 = arith.constant 22 : index
    %c0_187 = arith.constant 0 : index
    %194 = vector.load %arg12[%c22_186, %c0_187] : memref<110x32xbf16, #tpu.memory_space<vmem>>, vector<80x32xbf16>
    %c8_188 = arith.constant 8 : index
    %c0_189 = arith.constant 0 : index
    %c0_190 = arith.constant 0 : index
    %195 = vector.load %arg6[%c8_188, %c0_189, %c0_190] : memref<9x32x32xbf16, #tpu.memory_space<vmem>>, vector<1x32x32xbf16>
    %196 = vector.shape_cast %195 : vector<1x32x32xbf16> to vector<32x32xbf16>
    %cst_191 = arith.constant dense<0.000000e+00> : vector<80x32xf32>
    %197 = tpu.matmul %194, %196, %cst_191 {dimension_numbers = #tpu.dot_dimension_numbers<[1], [0], [0], [1], [0, 0, 1, 1], [], []>} : vector<80x32xbf16>, vector<32x32xbf16>, vector<80x32xf32> -> vector<80x32xf32>
    %198 = arith.addf %193, %197 : vector<80x32xf32>
    %c0_192 = arith.constant 0 : index
    %c0_193 = arith.constant 0 : index
    %199 = vector.load %arg7[%c0_192, %c0_193] : memref<1x32xf32, #tpu.memory_space<vmem>>, vector<1x32xf32>
    %200 = vector.broadcast %199 : vector<1x32xf32> to vector<80x32xf32>
    %201 = arith.addf %198, %200 : vector<80x32xf32>
    %c11_194 = arith.constant 11 : index
    %c0_195 = arith.constant 0 : index
    %202 = vector.load %arg11[%c11_194, %c0_195] : memref<110x32xbf16, #tpu.memory_space<vmem>>, vector<80x32xbf16>
    %203 = arith.extf %202 : vector<80x32xbf16> to vector<80x32xf32>
    %204 = arith.addf %201, %203 : vector<80x32xf32>
    %c0_196 = arith.constant 0 : index
    %c0_197 = arith.constant 0 : index
    %205 = vector.load %arg8[%c0_196, %c0_197] : memref<4x32xf32, #tpu.memory_space<vmem>>, vector<4x32xf32>
    %cst_198 = arith.constant dense<0.000000e+00> : vector<4x80xf32>
    %206 = tpu.matmul %205, %204, %cst_198 {dimension_numbers = #tpu.dot_dimension_numbers<[1], [1], [0], [0], [0, 0, 1, 0], [], []>} : vector<4x32xf32>, vector<80x32xf32>, vector<4x80xf32> -> vector<4x80xf32>
    %c0_199 = arith.constant 0 : index
    %c0_200 = arith.constant 0 : index
    %207 = vector.load %arg9[%c0_199, %c0_200] : memref<4x1xf32, #tpu.memory_space<vmem>>, vector<4x1xf32>
    %208 = vector.broadcast %207 : vector<4x1xf32> to vector<4x80xf32>
    %209 = arith.addf %206, %208 : vector<4x80xf32>
    %cst_201 = arith.constant 0.000000e+00 : f32
    %210 = vector.broadcast %cst_201 : f32 to vector<4x80xf32>
    %211 = arith.subf %210, %209 : vector<4x80xf32>
    %212 = math.exp %211 : vector<4x80xf32>
    %cst_202 = arith.constant 1.000000e+00 : f32
    %213 = vector.broadcast %cst_202 : f32 to vector<4x80xf32>
    %214 = arith.addf %213, %212 : vector<4x80xf32>
    %cst_203 = arith.constant 1.000000e+00 : f32
    %215 = vector.broadcast %cst_203 : f32 to vector<4x80xf32>
    %216 = arith.divf %215, %214 : vector<4x80xf32>
    %c0_204 = arith.constant 0 : index
    %c0_205 = arith.constant 0 : index
    %c0_206 = arith.constant 0 : index
    %217 = vector.load %arg10[%c0_204, %c0_205, %c0_206] : memref<1x4x80xf32, #tpu.memory_space<vmem>>, vector<1x4x80xf32>
    %218 = vector.shape_cast %217 : vector<1x4x80xf32> to vector<4x80xf32>
    %219 = vector.shape_cast %216 : vector<4x80xf32> to vector<1x4x80xf32>
    tpu.vector_store %arg10[%c0_204, %c0_205, %c0_206], %219 {strides = array<i32>} : memref<1x4x80xf32, #tpu.memory_space<vmem>>, vector<1x4x80xf32>,
    return
  }
  func.func @transform_0(%arg0: i32) -> (i32, i32, i32, i32) {
    %c0_i32 = arith.constant 0 : i32
    %c0_i32_0 = arith.constant 0 : i32
    %c0_i32_1 = arith.constant 0 : i32
    %c0_i32_2 = arith.constant 0 : i32
    return %arg0, %c0_i32, %c0_i32_0, %c0_i32_1 : i32, i32, i32, i32
  }
  func.func @transform_1(%arg0: i32) -> (i32, i32, i32) {
    %c0_i32 = arith.constant 0 : i32
    %c0_i32_0 = arith.constant 0 : i32
    %c0_i32_1 = arith.constant 0 : i32
    %c0_i32_2 = arith.constant 0 : i32
    return %c0_i32, %c0_i32_0, %c0_i32_1 : i32, i32, i32
  }
  func.func @transform_2(%arg0: i32) -> (i32, i32) {
    %c0_i32 = arith.constant 0 : i32
    %c0_i32_0 = arith.constant 0 : i32
    %c0_i32_1 = arith.constant 0 : i32
    return %c0_i32, %c0_i32_0 : i32, i32
  }
  func.func @transform_3(%arg0: i32) -> (i32, i32, i32) {
    %c0_i32 = arith.constant 0 : i32
    %c0_i32_0 = arith.constant 0 : i32
    %c0_i32_1 = arith.constant 0 : i32
    %c0_i32_2 = arith.constant 0 : i32
    return %c0_i32, %c0_i32_0, %c0_i32_1 : i32, i32, i32
  }
  func.func @transform_4(%arg0: i32) -> (i32, i32) {
    %c0_i32 = arith.constant 0 : i32
    %c0_i32_0 = arith.constant 0 : i32
    %c0_i32_1 = arith.constant 0 : i32
    return %c0_i32, %c0_i32_0 : i32, i32
  }
  func.func @transform_5(%arg0: i32) -> (i32, i32, i32) {
    %c0_i32 = arith.constant 0 : i32
    %c0_i32_0 = arith.constant 0 : i32
    %c0_i32_1 = arith.constant 0 : i32
    %c0_i32_2 = arith.constant 0 : i32
    return %c0_i32, %c0_i32_0, %c0_i32_1 : i32, i32, i32
  }
  func.func @transform_6(%arg0: i32) -> (i32, i32) {
    %c0_i32 = arith.constant 0 : i32
    %c0_i32_0 = arith.constant 0 : i32
    %c0_i32_1 = arith.constant 0 : i32
    return %c0_i32, %c0_i32_0 : i32, i32
  }
  func.func @transform_7(%arg0: i32) -> (i32, i32) {
    %c0_i32 = arith.constant 0 : i32
    %c0_i32_0 = arith.constant 0 : i32
    %c0_i32_1 = arith.constant 0 : i32
    return %c0_i32, %c0_i32_0 : i32, i32
  }
  func.func @transform_8(%arg0: i32) -> (i32, i32) {
    %c0_i32 = arith.constant 0 : i32
    %c0_i32_0 = arith.constant 0 : i32
    %c0_i32_1 = arith.constant 0 : i32
    return %c0_i32, %c0_i32_0 : i32, i32
  }
  func.func @transform_9(%arg0: i32) -> (i32, i32, i32) {
    %c0_i32 = arith.constant 0 : i32
    %c0_i32_0 = arith.constant 0 : i32
    %c0_i32_1 = arith.constant 0 : i32
    return %arg0, %c0_i32, %c0_i32_0 : i32, i32, i32
  }
}

</mosaic_0001>

<llo_original>
// kernel: gan_dis_ae_patch_forward.1
$region0: #{gan_dis_ae_patch_forward.1}
  #allocation0 [shape = 'u32[]', space=smem, size = 0x4, offset = 0x4, fixed_abs, tag = 'smem constant byte address 0x4 - core index']
  #allocation1 [shape = 'u32[72,128]{1,0:T(1,128)}', space=vmem, size = 0x9000, scoped, tag = 'internal scratch']
  #allocation2 [shape = 'bf16[110,32]{1,0:T(8,128)(2,1)}', space=vmem, size = 0x7000, scoped, tag = 'scratch operand']
  #allocation3 [shape = 'bf16[110,32]{1,0:T(8,128)(2,1)}', space=vmem, size = 0x7000, scoped, tag = 'scratch operand']
  %s0 = inlined_call_operand.vmem [shape: bf16[2,4,100,16], index: 0, kind: input, shape index: {}]
  %s1 = inlined_call_operand.vmem [shape: bf16[9,16,32], index: 1, kind: input, shape index: {}]
  %s2 = inlined_call_operand.vmem [shape: f32[1,32], index: 2, kind: input, shape index: {}]
  %s3 = inlined_call_operand.vmem [shape: bf16[9,32,32], index: 3, kind: input, shape index: {}]
  %s4 = inlined_call_operand.vmem [shape: f32[1,32], index: 4, kind: input, shape index: {}]
  %s5 = inlined_call_operand.vmem [shape: bf16[9,32,32], index: 5, kind: input, shape index: {}]
  %s6 = inlined_call_operand.vmem [shape: f32[1,32], index: 6, kind: input, shape index: {}]
  %s7 = inlined_call_operand.vmem [shape: f32[4,32], index: 7, kind: input, shape index: {}]
  %s8 = inlined_call_operand.vmem [shape: f32[4,1], index: 8, kind: input, shape index: {}]
  %s9 = inlined_call_operand.vmem [shape: f32[2,4,80], index: 9, kind: output, shape index: {}]
  %s10 = sld [smem:[#allocation0]]
  $region69: #{gan_dis_ae_patch_forward.1} parent=0
    _
  %s12 = ssub.s32 1, %s10
  %s13 = scalar_select 0, %s12, %s10
  loop: start=0, step=1, limit=4
  $region2: #{gan_dis_ae_patch_forward.1} parent=0 // loop_pre_header
    _
  $region3: #{gan_dis_ae_patch_forward.1} parent=0 // loop_header
    %s15 = sphi 0, %s19
    %p16 = scmp.ge.s32.totalorder %s15, 4
    %s25 = sphi 0, %s27
    %s28 = sphi 0, %s25
    %s29 = sphi 0, %s28
    %s45 = sphi 0, %s29
    %s49 = sphi 0, %s49
    %s51 = sphi 0, %s49
    %s52 = sphi 0, %s51
    %s66 = sphi 0, %s52
    %s70 = sphi 0, %s70
    %s72 = sphi 0, %s70
    %s73 = sphi 0, %s72
    %s87 = sphi 0, %s73
    %s91 = sphi 0, %s91
    %s93 = sphi 0, %s91
    %s94 = sphi 0, %s93
    %s108 = sphi 0, %s94
    %s112 = sphi 0, %s112
    %s114 = sphi 0, %s112
    %s115 = sphi 0, %s114
    %s129 = sphi 0, %s115
    %s133 = sphi 0, %s133
    %s135 = sphi 0, %s133
    %s136 = sphi 0, %s135
    %s150 = sphi 0, %s136
    %s154 = sphi 0, %s154
    %s156 = sphi 0, %s154
    %s157 = sphi 0, %s156
    %s171 = sphi 0, %s157
    %s175 = sphi 0, %s175
    %s177 = sphi 0, %s175
    %s178 = sphi 0, %s177
    %s192 = sphi 0, %s178
    %s196 = sphi 0, %s196
    %s198 = sphi 0, %s196
    %s199 = sphi 0, %s198
    %s213 = sphi 0, %s199
    %s219 = sphi 0, %s221
    %s222 = sphi 0, %s219
    %s223 = sphi 0, %s222
    %s239 = sphi 0, %s223
  $region4: #{gan_dis_ae_patch_forward.1} parent=0 // loop_header_branch
    %18 = sbr.rel (%p16) target = $region8
  $region5: #{gan_dis_ae_patch_forward.1} parent=0 // loop_body
    %s20 = ssub.s32 %s15, 1
    %s21 = ssub.s32 %s15, 2
    %s22 = sadd.s32 %s15, 1
    %s23 = ssub.s32 %s15, %s22
    %p24 = scmp.eq.s32.totalorder %s23, 0
    %s26 = sadd.s32 %s25, 1
    %s27 = scalar_select %p24, %s25, %s26
    %p30 = pneg %p24
    %p31 = scmp.eq.s32.totalorder %s15, 1
    %p32 = por %p30, %p31
    %p33 = scmp.ne.s32.totalorder %s25, %s28
    %p34 = scmp.eq.s32.totalorder %s15, 0
    %p35 = por %p33, %p34
    %p36 = scmp.ne.s32.totalorder %s25, %s28
    %p37 = scmp.eq.s32.totalorder %s20, 1
    %p38 = por %p36, %p37
    %p39 = scmp.ne.s32.totalorder %s28, %s29
    %p40 = scmp.eq.s32.totalorder %s20, 0
    %p41 = por %p39, %p40
    %p42 = scmp.ne.s32.totalorder %s28, %s29
    %p43 = scmp.eq.s32.totalorder %s21, 1
    %p44 = por %p42, %p43
    %p46 = scmp.ne.s32.totalorder %s29, %s45
    %p47 = scmp.eq.s32.totalorder %s21, 0
    %p48 = por %p46, %p47
    %s50 = sadd.s32 %s49, 1
    %p53 = scmp.eq.s32.totalorder %s15, 1
    %p54 = scmp.ne.s32.totalorder %s49, %s51
    %p55 = scmp.eq.s32.totalorder %s15, 0
    %p56 = por %p54, %p55
    %p57 = scmp.ne.s32.totalorder %s49, %s51
    %p58 = scmp.eq.s32.totalorder %s20, 1
    %p59 = por %p57, %p58
    %p60 = scmp.ne.s32.totalorder %s51, %s52
    %p61 = scmp.eq.s32.totalorder %s20, 0
    %p62 = por %p60, %p61
    %p63 = scmp.ne.s32.totalorder %s51, %s52
    %p64 = scmp.eq.s32.totalorder %s21, 1
    %p65 = por %p63, %p64
    %p67 = scmp.ne.s32.totalorder %s52, %s66
    %p68 = scmp.eq.s32.totalorder %s21, 0
    %p69 = por %p67, %p68
    %s71 = sadd.s32 %s70, 1
    %p74 = scmp.eq.s32.totalorder %s15, 1
    %p75 = scmp.ne.s32.totalorder %s70, %s72
    %p76 = scmp.eq.s32.totalorder %s15, 0
    %p77 = por %p75, %p76
    %p78 = scmp.ne.s32.totalorder %s70, %s72
    %p79 = scmp.eq.s32.totalorder %s20, 1
    %p80 = por %p78, %p79
    %p81 = scmp.ne.s32.totalorder %s72, %s73
    %p82 = scmp.eq.s32.totalorder %s20, 0
    %p83 = por %p81, %p82
    %p84 = scmp.ne.s32.totalorder %s72, %s73
    %p85 = scmp.eq.s32.totalorder %s21, 1
    %p86 = por %p84, %p85
    %p88 = scmp.ne.s32.totalorder %s73, %s87
    %p89 = scmp.eq.s32.totalorder %s21, 0
    %p90 = por %p88, %p89
    %s92 = sadd.s32 %s91, 1
    %p95 = scmp.eq.s32.totalorder %s15, 1
    %p96 = scmp.ne.s32.totalorder %s91, %s93
    %p97 = scmp.eq.s32.totalorder %s15, 0
    %p98 = por %p96, %p97
    %p99 = scmp.ne.s32.totalorder %s91, %s93
    %p100 = scmp.eq.s32.totalorder %s20, 1
    %p101 = por %p99, %p100
    %p102 = scmp.ne.s32.totalorder %s93, %s94
    %p103 = scmp.eq.s32.totalorder %s20, 0
    %p104 = por %p102, %p103
    %p105 = scmp.ne.s32.totalorder %s93, %s94
    %p106 = scmp.eq.s32.totalorder %s21, 1
    %p107 = por %p105, %p106
    %p109 = scmp.ne.s32.totalorder %s94, %s108
    %p110 = scmp.eq.s32.totalorder %s21, 0
    %p111 = por %p109, %p110
    %s113 = sadd.s32 %s112, 1
    %p116 = scmp.eq.s32.totalorder %s15, 1
    %p117 = scmp.ne.s32.totalorder %s112, %s114
    %p118 = scmp.eq.s32.totalorder %s15, 0
    %p119 = por %p117, %p118
    %p120 = scmp.ne.s32.totalorder %s112, %s114
    %p121 = scmp.eq.s32.totalorder %s20, 1
    %p122 = por %p120, %p121
    %p123 = scmp.ne.s32.totalorder %s114, %s115
    %p124 = scmp.eq.s32.totalorder %s20, 0
    %p125 = por %p123, %p124
    %p126 = scmp.ne.s32.totalorder %s114, %s115
    %p127 = scmp.eq.s32.totalorder %s21, 1
    %p128 = por %p126, %p127
    %p130 = scmp.ne.s32.totalorder %s115, %s129
    %p131 = scmp.eq.s32.totalorder %s21, 0
    %p132 = por %p130, %p131
    %s134 = sadd.s32 %s133, 1
    %p137 = scmp.eq.s32.totalorder %s15, 1
    %p138 = scmp.ne.s32.totalorder %s133, %s135
    %p139 = scmp.eq.s32.totalorder %s15, 0
    %p140 = por %p138, %p139
    %p141 = scmp.ne.s32.totalorder %s133, %s135
    %p142 = scmp.eq.s32.totalorder %s20, 1
    %p143 = por %p141, %p142
    %p144 = scmp.ne.s32.totalorder %s135, %s136
    %p145 = scmp.eq.s32.totalorder %s20, 0
    %p146 = por %p144, %p145
    %p147 = scmp.ne.s32.totalorder %s135, %s136
    %p148 = scmp.eq.s32.totalorder %s21, 1
    %p149 = por %p147, %p148
    %p151 = scmp.ne.s32.totalorder %s136, %s150
    %p152 = scmp.eq.s32.totalorder %s21, 0
    %p153 = por %p151, %p152
    %s155 = sadd.s32 %s154, 1
    %p158 = scmp.eq.s32.totalorder %s15, 1
    %p159 = scmp.ne.s32.totalorder %s154, %s156
    %p160 = scmp.eq.s32.totalorder %s15, 0
    %p161 = por %p159, %p160
    %p162 = scmp.ne.s32.totalorder %s154, %s156
    %p163 = scmp.eq.s32.totalorder %s20, 1
    %p164 = por %p162, %p163
    %p165 = scmp.ne.s32.totalorder %s156, %s157
    %p166 = scmp.eq.s32.totalorder %s20, 0
    %p167 = por %p165, %p166
    %p168 = scmp.ne.s32.totalorder %s156, %s157
    %p169 = scmp.eq.s32.totalorder %s21, 1
    %p170 = por %p168, %p169
    %p172 = scmp.ne.s32.totalorder %s157, %s171
    %p173 = scmp.eq.s32.totalorder %s21, 0
    %p174 = por %p172, %p173
    %s176 = sadd.s32 %s175, 1
    %p179 = scmp.eq.s32.totalorder %s15, 1
    %p180 = scmp.ne.s32.totalorder %s175, %s177
    %p181 = scmp.eq.s32.totalorder %s15, 0
    %p182 = por %p180, %p181
    %p183 = scmp.ne.s32.totalorder %s175, %s177
    %p184 = scmp.eq.s32.totalorder %s20, 1
    %p185 = por %p183, %p184
    %p186 = scmp.ne.s32.totalorder %s177, %s178
    %p187 = scmp.eq.s32.totalorder %s20, 0
    %p188 = por %p186, %p187
    %p189 = scmp.ne.s32.totalorder %s177, %s178
    %p190 = scmp.eq.s32.totalorder %s21, 1
    %p191 = por %p189, %p190
    %p193 = scmp.ne.s32.totalorder %s178, %s192
    %p194 = scmp.eq.s32.totalorder %s21, 0
    %p195 = por %p193, %p194
    %s197 = sadd.s32 %s196, 1
    %p200 = scmp.eq.s32.totalorder %s15, 1
    %p201 = scmp.ne.s32.totalorder %s196, %s198
    %p202 = scmp.eq.s32.totalorder %s15, 0
    %p203 = por %p201, %p202
    %p204 = scmp.ne.s32.totalorder %s196, %s198
    %p205 = scmp.eq.s32.totalorder %s20, 1
    %p206 = por %p204, %p205
    %p207 = scmp.ne.s32.totalorder %s198, %s199
    %p208 = scmp.eq.s32.totalorder %s20, 0
    %p209 = por %p207, %p208
    %p210 = scmp.ne.s32.totalorder %s198, %s199
    %p211 = scmp.eq.s32.totalorder %s21, 1
    %p212 = por %p210, %p211
    %p214 = scmp.ne.s32.totalorder %s199, %s213
    %p215 = scmp.eq.s32.totalorder %s21, 0
    %p216 = por %p214, %p215
    %s217 = ssub.s32 %s15, %s22
    %p218 = scmp.eq.s32.totalorder %s217, 0
    %s220 = sadd.s32 %s219, 1
    %s221 = scalar_select %p218, %s219, %s220
    %p224 = pneg %p218
    %p225 = scmp.eq.s32.totalorder %s15, 1
    %p226 = por %p224, %p225
    %p227 = scmp.ne.s32.totalorder %s219, %s222
    %p228 = scmp.eq.s32.totalorder %s15, 0
    %p229 = por %p227, %p228
    %p230 = scmp.ne.s32.totalorder %s219, %s222
    %p231 = scmp.eq.s32.totalorder %s20, 1
    %p232 = por %p230, %p231
    %p233 = scmp.ne.s32.totalorder %s222, %s223
    %p234 = scmp.eq.s32.totalorder %s20, 0
    %p235 = por %p233, %p234
    %p236 = scmp.ne.s32.totalorder %s222, %s223
    %p237 = scmp.eq.s32.totalorder %s21, 1
    %p238 = por %p236, %p237
    %p240 = scmp.ne.s32.totalorder %s223, %s239
    %p241 = scmp.eq.s32.totalorder %s21, 0
    %p242 = por %p240, %p241
    %p243 = scmp.le.s32.totalorder 1, %s15
    %p244 = scmp.lt.s32.totalorder %s15, 3
    %p245 = pnand %p243, %p244
    %p246 = pneg %p245
    // Predicated region
    $region9: #{gan_dis_ae_patch_forward.1} parent=5 // pred_check
      _
    $region10: #{gan_dis_ae_patch_forward.1} parent=5 // pred_check_branch
      %248 = sbr.rel (%p245) target = $region12
    $region11: #{gan_dis_ae_patch_forward.1} parent=5 // pred_region
      %s249 = ssub.s32 %s15, 1
      // Predicated region
      $region13: #{gan_dis_ae_patch_forward.1} parent=11 // pred_check
        %p250 = pneg %p62
      $region14: #{gan_dis_ae_patch_forward.1} parent=11 // pred_check_branch
        %252 = sbr.rel (%p250) target = $region16
      $region15: #{gan_dis_ae_patch_forward.1} parent=11 // pred_region
        _
      $region16: #{gan_dis_ae_patch_forward.1} parent=11 // pred_fallthru
        _
      // Predicated region
      $region17: #{gan_dis_ae_patch_forward.1} parent=11 // pred_check
        %p253 = pneg %p83
      $region18: #{gan_dis_ae_patch_forward.1} parent=11 // pred_check_branch
        %255 = sbr.rel (%p253) target = $region20
      $region19: #{gan_dis_ae_patch_forward.1} parent=11 // pred_region
        _
      $region20: #{gan_dis_ae_patch_forward.1} parent=11 // pred_fallthru
        _
      // Predicated region
      $region21: #{gan_dis_ae_patch_forward.1} parent=11 // pred_check
        %p256 = pneg %p104
      $region22: #{gan_dis_ae_patch_forward.1} parent=11 // pred_check_branch
        %258 = sbr.rel (%p256) target = $region24
      $region23: #{gan_dis_ae_patch_forward.1} parent=11 // pred_region
        _
      $region24: #{gan_dis_ae_patch_forward.1} parent=11 // pred_fallthru
        _
      // Predicated region
      $region25: #{gan_dis_ae_patch_forward.1} parent=11 // pred_check
        %p259 = pneg %p125
      $region26: #{gan_dis_ae_patch_forward.1} parent=11 // pred_check_branch
        %261 = sbr.rel (%p259) target = $region28
      $region27: #{gan_dis_ae_patch_forward.1} parent=11 // pred_region
        _
      $region28: #{gan_dis_ae_patch_forward.1} parent=11 // pred_fallthru
        _
      // Predicated region
      $region29: #{gan_dis_ae_patch_forward.1} parent=11 // pred_check
        %p262 = pneg %p146
      $region30: #{gan_dis_ae_patch_forward.1} parent=11 // pred_check_branch
        %264 = sbr.rel (%p262) target = $region32
      $region31: #{gan_dis_ae_patch_forward.1} parent=11 // pred_region
        _
      $region32: #{gan_dis_ae_patch_forward.1} parent=11 // pred_fallthru
        _
      // Predicated region
      $region33: #{gan_dis_ae_patch_forward.1} parent=11 // pred_check
        %p265 = pneg %p167
      $region34: #{gan_dis_ae_patch_forward.1} parent=11 // pred_check_branch
        %267 = sbr.rel (%p265) target = $region36
      $region35: #{gan_dis_ae_patch_forward.1} parent=11 // pred_region
        _
      $region36: #{gan_dis_ae_patch_forward.1} parent=11 // pred_fallthru
        _
      // Predicated region
      $region37: #{gan_dis_ae_patch_forward.1} parent=11 // pred_check
        %p268 = pneg %p188
      $region38: #{gan_dis_ae_patch_forward.1} parent=11 // pred_check_branch
        %270 = sbr.rel (%p268) target = $region40
      $region39: #{gan_dis_ae_patch_forward.1} parent=11 // pred_region
        _
      $region40: #{gan_dis_ae_patch_forward.1} parent=11 // pred_fallthru
        _
      // Predicated region
      $region41: #{gan_dis_ae_patch_forward.1} parent=11 // pred_check
        %p271 = pneg %p209
      $region42: #{gan_dis_ae_patch_forward.1} parent=11 // pred_check_branch
        %273 = sbr.rel (%p271) target = $region44
      $region43: #{gan_dis_ae_patch_forward.1} parent=11 // pred_region
        _
      $region44: #{gan_dis_ae_patch_forward.1} parent=11 // pred_fallthru
        _
    $region12: #{gan_dis_ae_patch_forward.1} parent=5 // pred_fallthru
      _
    %p274 = scmp.lt.s32.totalorder %s15, 2
    // Predicated region
    $region45: #{gan_dis_ae_patch_forward.1} parent=5 // pred_check
      %p275 = pneg %p274
    $region46: #{gan_dis_ae_patch_forward.1} parent=5 // pred_check_branch
      %277 = sbr.rel (%p275) target = $region48
    $region47: #{gan_dis_ae_patch_forward.1} parent=5 // pred_region
      // Predicated region
      $region49: #{gan_dis_ae_patch_forward.1} parent=47 // pred_check
        %p278 = pneg %p35
      $region50: #{gan_dis_ae_patch_forward.1} parent=47 // pred_check_branch
        %280 = sbr.rel (%p278) target = $region52
      $region51: #{gan_dis_ae_patch_forward.1} parent=47 // pred_region
        %p281 = scmp.lt.s32.totalorder %s15, 1
        %s282 = scalar_select %p281, %s15, 1
        %s283 = smul.addr %s282, 52
        %s284 = smul.addr %s283, 4
        %s285 = scalar_lea.vmem %s0, %s284
      $region52: #{gan_dis_ae_patch_forward.1} parent=47 // pred_fallthru
        _
    $region48: #{gan_dis_ae_patch_forward.1} parent=5 // pred_fallthru
      _
    %p286 = scmp.le.s32.totalorder 1, %s15
    %p287 = scmp.lt.s32.totalorder %s15, 3
    %p288 = pnand %p286, %p287
    %p289 = pneg %p288
    // Predicated region
    $region53: #{gan_dis_ae_patch_forward.1} parent=5 // pred_check
      _
    $region54: #{gan_dis_ae_patch_forward.1} parent=5 // pred_check_branch
      %291 = sbr.rel (%p288) target = $region56
    $region55: #{gan_dis_ae_patch_forward.1} parent=5 // pred_region
      %s292 = ssub.s32 %s15, 1
      %p293 = scmp.lt.s32.totalorder %s20, 1
      %s294 = scalar_select %p293, %s20, 1
      %s295 = smul.addr %s294, 52
      %s296 = smul.addr %s295, 4
      %s297 = scalar_lea.vmem %s0, %s296
      %p298 = pneg %p41
      %p299 = pneg %p38
      %p300 = pneg %p62
      %p301 = pneg %p59
      %p302 = pneg %p83
      %p303 = pneg %p80
      %p304 = pneg %p104
      %p305 = pneg %p101
      %p306 = pneg %p125
      %p307 = pneg %p122
      %p308 = pneg %p146
      %p309 = pneg %p143
      %p310 = pneg %p167
      %p311 = pneg %p164
      %p312 = pneg %p188
      %p313 = pneg %p185
      %p314 = pneg %p209
      %p315 = pneg %p206
      %p316 = pneg %p235
      %p317 = pneg %p232
      %p318 = scmp.lt.s32.totalorder %s20, 1
      %s319 = scalar_select %p318, %s20, 1
      %s320 = smul.addr %s319, 4
      %s321 = scalar_lea.vmem %s9, %s320
      %p322 = scmp.lt.s32.totalorder %s20, 1
      %s323 = scalar_select %p322, %s20, 1
      %s324 = smul.addr %s323, 52
      %s325 = smul.addr %s324, 4
      %s326 = scalar_lea.vmem %s0, %s325
      %p327 = scmp.lt.s32.totalorder %s20, 1
      %s328 = scalar_select %p327, %s20, 1
      %s329 = smul.addr %s328, 4
      %s330 = scalar_lea.vmem %s9, %s329
      %vm332 = vcmask 257024
      %333 = vst.msk [vmem:[#allocation2] sm:$0xf] %vm332, 0
      %vm334 = vcmask 254976
      %vm335 = vsmask.f32 1280
      %vm336 = vmand %vm334, %vm335
      %v337 = vld [vmem:[#allocation2 + $0x4] sm:$0x3]
      %v338 = vsel %vm336, 0, %v337
      %339 = vst [vmem:[#allocation2 + $0x4] sm:$0x3] %v338
      %vm340 = vcmask 257025
      %vm341 = vsmask.f32 7942
      %vm342 = vmand %vm340, %vm341
      %v343 = vld [vmem:[#allocation2 + $0x2c] sm:$0xe]
      %v344 = vsel %vm342, 0, %v343
      %345 = vst [vmem:[#allocation2 + $0x2c] sm:$0xe] %v344
      %vm346 = vcmask 256000
      %347 = vst.msk [vmem:[#allocation2 + $0x30] sm:$0x7] %vm346, 0
      %348 = vst.msk [vmem:[#allocation3] sm:$0xf] %vm332, 0
      %v349 = vld [vmem:[#allocation3 + $0x4] sm:$0x3]
      %v350 = vsel %vm336, 0, %v349
      %351 = vst [vmem:[#allocation3 + $0x4] sm:$0x3] %v350
      %v352 = vld [vmem:[#allocation3 + $0x2c] sm:$0xe]
      %v353 = vsel %vm342, 0, %v352
      %354 = vst [vmem:[#allocation3 + $0x2c] sm:$0xe] %v353
      %355 = vst.msk [vmem:[#allocation3 + $0x30] sm:$0x7] %vm346, 0
      %v356 = vlaneseq
      %v357 = vshrl.u32 %v356, 7
      %v358 = vadd.s32 %v357, 8
      %v359 = vadd.s32 %v357, 16
      %v360 = vadd.s32 %v357, 24
      %v361 = vadd.s32 %v357, 32
      %v362 = vadd.s32 %v357, 40
      %v363 = vadd.s32 %v357, 48
      %v364 = vadd.s32 %v357, 56
      %v365 = vadd.s32 %v357, 64
      %v366 = vadd.s32 %v357, 72
      %vm367 = vcmp.lt.s32.totalorder %v357, 0
      %v368 = vsub.s32 0, %v357
      %v369 = vsel %vm367, %v368, %v357
      %v370 = vand.u32 %v369, 65535
      %v371 = vshrl.u32 %v369, 16
      %v373 = vmul.u32 %v370, 52429
      %v374 = vmul.u32 %v370, 52428
      %v375 = vmul.u32 %v371, 52429
      %v376 = vmul.u32 %v371, 52428
      %v377 = vshll.u32 %v374, 16
      %v378 = vshrl.u32 %v374, 16
      %v379 = vshll.u32 %v375, 16
      %v380 = vshrl.u32 %v375, 16
      %vm381 = vc.u32 %v373, %v377
      %v382 = vsel %vm381, 1, 0
      %v383 = vadd.s32 %v373, %v377
      %v384 = vadd.s32 %v376, %v382
      %vm385 = vc.u32 %v383, %v379
      %v386 = vsel %vm385, 1, 0
      %v387 = vadd.s32 %v383, %v379
      %v388 = vadd.s32 %v384, %v386
      %v389 = vadd.s32 %v388, %v378
      %v390 = vadd.s32 %v389, %v380
      %v391 = vshrl.u32 %v390, 3
      %v392 = vmul.u32 %v391, 10
      %v393 = vsub.s32 %v369, %v392
      %v394 = vsub.s32 0, %v393
      %v395 = vsel %vm367, %v394, %v393
      %vm396 = vcmp.lt.s32.totalorder %v358, 0
      %v397 = vsub.s32 0, %v358
      %v398 = vsel %vm396, %v397, %v358
      %v399 = vand.u32 %v398, 65535
      %v400 = vshrl.u32 %v398, 16
      %v402 = vmul.u32 %v399, 52429
      %v403 = vmul.u32 %v399, 52428
      %v404 = vmul.u32 %v400, 52429
      %v405 = vmul.u32 %v400, 52428
      %v406 = vshll.u32 %v403, 16
      %v407 = vshrl.u32 %v403, 16
      %v408 = vshll.u32 %v404, 16
      %v409 = vshrl.u32 %v404, 16
      %vm410 = vc.u32 %v402, %v406
      %v411 = vsel %vm410, 1, 0
      %v412 = vadd.s32 %v402, %v406
      %v413 = vadd.s32 %v405, %v411
      %vm414 = vc.u32 %v412, %v408
      %v415 = vsel %vm414, 1, 0
      %v416 = vadd.s32 %v412, %v408
      %v417 = vadd.s32 %v413, %v415
      %v418 = vadd.s32 %v417, %v407
      %v419 = vadd.s32 %v418, %v409
      %v420 = vshrl.u32 %v419, 3
      %v421 = vmul.u32 %v420, 10
      %v422 = vsub.s32 %v398, %v421
      %v423 = vsub.s32 0, %v422
      %v424 = vsel %vm396, %v423, %v422
      %vm425 = vcmp.lt.s32.totalorder %v359, 0
      %v426 = vsub.s32 0, %v359
      %v427 = vsel %vm425, %v426, %v359
      %v428 = vand.u32 %v427, 65535
      %v429 = vshrl.u32 %v427, 16
      %v431 = vmul.u32 %v428, 52429
      %v432 = vmul.u32 %v428, 52428
      %v433 = vmul.u32 %v429, 52429
      %v434 = vmul.u32 %v429, 52428
      %v435 = vshll.u32 %v432, 16
      %v436 = vshrl.u32 %v432, 16
      %v437 = vshll.u32 %v433, 16
      %v438 = vshrl.u32 %v433, 16
      %vm439 = vc.u32 %v431, %v435
      %v440 = vsel %vm439, 1, 0
      %v441 = vadd.s32 %v431, %v435
      %v442 = vadd.s32 %v434, %v440
      %vm443 = vc.u32 %v441, %v437
      %v444 = vsel %vm443, 1, 0
      %v445 = vadd.s32 %v441, %v437
      %v446 = vadd.s32 %v442, %v444
      %v447 = vadd.s32 %v446, %v436
      %v448 = vadd.s32 %v447, %v438
      %v449 = vshrl.u32 %v448, 3
      %v450 = vmul.u32 %v449, 10
      %v451 = vsub.s32 %v427, %v450
      %v452 = vsub.s32 0, %v451
      %v453 = vsel %vm425, %v452, %v451
      %vm454 = vcmp.lt.s32.totalorder %v360, 0
      %v455 = vsub.s32 0, %v360
      %v456 = vsel %vm454, %v455, %v360
      %v457 = vand.u32 %v456, 65535
      %v458 = vshrl.u32 %v456, 16
      %v460 = vmul.u32 %v457, 52429
      %v461 = vmul.u32 %v457, 52428
      %v462 = vmul.u32 %v458, 52429
      %v463 = vmul.u32 %v458, 52428
      %v464 = vshll.u32 %v461, 16
      %v465 = vshrl.u32 %v461, 16
      %v466 = vshll.u32 %v462, 16
      %v467 = vshrl.u32 %v462, 16
      %vm468 = vc.u32 %v460, %v464
      %v469 = vsel %vm468, 1, 0
      %v470 = vadd.s32 %v460, %v464
      %v471 = vadd.s32 %v463, %v469
      %vm472 = vc.u32 %v470, %v466
      %v473 = vsel %vm472, 1, 0
      %v474 = vadd.s32 %v470, %v466
      %v475 = vadd.s32 %v471, %v473
      %v476 = vadd.s32 %v475, %v465
      %v477 = vadd.s32 %v476, %v467
      %v478 = vshrl.u32 %v477, 3
      %v479 = vmul.u32 %v478, 10
      %v480 = vsub.s32 %v456, %v479
      %v481 = vsub.s32 0, %v480
      %v482 = vsel %vm454, %v481, %v480
      %vm483 = vcmp.lt.s32.totalorder %v361, 0
      %v484 = vsub.s32 0, %v361
      %v485 = vsel %vm483, %v484, %v361
      %v486 = vand.u32 %v485, 65535
      %v487 = vshrl.u32 %v485, 16
      %v489 = vmul.u32 %v486, 52429
      %v490 = vmul.u32 %v486, 52428
      %v491 = vmul.u32 %v487, 52429
      %v492 = vmul.u32 %v487, 52428
      %v493 = vshll.u32 %v490, 16
      %v494 = vshrl.u32 %v490, 16
      %v495 = vshll.u32 %v491, 16
      %v496 = vshrl.u32 %v491, 16
      %vm497 = vc.u32 %v489, %v493
      %v498 = vsel %vm497, 1, 0
      %v499 = vadd.s32 %v489, %v493
      %v500 = vadd.s32 %v492, %v498
      %vm501 = vc.u32 %v499, %v495
      %v502 = vsel %vm501, 1, 0
      %v503 = vadd.s32 %v499, %v495
      %v504 = vadd.s32 %v500, %v502
      %v505 = vadd.s32 %v504, %v494
      %v506 = vadd.s32 %v505, %v496
      %v507 = vshrl.u32 %v506, 3
      %v508 = vmul.u32 %v507, 10
      %v509 = vsub.s32 %v485, %v508
      %v510 = vsub.s32 0, %v509
      %v511 = vsel %vm483, %v510, %v509
      %vm512 = vcmp.lt.s32.totalorder %v362, 0
      %v513 = vsub.s32 0, %v362
      %v514 = vsel %vm512, %v513, %v362
      %v515 = vand.u32 %v514, 65535
      %v516 = vshrl.u32 %v514, 16
      %v518 = vmul.u32 %v515, 52429
      %v519 = vmul.u32 %v515, 52428
      %v520 = vmul.u32 %v516, 52429
      %v521 = vmul.u32 %v516, 52428
      %v522 = vshll.u32 %v519, 16
      %v523 = vshrl.u32 %v519, 16
      %v524 = vshll.u32 %v520, 16
      %v525 = vshrl.u32 %v520, 16
      %vm526 = vc.u32 %v518, %v522
      %v527 = vsel %vm526, 1, 0
      %v528 = vadd.s32 %v518, %v522
      %v529 = vadd.s32 %v521, %v527
      %vm530 = vc.u32 %v528, %v524
      %v531 = vsel %vm530, 1, 0
      %v532 = vadd.s32 %v528, %v524
      %v533 = vadd.s32 %v529, %v531
      %v534 = vadd.s32 %v533, %v523
      %v535 = vadd.s32 %v534, %v525
      %v536 = vshrl.u32 %v535, 3
      %v537 = vmul.u32 %v536, 10
      %v538 = vsub.s32 %v514, %v537
      %v539 = vsub.s32 0, %v538
      %v540 = vsel %vm512, %v539, %v538
      %vm541 = vcmp.lt.s32.totalorder %v363, 0
      %v542 = vsub.s32 0, %v363
      %v543 = vsel %vm541, %v542, %v363
      %v544 = vand.u32 %v543, 65535
      %v545 = vshrl.u32 %v543, 16
      %v547 = vmul.u32 %v544, 52429
      %v548 = vmul.u32 %v544, 52428
      %v549 = vmul.u32 %v545, 52429
      %v550 = vmul.u32 %v545, 52428
      %v551 = vshll.u32 %v548, 16
      %v552 = vshrl.u32 %v548, 16
      %v553 = vshll.u32 %v549, 16
      %v554 = vshrl.u32 %v549, 16
      %vm555 = vc.u32 %v547, %v551
      %v556 = vsel %vm555, 1, 0
      %v557 = vadd.s32 %v547, %v551
      %v558 = vadd.s32 %v550, %v556
      %vm559 = vc.u32 %v557, %v553
      %v560 = vsel %vm559, 1, 0
      %v561 = vadd.s32 %v557, %v553
      %v562 = vadd.s32 %v558, %v560
      %v563 = vadd.s32 %v562, %v552
      %v564 = vadd.s32 %v563, %v554
      %v565 = vshrl.u32 %v564, 3
      %v566 = vmul.u32 %v565, 10
      %v567 = vsub.s32 %v543, %v566
      %v568 = vsub.s32 0, %v567
      %v569 = vsel %vm541, %v568, %v567
      %vm570 = vcmp.lt.s32.totalorder %v364, 0
      %v571 = vsub.s32 0, %v364
      %v572 = vsel %vm570, %v571, %v364
      %v573 = vand.u32 %v572, 65535
      %v574 = vshrl.u32 %v572, 16
      %v576 = vmul.u32 %v573, 52429
      %v577 = vmul.u32 %v573, 52428
      %v578 = vmul.u32 %v574, 52429
      %v579 = vmul.u32 %v574, 52428
      %v580 = vshll.u32 %v577, 16
      %v581 = vshrl.u32 %v577, 16
      %v582 = vshll.u32 %v578, 16
      %v583 = vshrl.u32 %v578, 16
      %vm584 = vc.u32 %v576, %v580
      %v585 = vsel %vm584, 1, 0
      %v586 = vadd.s32 %v576, %v580
      %v587 = vadd.s32 %v579, %v585
      %vm588 = vc.u32 %v586, %v582
      %v589 = vsel %vm588, 1, 0
      %v590 = vadd.s32 %v586, %v582
      %v591 = vadd.s32 %v587, %v589
      %v592 = vadd.s32 %v591, %v581
      %v593 = vadd.s32 %v592, %v583
      %v594 = vshrl.u32 %v593, 3
      %v595 = vmul.u32 %v594, 10
      %v596 = vsub.s32 %v572, %v595
      %v597 = vsub.s32 0, %v596
      %v598 = vsel %vm570, %v597, %v596
      %vm599 = vcmp.lt.s32.totalorder %v365, 0
      %v600 = vsub.s32 0, %v365
      %v601 = vsel %vm599, %v600, %v365
      %v602 = vand.u32 %v601, 65535
      %v603 = vshrl.u32 %v601, 16
      %v605 = vmul.u32 %v602, 52429
      %v606 = vmul.u32 %v602, 52428
      %v607 = vmul.u32 %v603, 52429
      %v608 = vmul.u32 %v603, 52428
      %v609 = vshll.u32 %v606, 16
      %v610 = vshrl.u32 %v606, 16
      %v611 = vshll.u32 %v607, 16
      %v612 = vshrl.u32 %v607, 16
      %vm613 = vc.u32 %v605, %v609
      %v614 = vsel %vm613, 1, 0
      %v615 = vadd.s32 %v605, %v609
      %v616 = vadd.s32 %v608, %v614
      %vm617 = vc.u32 %v615, %v611
      %v618 = vsel %vm617, 1, 0
      %v619 = vadd.s32 %v615, %v611
      %v620 = vadd.s32 %v616, %v618
      %v621 = vadd.s32 %v620, %v610
      %v622 = vadd.s32 %v621, %v612
      %v623 = vshrl.u32 %v622, 3
      %v624 = vmul.u32 %v623, 10
      %v625 = vsub.s32 %v601, %v624
      %v626 = vsub.s32 0, %v625
      %v627 = vsel %vm599, %v626, %v625
      %vm628 = vcmp.lt.s32.totalorder %v366, 0
      %v629 = vsub.s32 0, %v366
      %v630 = vsel %vm628, %v629, %v366
      %v631 = vand.u32 %v630, 65535
      %v632 = vshrl.u32 %v630, 16
      %v634 = vmul.u32 %v631, 52429
      %v635 = vmul.u32 %v631, 52428
      %v636 = vmul.u32 %v632, 52429
      %v637 = vmul.u32 %v632, 52428
      %v638 = vshll.u32 %v635, 16
      %v639 = vshrl.u32 %v635, 16
      %v640 = vshll.u32 %v636, 16
      %v641 = vshrl.u32 %v636, 16
      %vm642 = vc.u32 %v634, %v638
      %v643 = vsel %vm642, 1, 0
      %v644 = vadd.s32 %v634, %v638
      %v645 = vadd.s32 %v637, %v643
      %vm646 = vc.u32 %v644, %v640
      %v647 = vsel %vm646, 1, 0
      %v648 = vadd.s32 %v644, %v640
      %v649 = vadd.s32 %v645, %v647
      %v650 = vadd.s32 %v649, %v639
      %v651 = vadd.s32 %v650, %v641
      %v652 = vshrl.u32 %v651, 3
      %v653 = vmul.u32 %v652, 10
      %v654 = vsub.s32 %v630, %v653
      %v655 = vsub.s32 0, %v654
      %v656 = vsel %vm628, %v655, %v654
      %vm657 = vcmp.ne.s32.totalorder %v395, 0
      %vm658 = vcmp.ne.s32.totalorder %v424, 0
      %vm659 = vcmp.ne.s32.totalorder %v453, 0
      %vm660 = vcmp.ne.s32.totalorder %v482, 0
      %vm661 = vcmp.ne.s32.totalorder %v511, 0
      %vm662 = vcmp.ne.s32.totalorder %v540, 0
      %vm663 = vcmp.ne.s32.totalorder %v569, 0
      %vm664 = vcmp.ne.s32.totalorder %v598, 0
      %vm665 = vcmp.ne.s32.totalorder %v627, 0
      %vm666 = vcmp.ne.s32.totalorder %v656, 0
      %vm667 = vcmp.lt.s32.totalorder %v395, 0
      %vm668 = vcmp.lt.s32.totalorder %v424, 0
      %vm669 = vcmp.lt.s32.totalorder %v453, 0
      %vm670 = vcmp.lt.s32.totalorder %v482, 0
      %vm671 = vcmp.lt.s32.totalorder %v511, 0
      %vm672 = vcmp.lt.s32.totalorder %v540, 0
      %vm673 = vcmp.lt.s32.totalorder %v569, 0
      %vm674 = vcmp.lt.s32.totalorder %v598, 0
      %vm675 = vcmp.lt.s32.totalorder %v627, 0
      %vm676 = vcmp.lt.s32.totalorder %v656, 0
      %vm677 = vmand %vm667, %vm657
      %vm678 = vmand %vm668, %vm658
      %vm679 = vmand %vm669, %vm659
      %vm680 = vmand %vm670, %vm660
      %vm681 = vmand %vm671, %vm661
      %vm682 = vmand %vm672, %vm662
      %vm683 = vmand %vm673, %vm663
      %vm684 = vmand %vm674, %vm664
      %vm685 = vmand %vm675, %vm665
      %vm686 = vmand %vm676, %vm666
      %v687 = vadd.s32 %v395, 10
      %v688 = vadd.s32 %v424, 10
      %v689 = vadd.s32 %v453, 10
      %v690 = vadd.s32 %v482, 10
      %v691 = vadd.s32 %v511, 10
      %v692 = vadd.s32 %v540, 10
      %v693 = vadd.s32 %v569, 10
      %v694 = vadd.s32 %v598, 10
      %v695 = vadd.s32 %v627, 10
      %v696 = vadd.s32 %v656, 10
      %v697 = vsel %vm677, %v687, %v395
      %v698 = vsel %vm678, %v688, %v424
      %v699 = vsel %vm679, %v689, %v453
      %v700 = vsel %vm680, %v690, %v482
      %v701 = vsel %vm681, %v691, %v511
      %v702 = vsel %vm682, %v692, %v540
      %v703 = vsel %vm683, %v693, %v569
      %v704 = vsel %vm684, %v694, %v598
      %v705 = vsel %vm685, %v695, %v627
      %v706 = vsel %vm686, %v696, %v656
      %vm707 = vcmp.lt.s32.totalorder %v697, 8
      %vm708 = vcmp.lt.s32.totalorder %v698, 8
      %vm709 = vcmp.lt.s32.totalorder %v699, 8
      %vm710 = vcmp.lt.s32.totalorder %v700, 8
      %vm711 = vcmp.lt.s32.totalorder %v701, 8
      %vm712 = vcmp.lt.s32.totalorder %v702, 8
      %vm713 = vcmp.lt.s32.totalorder %v703, 8
      %vm714 = vcmp.lt.s32.totalorder %v704, 8
      %vm715 = vcmp.lt.s32.totalorder %v705, 8
      %vm716 = vcmp.lt.s32.totalorder %v706, 8
      %v717 = vld [vmem:[%s326] sm:$0xf]
      %v718 = vld [vmem:[%s326 + $0x4] sm:$0xf]
      %v719 = vld [vmem:[%s326 + $0x8] sm:$0xf]
      %v720 = vld [vmem:[%s326 + $0xc] sm:$0xf]
      %v721 = vld [vmem:[%s326 + $0x10] sm:$0xf]
      %v722 = vld [vmem:[%s326 + $0x14] sm:$0xf]
      %v723 = vld [vmem:[%s326 + $0x18] sm:$0xf]
      %v724 = vld [vmem:[%s326 + $0x1c] sm:$0xf]
      %v725 = vld [vmem:[%s326 + $0x20] sm:$0xf]
      %v726 = vld [vmem:[%s326 + $0x24] sm:$0xf]
      %v727 = vld [vmem:[%s1] sm:$0xf]
      %v728 = vld [vmem:[%s1 + $0x4] sm:$0xf]
      %s729 = scalar_lea.vmem %s326, 52
      %v730 = vld [vmem:[%s729] sm:$0xf]
      %v731 = vld [vmem:[%s729 + $0x4] sm:$0xf]
      %v732 = vld [vmem:[%s729 + $0x8] sm:$0xf]
      %v733 = vld [vmem:[%s729 + $0xc] sm:$0xf]
      %v734 = vld [vmem:[%s729 + $0x10] sm:$0xf]
      %v735 = vld [vmem:[%s729 + $0x14] sm:$0xf]
      %v736 = vld [vmem:[%s729 + $0x18] sm:$0xf]
      %v737 = vld [vmem:[%s729 + $0x1c] sm:$0xf]
      %v738 = vld [vmem:[%s729 + $0x20] sm:$0xf]
      %v739 = vld [vmem:[%s729 + $0x24] sm:$0xf]
      %s740 = scalar_lea.vmem %s1, 8
      %v741 = vld [vmem:[%s740] sm:$0xf]
      %v742 = vld [vmem:[%s740 + $0x4] sm:$0xf]
      %v753 = vunpack.c.l.b16 %v730
      %v754 = vunpack.c.l.b16 %v731
      %v755 = vunpack.c.l.b16 %v732
      %v756 = vunpack.c.l.b16 %v733
      %v757 = vunpack.c.l.b16 %v734
      %v758 = vunpack.c.l.b16 %v735
      %v759 = vunpack.c.l.b16 %v736
      %v760 = vunpack.c.l.b16 %v737
      %v761 = vunpack.c.l.b16 %v738
      %v762 = vunpack.c.l.b16 %v739
      %v763 = vpack.c.b16 %v754, %v753
      %v764 = vpack.c.b16 %v756, %v755
      %v765 = vpack.c.b16 %v758, %v757
      %v766 = vpack.c.b16 %v760, %v759
      %v767 = vpack.c.b16 %v762, %v761
      %v770 = vunpack.c.l.b16 %v741
      %v771 = vunpack.c.l.b16 %v742
      %v772 = vpack.c.b16 %v771, %v770
      %vm774 = vcmask 130048
      %v776 = vsel %vm774, %v763, 0
      %v779 = vsel %vm774, %v764, 0
      %v782 = vsel %vm774, %v765, 0
      %v785 = vsel %vm774, %v766, 0
      %v788 = vsel %vm774, %v767, 0
      %790 = vmatpush.bf16.msra.mxu0 0
      %791 = vmatpush.bf16.msra.mxu0 0
      %792 = vmatpush.bf16.msra.mxu0 0
      %793 = vmatpush.bf16.msra.mxu0 0
      %794 = vmatpush.bf16.msra.mxu0 0
      %795 = vmatpush.bf16.msra.mxu0 0
      %796 = vmatpush.bf16.msra.mxu0 0
      %797 = vmatpush.bf16.msra.mxu0 %v772
      %798 = vmatmul.bf16.gmra.mxu0 %v776
      %v799 = vpop.f32.mrf.mxu0
      %v800 = vadd.f32 0.0, %v799
      %v801 = vpop.f32.mrf.mxu0
      %v802 = vadd.f32 0.0, %v801
      %803 = vmatmul.bf16.gmra.mxu0 %v779
      %v804 = vpop.f32.mrf.mxu0
      %v805 = vadd.f32 0.0, %v804
      %v806 = vpop.f32.mrf.mxu0
      %v807 = vadd.f32 0.0, %v806
      %808 = vmatmul.bf16.gmra.mxu0 %v782
      %v809 = vpop.f32.mrf.mxu0
      %v810 = vadd.f32 0.0, %v809
      %v811 = vpop.f32.mrf.mxu0
      %v812 = vadd.f32 0.0, %v811
      %813 = vmatmul.bf16.gmra.mxu0 %v785
      %v814 = vpop.f32.mrf.mxu0
      %v815 = vadd.f32 0.0, %v814
      %v816 = vpop.f32.mrf.mxu0
      %v817 = vadd.f32 0.0, %v816
      %818 = vmatmul.bf16.gmra.mxu0 %v788
      %v819 = vpop.f32.mrf.mxu0
      %v820 = vadd.f32 0.0, %v819
      %v821 = vpop.f32.mrf.mxu0
      %v822 = vadd.f32 0.0, %v821
      %823 = vdwg.mxu0
      %v834 = vunpack.c.l.b16 %v717
      %v835 = vunpack.c.l.b16 %v718
      %v836 = vunpack.c.l.b16 %v719
      %v837 = vunpack.c.l.b16 %v720
      %v838 = vunpack.c.l.b16 %v721
      %v839 = vunpack.c.l.b16 %v722
      %v840 = vunpack.c.l.b16 %v723
      %v841 = vunpack.c.l.b16 %v724
      %v842 = vunpack.c.l.b16 %v725
      %v843 = vunpack.c.l.b16 %v726
      %v844 = vpack.c.b16 %v835, %v834
      %v845 = vpack.c.b16 %v837, %v836
      %v846 = vpack.c.b16 %v839, %v838
      %v847 = vpack.c.b16 %v841, %v840
      %v848 = vpack.c.b16 %v843, %v842
      %v851 = vunpack.c.l.b16 %v727
      %v852 = vunpack.c.l.b16 %v728
      %v853 = vpack.c.b16 %v852, %v851
      %v856 = vsel %vm774, %v844, 0
      %v859 = vsel %vm774, %v845, 0
      %v862 = vsel %vm774, %v846, 0
      %v865 = vsel %vm774, %v847, 0
      %v868 = vsel %vm774, %v848, 0
      %870 = vmatpush.bf16.msra.mxu0 0
      %871 = vmatpush.bf16.msra.mxu0 0
      %872 = vmatpush.bf16.msra.mxu0 0
      %873 = vmatpush.bf16.msra.mxu0 0
      %874 = vmatpush.bf16.msra.mxu0 0
      %875 = vmatpush.bf16.msra.mxu0 0
      %876 = vmatpush.bf16.msra.mxu0 0
      %877 = vmatpush.bf16.msra.mxu0 %v853
      %878 = vmatmul.bf16.gmra.mxu0 %v856
      %v879 = vpop.f32.mrf.mxu0
      %v880 = vadd.f32 %v800, %v879
      %v881 = vpop.f32.mrf.mxu0
      %v882 = vadd.f32 %v802, %v881
      %883 = vmatmul.bf16.gmra.mxu0 %v859
      %v884 = vpop.f32.mrf.mxu0
      %v885 = vadd.f32 %v805, %v884
      %v886 = vpop.f32.mrf.mxu0
      %v887 = vadd.f32 %v807, %v886
      %888 = vmatmul.bf16.gmra.mxu0 %v862
      %v889 = vpop.f32.mrf.mxu0
      %v890 = vadd.f32 %v810, %v889
      %v891 = vpop.f32.mrf.mxu0
      %v892 = vadd.f32 %v812, %v891
      %893 = vmatmul.bf16.gmra.mxu0 %v865
      %v894 = vpop.f32.mrf.mxu0
      %v895 = vadd.f32 %v815, %v894
      %v896 = vpop.f32.mrf.mxu0
      %v897 = vadd.f32 %v817, %v896
      %898 = vmatmul.bf16.gmra.mxu0 %v868
      %v899 = vpop.f32.mrf.mxu0
      %v900 = vadd.f32 %v820, %v899
      %v901 = vpop.f32.mrf.mxu0
      %v902 = vadd.f32 %v822, %v901
      %903 = vdwg.mxu0
      %v904 = vld [vmem:[%s326] sm:$0xf]
      %v905 = vld [vmem:[%s326 + $0x4] sm:$0xf]
      %v906 = vld [vmem:[%s326 + $0x8] sm:$0xf]
      %v907 = vld [vmem:[%s326 + $0xc] sm:$0xf]
      %v908 = vld [vmem:[%s326 + $0x10] sm:$0xf]
      %v909 = vld [vmem:[%s326 + $0x14] sm:$0xf]
      %v910 = vld [vmem:[%s326 + $0x18] sm:$0xf]
      %v911 = vld [vmem:[%s326 + $0x1c] sm:$0xf]
      %v912 = vld [vmem:[%s326 + $0x20] sm:$0xf]
      %v913 = vld [vmem:[%s326 + $0x24] sm:$0xf]
      %v914 = vld [vmem:[%s326 + $0x28] sm:$0x1]
      %s915 = scalar_lea.vmem %s1, 16
      %v916 = vld [vmem:[%s915] sm:$0xf]
      %v917 = vld [vmem:[%s915 + $0x4] sm:$0xf]
      %v929 = vunpack.c.l.b16 %v904
      %v930 = vunpack.c.l.b16 %v905
      %v931 = vunpack.c.l.b16 %v906
      %v932 = vunpack.c.l.b16 %v907
      %v933 = vunpack.c.l.b16 %v908
      %v934 = vunpack.c.l.b16 %v909
      %v935 = vunpack.c.l.b16 %v910
      %v936 = vunpack.c.l.b16 %v911
      %v937 = vunpack.c.l.b16 %v912
      %v938 = vunpack.c.l.b16 %v913
      %v939 = vunpack.c.l.b16 %v914
      %v940 = vpack.c.b16 %v930, %v929
      %v941 = vpack.c.b16 %v932, %v931
      %v942 = vpack.c.b16 %v934, %v933
      %v943 = vpack.c.b16 %v936, %v935
      %v944 = vpack.c.b16 %v938, %v937
      %v945 = vpack.c.b16 %v939, %v939
      %vm946 = vsmask.f32 7424
      %v948 = vshrl.u32 %v940, 16
      %v950 = vshll.u32 %v940, 16
      %v952 = vrot.slane %v950, 1
      %v953 = vor.u32 %v948, %v952
      %v955 = vshll.u32 %v941, 16
      %v957 = vrot.slane %v955, 1
      %v958 = vsel %vm946, %v953, %v957
      %v959 = vshrl.u32 %v941, 16
      %v961 = vor.u32 %v959, %v957
      %v963 = vshll.u32 %v942, 16
      %v965 = vrot.slane %v963, 1
      %v966 = vsel %vm946, %v961, %v965
      %v967 = vshrl.u32 %v942, 16
      %v969 = vor.u32 %v967, %v965
      %v971 = vshll.u32 %v943, 16
      %v973 = vrot.slane %v971, 1
      %v974 = vsel %vm946, %v969, %v973
      %v975 = vshrl.u32 %v943, 16
      %v977 = vor.u32 %v975, %v973
      %v979 = vshll.u32 %v944, 16
      %v981 = vrot.slane %v979, 1
      %v982 = vsel %vm946, %v977, %v981
      %v983 = vshrl.u32 %v944, 16
      %v985 = vor.u32 %v983, %v981
      %v987 = vshll.u32 %v945, 16
      %v989 = vrot.slane %v987, 1
      %v990 = vsel %vm946, %v985, %v989
      %v993 = vunpack.c.l.b16 %v916
      %v994 = vunpack.c.l.b16 %v917
      %v995 = vpack.c.b16 %v994, %v993
      %v998 = vsel %vm774, %v958, 0
      %v1001 = vsel %vm774, %v966, 0
      %v1004 = vsel %vm774, %v974, 0
      %v1007 = vsel %vm774, %v982, 0
      %v1010 = vsel %vm774, %v990, 0
      %1012 = vmatpush.bf16.msra.mxu0 0
      %1013 = vmatpush.bf16.msra.mxu0 0
      %1014 = vmatpush.bf16.msra.mxu0 0
      %1015 = vmatpush.bf16.msra.mxu0 0
      %1016 = vmatpush.bf16.msra.mxu0 0
      %1017 = vmatpush.bf16.msra.mxu0 0
      %1018 = vmatpush.bf16.msra.mxu0 0
      %1019 = vmatpush.bf16.msra.mxu0 %v995
      %1020 = vmatmul.bf16.gmra.mxu0 %v998
      %v1021 = vpop.f32.mrf.mxu0
      %v1022 = vadd.f32 0.0, %v1021
      %v1023 = vpop.f32.mrf.mxu0
      %v1024 = vadd.f32 0.0, %v1023
      %1025 = vmatmul.bf16.gmra.mxu0 %v1001
      %v1026 = vpop.f32.mrf.mxu0
      %v1027 = vadd.f32 0.0, %v1026
      %v1028 = vpop.f32.mrf.mxu0
      %v1029 = vadd.f32 0.0, %v1028
      %1030 = vmatmul.bf16.gmra.mxu0 %v1004
      %v1031 = vpop.f32.mrf.mxu0
      %v1032 = vadd.f32 0.0, %v1031
      %v1033 = vpop.f32.mrf.mxu0
      %v1034 = vadd.f32 0.0, %v1033
      %1035 = vmatmul.bf16.gmra.mxu0 %v1007
      %v1036 = vpop.f32.mrf.mxu0
      %v1037 = vadd.f32 0.0, %v1036
      %v1038 = vpop.f32.mrf.mxu0
      %v1039 = vadd.f32 0.0, %v1038
      %1040 = vmatmul.bf16.gmra.mxu0 %v1010
      %v1041 = vpop.f32.mrf.mxu0
      %v1042 = vadd.f32 0.0, %v1041
      %v1043 = vpop.f32.mrf.mxu0
      %v1044 = vadd.f32 0.0, %v1043
      %1045 = vdwg.mxu0
      %v1046 = vadd.f32 %v880, %v1022
      %v1047 = vadd.f32 %v882, %v1024
      %v1048 = vadd.f32 %v885, %v1027
      %v1049 = vadd.f32 %v887, %v1029
      %v1050 = vadd.f32 %v890, %v1032
      %v1051 = vadd.f32 %v892, %v1034
      %v1052 = vadd.f32 %v895, %v1037
      %v1053 = vadd.f32 %v897, %v1039
      %v1054 = vadd.f32 %v900, %v1042
      %v1055 = vadd.f32 %v902, %v1044
      %s1056 = scalar_lea.vmem %s326, 104
      %v1057 = vld [vmem:[%s1056] sm:$0xf]
      %v1058 = vld [vmem:[%s1056 + $0x4] sm:$0xf]
      %v1059 = vld [vmem:[%s1056 + $0x8] sm:$0xf]
      %v1060 = vld [vmem:[%s1056 + $0xc] sm:$0xf]
      %v1061 = vld [vmem:[%s1056 + $0x10] sm:$0xf]
      %v1062 = vld [vmem:[%s1056 + $0x14] sm:$0xf]
      %v1063 = vld [vmem:[%s1056 + $0x18] sm:$0xf]
      %v1064 = vld [vmem:[%s1056 + $0x1c] sm:$0xf]
      %v1065 = vld [vmem:[%s1056 + $0x20] sm:$0xf]
      %v1066 = vld [vmem:[%s1056 + $0x24] sm:$0xf]
      %s1067 = scalar_lea.vmem %s1, 24
      %v1068 = vld [vmem:[%s1067] sm:$0xf]
      %v1069 = vld [vmem:[%s1067 + $0x4] sm:$0xf]
      %v1080 = vunpack.c.l.b16 %v1057
      %v1081 = vunpack.c.l.b16 %v1058
      %v1082 = vunpack.c.l.b16 %v1059
      %v1083 = vunpack.c.l.b16 %v1060
      %v1084 = vunpack.c.l.b16 %v1061
      %v1085 = vunpack.c.l.b16 %v1062
      %v1086 = vunpack.c.l.b16 %v1063
      %v1087 = vunpack.c.l.b16 %v1064
      %v1088 = vunpack.c.l.b16 %v1065
      %v1089 = vunpack.c.l.b16 %v1066
      %v1090 = vpack.c.b16 %v1081, %v1080
      %v1091 = vpack.c.b16 %v1083, %v1082
      %v1092 = vpack.c.b16 %v1085, %v1084
      %v1093 = vpack.c.b16 %v1087, %v1086
      %v1094 = vpack.c.b16 %v1089, %v1088
      %v1097 = vunpack.c.l.b16 %v1068
      %v1098 = vunpack.c.l.b16 %v1069
      %v1099 = vpack.c.b16 %v1098, %v1097
      %v1102 = vsel %vm774, %v1090, 0
      %v1105 = vsel %vm774, %v1091, 0
      %v1108 = vsel %vm774, %v1092, 0
      %v1111 = vsel %vm774, %v1093, 0
      %v1114 = vsel %vm774, %v1094, 0
      %1116 = vmatpush.bf16.msra.mxu0 0
      %1117 = vmatpush.bf16.msra.mxu0 0
      %1118 = vmatpush.bf16.msra.mxu0 0
      %1119 = vmatpush.bf16.msra.mxu0 0
      %1120 = vmatpush.bf16.msra.mxu0 0
      %1121 = vmatpush.bf16.msra.mxu0 0
      %1122 = vmatpush.bf16.msra.mxu0 0
      %1123 = vmatpush.bf16.msra.mxu0 %v1099
      %1124 = vmatmul.bf16.gmra.mxu0 %v1102
      %v1125 = vpop.f32.mrf.mxu0
      %v1126 = vadd.f32 0.0, %v1125
      %v1127 = vpop.f32.mrf.mxu0
      %v1128 = vadd.f32 0.0, %v1127
      %1129 = vmatmul.bf16.gmra.mxu0 %v1105
      %v1130 = vpop.f32.mrf.mxu0
      %v1131 = vadd.f32 0.0, %v1130
      %v1132 = vpop.f32.mrf.mxu0
      %v1133 = vadd.f32 0.0, %v1132
      %1134 = vmatmul.bf16.gmra.mxu0 %v1108
      %v1135 = vpop.f32.mrf.mxu0
      %v1136 = vadd.f32 0.0, %v1135
      %v1137 = vpop.f32.mrf.mxu0
      %v1138 = vadd.f32 0.0, %v1137
      %1139 = vmatmul.bf16.gmra.mxu0 %v1111
      %v1140 = vpop.f32.mrf.mxu0
      %v1141 = vadd.f32 0.0, %v1140
      %v1142 = vpop.f32.mrf.mxu0
      %v1143 = vadd.f32 0.0, %v1142
      %1144 = vmatmul.bf16.gmra.mxu0 %v1114
      %v1145 = vpop.f32.mrf.mxu0
      %v1146 = vadd.f32 0.0, %v1145
      %v1147 = vpop.f32.mrf.mxu0
      %v1148 = vadd.f32 0.0, %v1147
      %1149 = vdwg.mxu0
      %v1150 = vadd.f32 %v1046, %v1126
      %v1151 = vadd.f32 %v1047, %v1128
      %v1152 = vadd.f32 %v1048, %v1131
      %v1153 = vadd.f32 %v1049, %v1133
      %v1154 = vadd.f32 %v1050, %v1136
      %v1155 = vadd.f32 %v1051, %v1138
      %v1156 = vadd.f32 %v1052, %v1141
      %v1157 = vadd.f32 %v1053, %v1143
      %v1158 = vadd.f32 %v1054, %v1146
      %v1159 = vadd.f32 %v1055, %v1148
      %s1160 = scalar_lea.vmem %s326, 156
      %v1161 = vld [vmem:[%s1160] sm:$0xf]
      %v1162 = vld [vmem:[%s1160 + $0x4] sm:$0xf]
      %v1163 = vld [vmem:[%s1160 + $0x8] sm:$0xf]
      %v1164 = vld [vmem:[%s1160 + $0xc] sm:$0xf]
      %v1165 = vld [vmem:[%s1160 + $0x10] sm:$0xf]
      %v1166 = vld [vmem:[%s1160 + $0x14] sm:$0xf]
      %v1167 = vld [vmem:[%s1160 + $0x18] sm:$0xf]
      %v1168 = vld [vmem:[%s1160 + $0x1c] sm:$0xf]
      %v1169 = vld [vmem:[%s1160 + $0x20] sm:$0xf]
      %v1170 = vld [vmem:[%s1160 + $0x24] sm:$0xf]
      %s1171 = scalar_lea.vmem %s1, 32
      %v1172 = vld [vmem:[%s1171] sm:$0xf]
      %v1173 = vld [vmem:[%s1171 + $0x4] sm:$0xf]
      %v1184 = vunpack.c.l.b16 %v1161
      %v1185 = vunpack.c.l.b16 %v1162
      %v1186 = vunpack.c.l.b16 %v1163
      %v1187 = vunpack.c.l.b16 %v1164
      %v1188 = vunpack.c.l.b16 %v1165
      %v1189 = vunpack.c.l.b16 %v1166
      %v1190 = vunpack.c.l.b16 %v1167
      %v1191 = vunpack.c.l.b16 %v1168
      %v1192 = vunpack.c.l.b16 %v1169
      %v1193 = vunpack.c.l.b16 %v1170
      %v1194 = vpack.c.b16 %v1185, %v1184
      %v1195 = vpack.c.b16 %v1187, %v1186
      %v1196 = vpack.c.b16 %v1189, %v1188
      %v1197 = vpack.c.b16 %v1191, %v1190
      %v1198 = vpack.c.b16 %v1193, %v1192
      %v1201 = vunpack.c.l.b16 %v1172
      %v1202 = vunpack.c.l.b16 %v1173
      %v1203 = vpack.c.b16 %v1202, %v1201
      %v1206 = vsel %vm774, %v1194, 0
      %v1209 = vsel %vm774, %v1195, 0
      %v1212 = vsel %vm774, %v1196, 0
      %v1215 = vsel %vm774, %v1197, 0
      %v1218 = vsel %vm774, %v1198, 0
      %1220 = vmatpush.bf16.msra.mxu0 0
      %1221 = vmatpush.bf16.msra.mxu0 0
      %1222 = vmatpush.bf16.msra.mxu0 0
      %1223 = vmatpush.bf16.msra.mxu0 0
      %1224 = vmatpush.bf16.msra.mxu0 0
      %1225 = vmatpush.bf16.msra.mxu0 0
      %1226 = vmatpush.bf16.msra.mxu0 0
      %1227 = vmatpush.bf16.msra.mxu0 %v1203
      %1228 = vmatmul.bf16.gmra.mxu0 %v1206
      %v1229 = vpop.f32.mrf.mxu0
      %v1230 = vadd.f32 0.0, %v1229
      %v1231 = vpop.f32.mrf.mxu0
      %v1232 = vadd.f32 0.0, %v1231
      %1233 = vmatmul.bf16.gmra.mxu0 %v1209
      %v1234 = vpop.f32.mrf.mxu0
      %v1235 = vadd.f32 0.0, %v1234
      %v1236 = vpop.f32.mrf.mxu0
      %v1237 = vadd.f32 0.0, %v1236
      %1238 = vmatmul.bf16.gmra.mxu0 %v1212
      %v1239 = vpop.f32.mrf.mxu0
      %v1240 = vadd.f32 0.0, %v1239
      %v1241 = vpop.f32.mrf.mxu0
      %v1242 = vadd.f32 0.0, %v1241
      %1243 = vmatmul.bf16.gmra.mxu0 %v1215
      %v1244 = vpop.f32.mrf.mxu0
      %v1245 = vadd.f32 0.0, %v1244
      %v1246 = vpop.f32.mrf.mxu0
      %v1247 = vadd.f32 0.0, %v1246
      %1248 = vmatmul.bf16.gmra.mxu0 %v1218
      %v1249 = vpop.f32.mrf.mxu0
      %v1250 = vadd.f32 0.0, %v1249
      %v1251 = vpop.f32.mrf.mxu0
      %v1252 = vadd.f32 0.0, %v1251
      %1253 = vdwg.mxu0
      %v1254 = vadd.f32 %v1150, %v1230
      %v1255 = vadd.f32 %v1151, %v1232
      %v1256 = vadd.f32 %v1152, %v1235
      %v1257 = vadd.f32 %v1153, %v1237
      %v1258 = vadd.f32 %v1154, %v1240
      %v1259 = vadd.f32 %v1155, %v1242
      %v1260 = vadd.f32 %v1156, %v1245
      %v1261 = vadd.f32 %v1157, %v1247
      %v1262 = vadd.f32 %v1158, %v1250
      %v1263 = vadd.f32 %v1159, %v1252
      %v1264 = vld [vmem:[%s1056] sm:$0xf]
      %v1265 = vld [vmem:[%s1056 + $0x4] sm:$0xf]
      %v1266 = vld [vmem:[%s1056 + $0x8] sm:$0xf]
      %v1267 = vld [vmem:[%s1056 + $0xc] sm:$0xf]
      %v1268 = vld [vmem:[%s1056 + $0x10] sm:$0xf]
      %v1269 = vld [vmem:[%s1056 + $0x14] sm:$0xf]
      %v1270 = vld [vmem:[%s1056 + $0x18] sm:$0xf]
      %v1271 = vld [vmem:[%s1056 + $0x1c] sm:$0xf]
      %v1272 = vld [vmem:[%s1056 + $0x20] sm:$0xf]
      %v1273 = vld [vmem:[%s1056 + $0x24] sm:$0xf]
      %v1274 = vld [vmem:[%s1056 + $0x28] sm:$0x1]
      %s1275 = scalar_lea.vmem %s1, 40
      %v1276 = vld [vmem:[%s1275] sm:$0xf]
      %v1277 = vld [vmem:[%s1275 + $0x4] sm:$0xf]
      %v1289 = vunpack.c.l.b16 %v1264
      %v1290 = vunpack.c.l.b16 %v1265
      %v1291 = vunpack.c.l.b16 %v1266
      %v1292 = vunpack.c.l.b16 %v1267
      %v1293 = vunpack.c.l.b16 %v1268
      %v1294 = vunpack.c.l.b16 %v1269
      %v1295 = vunpack.c.l.b16 %v1270
      %v1296 = vunpack.c.l.b16 %v1271
      %v1297 = vunpack.c.l.b16 %v1272
      %v1298 = vunpack.c.l.b16 %v1273
      %v1299 = vunpack.c.l.b16 %v1274
      %v1300 = vpack.c.b16 %v1290, %v1289
      %v1301 = vpack.c.b16 %v1292, %v1291
      %v1302 = vpack.c.b16 %v1294, %v1293
      %v1303 = vpack.c.b16 %v1296, %v1295
      %v1304 = vpack.c.b16 %v1298, %v1297
      %v1305 = vpack.c.b16 %v1299, %v1299
      %v1307 = vshrl.u32 %v1300, 16
      %v1309 = vshll.u32 %v1300, 16
      %v1311 = vrot.slane %v1309, 1
      %v1312 = vor.u32 %v1307, %v1311
      %v1314 = vshll.u32 %v1301, 16
      %v1316 = vrot.slane %v1314, 1
      %v1317 = vsel %vm946, %v1312, %v1316
      %v1318 = vshrl.u32 %v1301, 16
      %v1320 = vor.u32 %v1318, %v1316
      %v1322 = vshll.u32 %v1302, 16
      %v1324 = vrot.slane %v1322, 1
      %v1325 = vsel %vm946, %v1320, %v1324
      %v1326 = vshrl.u32 %v1302, 16
      %v1328 = vor.u32 %v1326, %v1324
      %v1330 = vshll.u32 %v1303, 16
      %v1332 = vrot.slane %v1330, 1
      %v1333 = vsel %vm946, %v1328, %v1332
      %v1334 = vshrl.u32 %v1303, 16
      %v1336 = vor.u32 %v1334, %v1332
      %v1338 = vshll.u32 %v1304, 16
      %v1340 = vrot.slane %v1338, 1
      %v1341 = vsel %vm946, %v1336, %v1340
      %v1342 = vshrl.u32 %v1304, 16
      %v1344 = vor.u32 %v1342, %v1340
      %v1346 = vshll.u32 %v1305, 16
      %v1348 = vrot.slane %v1346, 1
      %v1349 = vsel %vm946, %v1344, %v1348
      %v1352 = vunpack.c.l.b16 %v1276
      %v1353 = vunpack.c.l.b16 %v1277
      %v1354 = vpack.c.b16 %v1353, %v1352
      %v1357 = vsel %vm774, %v1317, 0
      %v1360 = vsel %vm774, %v1325, 0
      %v1363 = vsel %vm774, %v1333, 0
      %v1366 = vsel %vm774, %v1341, 0
      %v1369 = vsel %vm774, %v1349, 0
      %1371 = vmatpush.bf16.msra.mxu0 0
      %1372 = vmatpush.bf16.msra.mxu0 0
      %1373 = vmatpush.bf16.msra.mxu0 0
      %1374 = vmatpush.bf16.msra.mxu0 0
      %1375 = vmatpush.bf16.msra.mxu0 0
      %1376 = vmatpush.bf16.msra.mxu0 0
      %1377 = vmatpush.bf16.msra.mxu0 0
      %1378 = vmatpush.bf16.msra.mxu0 %v1354
      %1379 = vmatmul.bf16.gmra.mxu0 %v1357
      %v1380 = vpop.f32.mrf.mxu0
      %v1381 = vadd.f32 0.0, %v1380
      %v1382 = vpop.f32.mrf.mxu0
      %v1383 = vadd.f32 0.0, %v1382
      %1384 = vmatmul.bf16.gmra.mxu0 %v1360
      %v1385 = vpop.f32.mrf.mxu0
      %v1386 = vadd.f32 0.0, %v1385
      %v1387 = vpop.f32.mrf.mxu0
      %v1388 = vadd.f32 0.0, %v1387
      %1389 = vmatmul.bf16.gmra.mxu0 %v1363
      %v1390 = vpop.f32.mrf.mxu0
      %v1391 = vadd.f32 0.0, %v1390
      %v1392 = vpop.f32.mrf.mxu0
      %v1393 = vadd.f32 0.0, %v1392
      %1394 = vmatmul.bf16.gmra.mxu0 %v1366
      %v1395 = vpop.f32.mrf.mxu0
      %v1396 = vadd.f32 0.0, %v1395
      %v1397 = vpop.f32.mrf.mxu0
      %v1398 = vadd.f32 0.0, %v1397
      %1399 = vmatmul.bf16.gmra.mxu0 %v1369
      %v1400 = vpop.f32.mrf.mxu0
      %v1401 = vadd.f32 0.0, %v1400
      %v1402 = vpop.f32.mrf.mxu0
      %v1403 = vadd.f32 0.0, %v1402
      %1404 = vdwg.mxu0
      %v1405 = vadd.f32 %v1254, %v1381
      %v1406 = vadd.f32 %v1255, %v1383
      %v1407 = vadd.f32 %v1256, %v1386
      %v1408 = vadd.f32 %v1257, %v1388
      %v1409 = vadd.f32 %v1258, %v1391
      %v1410 = vadd.f32 %v1259, %v1393
      %v1411 = vadd.f32 %v1260, %v1396
      %v1412 = vadd.f32 %v1261, %v1398
      %v1413 = vadd.f32 %v1262, %v1401
      %v1414 = vadd.f32 %v1263, %v1403
      %v1415 = vld [vmem:[%s326 + $0x4] sm:$0xe]
      %v1416 = vld [vmem:[%s326 + $0x8] sm:$0xf]
      %v1417 = vld [vmem:[%s326 + $0xc] sm:$0xf]
      %v1418 = vld [vmem:[%s326 + $0x10] sm:$0xf]
      %v1419 = vld [vmem:[%s326 + $0x14] sm:$0xf]
      %v1420 = vld [vmem:[%s326 + $0x18] sm:$0xf]
      %v1421 = vld [vmem:[%s326 + $0x1c] sm:$0xf]
      %v1422 = vld [vmem:[%s326 + $0x20] sm:$0xf]
      %v1423 = vld [vmem:[%s326 + $0x24] sm:$0xf]
      %v1424 = vld [vmem:[%s326 + $0x28] sm:$0xf]
      %v1425 = vld [vmem:[%s326 + $0x2c] sm:$0x1]
      %s1426 = scalar_lea.vmem %s1, 48
      %v1427 = vld [vmem:[%s1426] sm:$0xf]
      %v1428 = vld [vmem:[%s1426 + $0x4] sm:$0xf]
      %v1440 = vunpack.c.l.b16 %v1415
      %v1441 = vunpack.c.l.b16 %v1416
      %v1442 = vunpack.c.l.b16 %v1417
      %v1443 = vunpack.c.l.b16 %v1418
      %v1444 = vunpack.c.l.b16 %v1419
      %v1445 = vunpack.c.l.b16 %v1420
      %v1446 = vunpack.c.l.b16 %v1421
      %v1447 = vunpack.c.l.b16 %v1422
      %v1448 = vunpack.c.l.b16 %v1423
      %v1449 = vunpack.c.l.b16 %v1424
      %v1450 = vunpack.c.l.b16 %v1425
      %v1451 = vpack.c.b16 %v1441, %v1440
      %v1452 = vpack.c.b16 %v1443, %v1442
      %v1453 = vpack.c.b16 %v1445, %v1444
      %v1454 = vpack.c.b16 %v1447, %v1446
      %v1455 = vpack.c.b16 %v1449, %v1448
      %v1456 = vpack.c.b16 %v1450, %v1450
      %vm1457 = vcmask 1046528
      %v1458 = vrot.slane %v1451, 1
      %v1459 = vrot.slane %v1452, 1
      %v1460 = vsel %vm1457, %v1458, %v1459
      %v1461 = vrot.slane %v1453, 1
      %v1462 = vsel %vm1457, %v1459, %v1461
      %v1463 = vrot.slane %v1454, 1
      %v1464 = vsel %vm1457, %v1461, %v1463
      %v1465 = vrot.slane %v1455, 1
      %v1466 = vsel %vm1457, %v1463, %v1465
      %v1467 = vrot.slane %v1456, 1
      %v1468 = vsel %vm1457, %v1465, %v1467
      %v1471 = vunpack.c.l.b16 %v1427
      %v1472 = vunpack.c.l.b16 %v1428
      %v1473 = vpack.c.b16 %v1472, %v1471
      %v1476 = vsel %vm774, %v1460, 0
      %v1479 = vsel %vm774, %v1462, 0
      %v1482 = vsel %vm774, %v1464, 0
      %v1485 = vsel %vm774, %v1466, 0
      %v1488 = vsel %vm774, %v1468, 0
      %1490 = vmatpush.bf16.msra.mxu0 0
      %1491 = vmatpush.bf16.msra.mxu0 0
      %1492 = vmatpush.bf16.msra.mxu0 0
      %1493 = vmatpush.bf16.msra.mxu0 0
      %1494 = vmatpush.bf16.msra.mxu0 0
      %1495 = vmatpush.bf16.msra.mxu0 0
      %1496 = vmatpush.bf16.msra.mxu0 0
      %1497 = vmatpush.bf16.msra.mxu0 %v1473
      %1498 = vmatmul.bf16.gmra.mxu0 %v1476
      %v1499 = vpop.f32.mrf.mxu0
      %v1500 = vadd.f32 0.0, %v1499
      %v1501 = vpop.f32.mrf.mxu0
      %v1502 = vadd.f32 0.0, %v1501
      %1503 = vmatmul.bf16.gmra.mxu0 %v1479
      %v1504 = vpop.f32.mrf.mxu0
      %v1505 = vadd.f32 0.0, %v1504
      %v1506 = vpop.f32.mrf.mxu0
      %v1507 = vadd.f32 0.0, %v1506
      %1508 = vmatmul.bf16.gmra.mxu0 %v1482
      %v1509 = vpop.f32.mrf.mxu0
      %v1510 = vadd.f32 0.0, %v1509
      %v1511 = vpop.f32.mrf.mxu0
      %v1512 = vadd.f32 0.0, %v1511
      %1513 = vmatmul.bf16.gmra.mxu0 %v1485
      %v1514 = vpop.f32.mrf.mxu0
      %v1515 = vadd.f32 0.0, %v1514
      %v1516 = vpop.f32.mrf.mxu0
      %v1517 = vadd.f32 0.0, %v1516
      %1518 = vmatmul.bf16.gmra.mxu0 %v1488
      %v1519 = vpop.f32.mrf.mxu0
      %v1520 = vadd.f32 0.0, %v1519
      %v1521 = vpop.f32.mrf.mxu0
      %v1522 = vadd.f32 0.0, %v1521
      %1523 = vdwg.mxu0
      %v1524 = vadd.f32 %v1405, %v1500
      %v1525 = vadd.f32 %v1406, %v1502
      %v1526 = vadd.f32 %v1407, %v1505
      %v1527 = vadd.f32 %v1408, %v1507
      %v1528 = vadd.f32 %v1409, %v1510
      %v1529 = vadd.f32 %v1410, %v1512
      %v1530 = vadd.f32 %v1411, %v1515
      %v1531 = vadd.f32 %v1412, %v1517
      %v1532 = vadd.f32 %v1413, %v1520
      %v1533 = vadd.f32 %v1414, %v1522
      %v1534 = vld [vmem:[%s729 + $0x4] sm:$0xe]
      %v1535 = vld [vmem:[%s729 + $0x8] sm:$0xf]
      %v1536 = vld [vmem:[%s729 + $0xc] sm:$0xf]
      %v1537 = vld [vmem:[%s729 + $0x10] sm:$0xf]
      %v1538 = vld [vmem:[%s729 + $0x14] sm:$0xf]
      %v1539 = vld [vmem:[%s729 + $0x18] sm:$0xf]
      %v1540 = vld [vmem:[%s729 + $0x1c] sm:$0xf]
      %v1541 = vld [vmem:[%s729 + $0x20] sm:$0xf]
      %v1542 = vld [vmem:[%s729 + $0x24] sm:$0xf]
      %v1543 = vld [vmem:[%s729 + $0x28] sm:$0xf]
      %v1544 = vld [vmem:[%s729 + $0x2c] sm:$0x1]
      %s1545 = scalar_lea.vmem %s1, 56
      %v1546 = vld [vmem:[%s1545] sm:$0xf]
      %v1547 = vld [vmem:[%s1545 + $0x4] sm:$0xf]
      %v1559 = vunpack.c.l.b16 %v1534
      %v1560 = vunpack.c.l.b16 %v1535
      %v1561 = vunpack.c.l.b16 %v1536
      %v1562 = vunpack.c.l.b16 %v1537
      %v1563 = vunpack.c.l.b16 %v1538
      %v1564 = vunpack.c.l.b16 %v1539
      %v1565 = vunpack.c.l.b16 %v1540
      %v1566 = vunpack.c.l.b16 %v1541
      %v1567 = vunpack.c.l.b16 %v1542
      %v1568 = vunpack.c.l.b16 %v1543
      %v1569 = vunpack.c.l.b16 %v1544
      %v1570 = vpack.c.b16 %v1560, %v1559
      %v1571 = vpack.c.b16 %v1562, %v1561
      %v1572 = vpack.c.b16 %v1564, %v1563
      %v1573 = vpack.c.b16 %v1566, %v1565
      %v1574 = vpack.c.b16 %v1568, %v1567
      %v1575 = vpack.c.b16 %v1569, %v1569
      %v1576 = vrot.slane %v1570, 1
      %v1577 = vrot.slane %v1571, 1
      %v1578 = vsel %vm1457, %v1576, %v1577
      %v1579 = vrot.slane %v1572, 1
      %v1580 = vsel %vm1457, %v1577, %v1579
      %v1581 = vrot.slane %v1573, 1
      %v1582 = vsel %vm1457, %v1579, %v1581
      %v1583 = vrot.slane %v1574, 1
      %v1584 = vsel %vm1457, %v1581, %v1583
      %v1585 = vrot.slane %v1575, 1
      %v1586 = vsel %vm1457, %v1583, %v1585
      %v1589 = vunpack.c.l.b16 %v1546
      %v1590 = vunpack.c.l.b16 %v1547
      %v1591 = vpack.c.b16 %v1590, %v1589
      %v1594 = vsel %vm774, %v1578, 0
      %v1597 = vsel %vm774, %v1580, 0
      %v1600 = vsel %vm774, %v1582, 0
      %v1603 = vsel %vm774, %v1584, 0
      %v1606 = vsel %vm774, %v1586, 0
      %1608 = vmatpush.bf16.msra.mxu0 0
      %1609 = vmatpush.bf16.msra.mxu0 0
      %1610 = vmatpush.bf16.msra.mxu0 0
      %1611 = vmatpush.bf16.msra.mxu0 0
      %1612 = vmatpush.bf16.msra.mxu0 0
      %1613 = vmatpush.bf16.msra.mxu0 0
      %1614 = vmatpush.bf16.msra.mxu0 0
      %1615 = vmatpush.bf16.msra.mxu0 %v1591
      %1616 = vmatmul.bf16.gmra.mxu0 %v1594
      %v1617 = vpop.f32.mrf.mxu0
      %v1618 = vadd.f32 0.0, %v1617
      %v1619 = vpop.f32.mrf.mxu0
      %v1620 = vadd.f32 0.0, %v1619
      %1621 = vmatmul.bf16.gmra.mxu0 %v1597
      %v1622 = vpop.f32.mrf.mxu0
      %v1623 = vadd.f32 0.0, %v1622
      %v1624 = vpop.f32.mrf.mxu0
      %v1625 = vadd.f32 0.0, %v1624
      %1626 = vmatmul.bf16.gmra.mxu0 %v1600
      %v1627 = vpop.f32.mrf.mxu0
      %v1628 = vadd.f32 0.0, %v1627
      %v1629 = vpop.f32.mrf.mxu0
      %v1630 = vadd.f32 0.0, %v1629
      %1631 = vmatmul.bf16.gmra.mxu0 %v1603
      %v1632 = vpop.f32.mrf.mxu0
      %v1633 = vadd.f32 0.0, %v1632
      %v1634 = vpop.f32.mrf.mxu0
      %v1635 = vadd.f32 0.0, %v1634
      %1636 = vmatmul.bf16.gmra.mxu0 %v1606
      %v1637 = vpop.f32.mrf.mxu0
      %v1638 = vadd.f32 0.0, %v1637
      %v1639 = vpop.f32.mrf.mxu0
      %v1640 = vadd.f32 0.0, %v1639
      %1641 = vdwg.mxu0
      %v1642 = vadd.f32 %v1524, %v1618
      %v1643 = vadd.f32 %v1525, %v1620
      %v1644 = vadd.f32 %v1526, %v1623
      %v1645 = vadd.f32 %v1527, %v1625
      %v1646 = vadd.f32 %v1528, %v1628
      %v1647 = vadd.f32 %v1529, %v1630
      %v1648 = vadd.f32 %v1530, %v1633
      %v1649 = vadd.f32 %v1531, %v1635
      %v1650 = vadd.f32 %v1532, %v1638
      %v1651 = vadd.f32 %v1533, %v1640
      %v1652 = vld [vmem:[%s326 + $0x2c] sm:$0x3]
      %s1653 = scalar_lea.vmem %s1, 64
      %v1654 = vld [vmem:[%s1653] sm:$0xf]
      %v1655 = vld [vmem:[%s1653 + $0x4] sm:$0xf]
      %v1657 = vunpack.c.l.b16 %v1652
      %v1658 = vpack.c.b16 %v1657, %v1657
      %vm1659 = vsmask.f32 6400
      %v1661 = vshrl.u32 %v1451, 16
      %v1663 = vrot.slane %v1661, 1
      %v1664 = vshll.u32 %v1451, 16
      %v1666 = vrot.slane %v1664, 2
      %v1667 = vor.u32 %v1663, %v1666
      %v1669 = vshrl.u32 %v1452, 16
      %v1671 = vrot.slane %v1669, 1
      %v1672 = vshll.u32 %v1452, 16
      %v1674 = vrot.slane %v1672, 2
      %v1675 = vor.u32 %v1671, %v1674
      %v1676 = vsel %vm1659, %v1667, %v1675
      %v1678 = vshrl.u32 %v1453, 16
      %v1680 = vrot.slane %v1678, 1
      %v1681 = vshll.u32 %v1453, 16
      %v1683 = vrot.slane %v1681, 2
      %v1684 = vor.u32 %v1680, %v1683
      %v1685 = vsel %vm1659, %v1675, %v1684
      %v1687 = vshrl.u32 %v1454, 16
      %v1689 = vrot.slane %v1687, 1
      %v1690 = vshll.u32 %v1454, 16
      %v1692 = vrot.slane %v1690, 2
      %v1693 = vor.u32 %v1689, %v1692
      %v1694 = vsel %vm1659, %v1684, %v1693
      %v1696 = vshrl.u32 %v1455, 16
      %v1698 = vrot.slane %v1696, 1
      %v1699 = vshll.u32 %v1455, 16
      %v1701 = vrot.slane %v1699, 2
      %v1702 = vor.u32 %v1698, %v1701
      %v1703 = vsel %vm1659, %v1693, %v1702
      %v1705 = vshrl.u32 %v1658, 16
      %v1707 = vrot.slane %v1705, 1
      %v1708 = vshll.u32 %v1658, 16
      %v1710 = vrot.slane %v1708, 2
      %v1711 = vor.u32 %v1707, %v1710
      %v1712 = vsel %vm1659, %v1702, %v1711
      %v1715 = vunpack.c.l.b16 %v1654
      %v1716 = vunpack.c.l.b16 %v1655
      %v1717 = vpack.c.b16 %v1716, %v1715
      %v1720 = vsel %vm774, %v1676, 0
      %v1723 = vsel %vm774, %v1685, 0
      %v1726 = vsel %vm774, %v1694, 0
      %v1729 = vsel %vm774, %v1703, 0
      %v1732 = vsel %vm774, %v1712, 0
      %1734 = vmatpush.bf16.msra.mxu0 0
      %1735 = vmatpush.bf16.msra.mxu0 0
      %1736 = vmatpush.bf16.msra.mxu0 0
      %1737 = vmatpush.bf16.msra.mxu0 0
      %1738 = vmatpush.bf16.msra.mxu0 0
      %1739 = vmatpush.bf16.msra.mxu0 0
      %1740 = vmatpush.bf16.msra.mxu0 0
      %1741 = vmatpush.bf16.msra.mxu0 %v1717
      %1742 = vmatmul.bf16.gmra.mxu0 %v1720
      %v1743 = vpop.f32.mrf.mxu0
      %v1744 = vadd.f32 0.0, %v1743
      %v1745 = vpop.f32.mrf.mxu0
      %v1746 = vadd.f32 0.0, %v1745
      %1747 = vmatmul.bf16.gmra.mxu0 %v1723
      %v1748 = vpop.f32.mrf.mxu0
      %v1749 = vadd.f32 0.0, %v1748
      %v1750 = vpop.f32.mrf.mxu0
      %v1751 = vadd.f32 0.0, %v1750
      %1752 = vmatmul.bf16.gmra.mxu0 %v1726
      %v1753 = vpop.f32.mrf.mxu0
      %v1754 = vadd.f32 0.0, %v1753
      %v1755 = vpop.f32.mrf.mxu0
      %v1756 = vadd.f32 0.0, %v1755
      %1757 = vmatmul.bf16.gmra.mxu0 %v1729
      %v1758 = vpop.f32.mrf.mxu0
      %v1759 = vadd.f32 0.0, %v1758
      %v1760 = vpop.f32.mrf.mxu0
      %v1761 = vadd.f32 0.0, %v1760
      %1762 = vmatmul.bf16.gmra.mxu0 %v1732
      %v1763 = vpop.f32.mrf.mxu0
      %v1764 = vadd.f32 0.0, %v1763
      %v1765 = vpop.f32.mrf.mxu0
      %v1766 = vadd.f32 0.0, %v1765
      %1767 = vdwg.mxu0
      %v1768 = vadd.f32 %v1642, %v1744
      %v1769 = vadd.f32 %v1643, %v1746
      %v1770 = vadd.f32 %v1644, %v1749
      %v1771 = vadd.f32 %v1645, %v1751
      %v1772 = vadd.f32 %v1646, %v1754
      %v1773 = vadd.f32 %v1647, %v1756
      %v1774 = vadd.f32 %v1648, %v1759
      %v1775 = vadd.f32 %v1649, %v1761
      %v1776 = vadd.f32 %v1650, %v1764
      %v1777 = vadd.f32 %v1651, %v1766
      %v1778 = vld [vmem:[%s2] sm:$0x1]
      %v1780 = vperm.slane %v1778, 0
      %v1782 = vadd.f32 %v1768, %v1780
      %v1783 = vadd.f32 %v1769, %v1780
      %v1784 = vadd.f32 %v1770, %v1780
      %v1785 = vadd.f32 %v1771, %v1780
      %v1786 = vadd.f32 %v1772, %v1780
      %v1787 = vadd.f32 %v1773, %v1780
      %v1788 = vadd.f32 %v1774, %v1780
      %v1789 = vadd.f32 %v1775, %v1780
      %v1790 = vadd.f32 %v1776, %v1780
      %v1791 = vadd.f32 %v1777, %v1780
      %vm1792 = vcmp.ge.f32.partialorder %v1782, 0.0
      %vm1793 = vcmp.ge.f32.partialorder %v1783, 0.0
      %vm1794 = vcmp.ge.f32.partialorder %v1784, 0.0
      %vm1795 = vcmp.ge.f32.partialorder %v1785, 0.0
      %vm1796 = vcmp.ge.f32.partialorder %v1786, 0.0
      %vm1797 = vcmp.ge.f32.partialorder %v1787, 0.0
      %vm1798 = vcmp.ge.f32.partialorder %v1788, 0.0
      %vm1799 = vcmp.ge.f32.partialorder %v1789, 0.0
      %vm1800 = vcmp.ge.f32.partialorder %v1790, 0.0
      %vm1801 = vcmp.ge.f32.partialorder %v1791, 0.0
      %v1802 = vmul.f32 %v1782, 0.01
      %v1803 = vmul.f32 %v1783, 0.01
      %v1804 = vmul.f32 %v1784, 0.01
      %v1805 = vmul.f32 %v1785, 0.01
      %v1806 = vmul.f32 %v1786, 0.01
      %v1807 = vmul.f32 %v1787, 0.01
      %v1808 = vmul.f32 %v1788, 0.01
      %v1809 = vmul.f32 %v1789, 0.01
      %v1810 = vmul.f32 %v1790, 0.01
      %v1811 = vmul.f32 %v1791, 0.01
      %v1812 = vsel %vm1792, %v1782, %v1802
      %v1813 = vsel %vm1793, %v1783, %v1803
      %v1814 = vsel %vm1794, %v1784, %v1804
      %v1815 = vsel %vm1795, %v1785, %v1805
      %v1816 = vsel %vm1796, %v1786, %v1806
      %v1817 = vsel %vm1797, %v1787, %v1807
      %v1818 = vsel %vm1798, %v1788, %v1808
      %v1819 = vsel %vm1799, %v1789, %v1809
      %v1820 = vsel %vm1800, %v1790, %v1810
      %v1821 = vsel %vm1801, %v1791, %v1811
      %v1822 = vsel %vm707, 1, 0
      %v1823 = vsel %vm708, 1, 0
      %v1824 = vsel %vm709, 1, 0
      %v1825 = vsel %vm710, 1, 0
      %v1826 = vsel %vm711, 1, 0
      %v1827 = vsel %vm712, 1, 0
      %v1828 = vsel %vm713, 1, 0
      %v1829 = vsel %vm714, 1, 0
      %v1830 = vsel %vm715, 1, 0
      %v1831 = vsel %vm716, 1, 0
      %vm1832 = vcmp.eq.s32.totalorder %v1822, 1
      %vm1833 = vcmp.eq.s32.totalorder %v1823, 1
      %vm1834 = vcmp.eq.s32.totalorder %v1824, 1
      %vm1835 = vcmp.eq.s32.totalorder %v1825, 1
      %vm1836 = vcmp.eq.s32.totalorder %v1826, 1
      %vm1837 = vcmp.eq.s32.totalorder %v1827, 1
      %vm1838 = vcmp.eq.s32.totalorder %v1828, 1
      %vm1839 = vcmp.eq.s32.totalorder %v1829, 1
      %vm1840 = vcmp.eq.s32.totalorder %v1830, 1
      %vm1841 = vcmp.eq.s32.totalorder %v1831, 1
      %v1842 = vsel %vm1832, %v1812, 0.0
      %v1843 = vsel %vm1833, %v1813, 0.0
      %v1844 = vsel %vm1834, %v1814, 0.0
      %v1845 = vsel %vm1835, %v1815, 0.0
      %v1846 = vsel %vm1836, %v1816, 0.0
      %v1847 = vsel %vm1837, %v1817, 0.0
      %v1848 = vsel %vm1838, %v1818, 0.0
      %v1849 = vsel %vm1839, %v1819, 0.0
      %v1850 = vsel %vm1840, %v1820, 0.0
      %v1851 = vsel %vm1841, %v1821, 0.0
      %v1852 = vpack.c.bf16 %v1842, %v1842
      %v1853 = vpack.c.bf16 %v1843, %v1843
      %v1854 = vpack.c.bf16 %v1844, %v1844
      %v1855 = vpack.c.bf16 %v1845, %v1845
      %v1856 = vpack.c.bf16 %v1846, %v1846
      %v1857 = vpack.c.bf16 %v1847, %v1847
      %v1858 = vpack.c.bf16 %v1848, %v1848
      %v1859 = vpack.c.bf16 %v1849, %v1849
      %v1860 = vpack.c.bf16 %v1850, %v1850
      %v1861 = vpack.c.bf16 %v1851, %v1851
      %vm1862 = vsmask.f32 5392
      %vm1863 = vmor %vm335, %vm1862
      %v1865 = vshrl.u32 %v1852, 16
      %v1867 = vrot.slane %v1865, 6
      %v1868 = vshll.u32 %v1852, 16
      %v1870 = vrot.slane %v1868, 7
      %v1871 = vor.u32 %v1867, %v1870
      %v1872 = vrot.slane %v1871, 4
      %v1874 = vshrl.u32 %v1853, 16
      %v1876 = vrot.slane %v1874, 6
      %v1877 = vshll.u32 %v1853, 16
      %v1879 = vrot.slane %v1877, 7
      %v1880 = vor.u32 %v1876, %v1879
      %v1881 = vsel %vm1863, %v1872, %v1880
      %v1882 = vrot.slane %v1880, 4
      %v1884 = vshrl.u32 %v1854, 16
      %v1886 = vrot.slane %v1884, 6
      %v1887 = vshll.u32 %v1854, 16
      %v1889 = vrot.slane %v1887, 7
      %v1890 = vor.u32 %v1886, %v1889
      %v1891 = vsel %vm1863, %v1882, %v1890
      %v1892 = vrot.slane %v1890, 4
      %v1894 = vshrl.u32 %v1855, 16
      %v1896 = vrot.slane %v1894, 6
      %v1897 = vshll.u32 %v1855, 16
      %v1899 = vrot.slane %v1897, 7
      %v1900 = vor.u32 %v1896, %v1899
      %v1901 = vsel %vm1863, %v1892, %v1900
      %v1902 = vrot.slane %v1900, 4
      %v1904 = vshrl.u32 %v1856, 16
      %v1906 = vrot.slane %v1904, 6
      %v1907 = vshll.u32 %v1856, 16
      %v1909 = vrot.slane %v1907, 7
      %v1910 = vor.u32 %v1906, %v1909
      %v1911 = vsel %vm1863, %v1902, %v1910
      %v1912 = vrot.slane %v1910, 4
      %v1914 = vshrl.u32 %v1857, 16
      %v1916 = vrot.slane %v1914, 6
      %v1917 = vshll.u32 %v1857, 16
      %v1919 = vrot.slane %v1917, 7
      %v1920 = vor.u32 %v1916, %v1919
      %v1921 = vsel %vm1863, %v1912, %v1920
      %v1922 = vrot.slane %v1920, 4
      %v1924 = vshrl.u32 %v1858, 16
      %v1926 = vrot.slane %v1924, 6
      %v1927 = vshll.u32 %v1858, 16
      %v1929 = vrot.slane %v1927, 7
      %v1930 = vor.u32 %v1926, %v1929
      %v1931 = vsel %vm1863, %v1922, %v1930
      %v1932 = vrot.slane %v1930, 4
      %v1934 = vshrl.u32 %v1859, 16
      %v1936 = vrot.slane %v1934, 6
      %v1937 = vshll.u32 %v1859, 16
      %v1939 = vrot.slane %v1937, 7
      %v1940 = vor.u32 %v1936, %v1939
      %v1941 = vsel %vm1863, %v1932, %v1940
      %v1942 = vrot.slane %v1940, 4
      %v1944 = vshrl.u32 %v1860, 16
      %v1946 = vrot.slane %v1944, 6
      %v1947 = vshll.u32 %v1860, 16
      %v1949 = vrot.slane %v1947, 7
      %v1950 = vor.u32 %v1946, %v1949
      %v1951 = vsel %vm1863, %v1942, %v1950
      %v1952 = vrot.slane %v1950, 4
      %v1954 = vshrl.u32 %v1861, 16
      %v1956 = vrot.slane %v1954, 6
      %v1957 = vshll.u32 %v1861, 16
      %v1959 = vrot.slane %v1957, 7
      %v1960 = vor.u32 %v1956, %v1959
      %v1961 = vsel %vm1863, %v1952, %v1960
      %v1962 = vrot.slane %v1960, 4
      %v1974 = vld [vmem:[#allocation2 + $0x4] sm:$0xe]
      %v1975 = vsel %vm342, %v1871, %v1974
      %1976 = vst [vmem:[#allocation2 + $0x4] sm:$0xe] %v1975
      %1977 = vst.msk [vmem:[#allocation2 + $0x8] sm:$0xf] %vm332, %v1881
      %1978 = vst.msk [vmem:[#allocation2 + $0xc] sm:$0xf] %vm332, %v1891
      %1979 = vst.msk [vmem:[#allocation2 + $0x10] sm:$0xf] %vm332, %v1901
      %1980 = vst.msk [vmem:[#allocation2 + $0x14] sm:$0xf] %vm332, %v1911
      %1981 = vst.msk [vmem:[#allocation2 + $0x18] sm:$0xf] %vm332, %v1921
      %1982 = vst.msk [vmem:[#allocation2 + $0x1c] sm:$0xf] %vm332, %v1931
      %1983 = vst.msk [vmem:[#allocation2 + $0x20] sm:$0xf] %vm332, %v1941
      %1984 = vst.msk [vmem:[#allocation2 + $0x24] sm:$0xf] %vm332, %v1951
      %1985 = vst.msk [vmem:[#allocation2 + $0x28] sm:$0xf] %vm332, %v1961
      %v1986 = vld [vmem:[#allocation2 + $0x2c] sm:$0x3]
      %v1987 = vsel %vm336, %v1962, %v1986
      %1988 = vst [vmem:[#allocation2 + $0x2c] sm:$0x3] %v1987
      %v1989 = vld [vmem:[#allocation2] sm:$0xf]
      %v1990 = vld [vmem:[#allocation2 + $0x4] sm:$0xf]
      %v1991 = vld [vmem:[#allocation2 + $0x8] sm:$0xf]
      %v1992 = vld [vmem:[#allocation2 + $0xc] sm:$0xf]
      %v1993 = vld [vmem:[#allocation2 + $0x10] sm:$0xf]
      %v1994 = vld [vmem:[#allocation2 + $0x14] sm:$0xf]
      %v1995 = vld [vmem:[#allocation2 + $0x18] sm:$0xf]
      %v1996 = vld [vmem:[#allocation2 + $0x1c] sm:$0xf]
      %v1997 = vld [vmem:[#allocation2 + $0x20] sm:$0xf]
      %v1998 = vld [vmem:[#allocation2 + $0x24] sm:$0xf]
      %v1999 = vld [vmem:[%s3] sm:$0xf]
      %v2000 = vld [vmem:[%s3 + $0x4] sm:$0xf]
      %v2001 = vld [vmem:[%s3 + $0x8] sm:$0xf]
      %v2002 = vld [vmem:[%s3 + $0xc] sm:$0xf]
      %v2003 = vld [vmem:[#allocation2 + $0x28] sm:$0x1]
      %s2004 = scalar_lea.vmem %s3, 16
      %v2005 = vld [vmem:[%s2004] sm:$0xf]
      %v2006 = vld [vmem:[%s2004 + $0x4] sm:$0xf]
      %v2007 = vld [vmem:[%s2004 + $0x8] sm:$0xf]
      %v2008 = vld [vmem:[%s2004 + $0xc] sm:$0xf]
      %v2020 = vunpack.c.l.b16 %v1989
      %v2021 = vunpack.c.l.b16 %v1990
      %v2022 = vunpack.c.l.b16 %v1991
      %v2023 = vunpack.c.l.b16 %v1992
      %v2024 = vunpack.c.l.b16 %v1993
      %v2025 = vunpack.c.l.b16 %v1994
      %v2026 = vunpack.c.l.b16 %v1995
      %v2027 = vunpack.c.l.b16 %v1996
      %v2028 = vunpack.c.l.b16 %v1997
      %v2029 = vunpack.c.l.b16 %v1998
      %v2030 = vunpack.c.l.b16 %v2003
      %v2031 = vpack.c.b16 %v2021, %v2020
      %v2032 = vpack.c.b16 %v2023, %v2022
      %v2033 = vpack.c.b16 %v2025, %v2024
      %v2034 = vpack.c.b16 %v2027, %v2026
      %v2035 = vpack.c.b16 %v2029, %v2028
      %v2036 = vpack.c.b16 %v2030, %v2030
      %v2038 = vshrl.u32 %v2031, 16
      %v2040 = vshll.u32 %v2031, 16
      %v2042 = vrot.slane %v2040, 1
      %v2043 = vor.u32 %v2038, %v2042
      %v2045 = vshll.u32 %v2032, 16
      %v2047 = vrot.slane %v2045, 1
      %v2048 = vsel %vm946, %v2043, %v2047
      %v2049 = vshrl.u32 %v2032, 16
      %v2051 = vor.u32 %v2049, %v2047
      %v2053 = vshll.u32 %v2033, 16
      %v2055 = vrot.slane %v2053, 1
      %v2056 = vsel %vm946, %v2051, %v2055
      %v2057 = vshrl.u32 %v2033, 16
      %v2059 = vor.u32 %v2057, %v2055
      %v2061 = vshll.u32 %v2034, 16
      %v2063 = vrot.slane %v2061, 1
      %v2064 = vsel %vm946, %v2059, %v2063
      %v2065 = vshrl.u32 %v2034, 16
      %v2067 = vor.u32 %v2065, %v2063
      %v2069 = vshll.u32 %v2035, 16
      %v2071 = vrot.slane %v2069, 1
      %v2072 = vsel %vm946, %v2067, %v2071
      %v2073 = vshrl.u32 %v2035, 16
      %v2075 = vor.u32 %v2073, %v2071
      %v2077 = vshll.u32 %v2036, 16
      %v2079 = vrot.slane %v2077, 1
      %v2080 = vsel %vm946, %v2075, %v2079
      %v2085 = vunpack.c.l.b16 %v2005
      %v2086 = vunpack.c.l.b16 %v2006
      %v2087 = vunpack.c.l.b16 %v2007
      %v2088 = vunpack.c.l.b16 %v2008
      %v2089 = vpack.c.b16 %v2086, %v2085
      %v2090 = vpack.c.b16 %v2088, %v2087
      %vm2093 = vcmask 261120
      %v2095 = vsel %vm2093, %v2048, 0
      %v2098 = vsel %vm2093, %v2056, 0
      %v2101 = vsel %vm2093, %v2064, 0
      %v2104 = vsel %vm2093, %v2072, 0
      %v2107 = vsel %vm2093, %v2080, 0
      %2109 = vmatpush.bf16.msra.mxu0 0
      %2110 = vmatpush.bf16.msra.mxu0 0
      %2111 = vmatpush.bf16.msra.mxu0 0
      %2112 = vmatpush.bf16.msra.mxu0 0
      %2113 = vmatpush.bf16.msra.mxu0 0
      %2114 = vmatpush.bf16.msra.mxu0 0
      %2115 = vmatpush.bf16.msra.mxu0 %v2090
      %2116 = vmatpush.bf16.msra.mxu0 %v2089
      %2117 = vmatmul.bf16.gmra.mxu0 %v2095
      %v2118 = vpop.f32.mrf.mxu0
      %v2119 = vadd.f32 0.0, %v2118
      %v2120 = vpop.f32.mrf.mxu0
      %v2121 = vadd.f32 0.0, %v2120
      %2122 = vmatmul.bf16.gmra.mxu0 %v2098
      %v2123 = vpop.f32.mrf.mxu0
      %v2124 = vadd.f32 0.0, %v2123
      %v2125 = vpop.f32.mrf.mxu0
      %v2126 = vadd.f32 0.0, %v2125
      %2127 = vmatmul.bf16.gmra.mxu0 %v2101
      %v2128 = vpop.f32.mrf.mxu0
      %v2129 = vadd.f32 0.0, %v2128
      %v2130 = vpop.f32.mrf.mxu0
      %v2131 = vadd.f32 0.0, %v2130
      %2132 = vmatmul.bf16.gmra.mxu0 %v2104
      %v2133 = vpop.f32.mrf.mxu0
      %v2134 = vadd.f32 0.0, %v2133
      %v2135 = vpop.f32.mrf.mxu0
      %v2136 = vadd.f32 0.0, %v2135
      %2137 = vmatmul.bf16.gmra.mxu0 %v2107
      %v2138 = vpop.f32.mrf.mxu0
      %v2139 = vadd.f32 0.0, %v2138
      %v2140 = vpop.f32.mrf.mxu0
      %v2141 = vadd.f32 0.0, %v2140
      %2142 = vdwg.mxu0
      %v2147 = vunpack.c.l.b16 %v1999
      %v2148 = vunpack.c.l.b16 %v2000
      %v2149 = vunpack.c.l.b16 %v2001
      %v2150 = vunpack.c.l.b16 %v2002
      %v2151 = vpack.c.b16 %v2148, %v2147
      %v2152 = vpack.c.b16 %v2150, %v2149
      %v2155 = vsel %vm2093, %v2031, 0
      %v2157 = vsel %vm2093, %v2032, 0
      %v2159 = vsel %vm2093, %v2033, 0
      %v2161 = vsel %vm2093, %v2034, 0
      %v2163 = vsel %vm2093, %v2035, 0
      %2165 = vmatpush.bf16.msra.mxu0 0
      %2166 = vmatpush.bf16.msra.mxu0 0
      %2167 = vmatpush.bf16.msra.mxu0 0
      %2168 = vmatpush.bf16.msra.mxu0 0
      %2169 = vmatpush.bf16.msra.mxu0 0
      %2170 = vmatpush.bf16.msra.mxu0 0
      %2171 = vmatpush.bf16.msra.mxu0 %v2152
      %2172 = vmatpush.bf16.msra.mxu0 %v2151
      %2173 = vmatmul.bf16.gmra.mxu0 %v2155
      %v2174 = vpop.f32.mrf.mxu0
      %v2175 = vadd.f32 %v2119, %v2174
      %v2176 = vpop.f32.mrf.mxu0
      %v2177 = vadd.f32 %v2121, %v2176
      %2178 = vmatmul.bf16.gmra.mxu0 %v2157
      %v2179 = vpop.f32.mrf.mxu0
      %v2180 = vadd.f32 %v2124, %v2179
      %v2181 = vpop.f32.mrf.mxu0
      %v2182 = vadd.f32 %v2126, %v2181
      %2183 = vmatmul.bf16.gmra.mxu0 %v2159
      %v2184 = vpop.f32.mrf.mxu0
      %v2185 = vadd.f32 %v2129, %v2184
      %v2186 = vpop.f32.mrf.mxu0
      %v2187 = vadd.f32 %v2131, %v2186
      %2188 = vmatmul.bf16.gmra.mxu0 %v2161
      %v2189 = vpop.f32.mrf.mxu0
      %v2190 = vadd.f32 %v2134, %v2189
      %v2191 = vpop.f32.mrf.mxu0
      %v2192 = vadd.f32 %v2136, %v2191
      %2193 = vmatmul.bf16.gmra.mxu0 %v2163
      %v2194 = vpop.f32.mrf.mxu0
      %v2195 = vadd.f32 %v2139, %v2194
      %v2196 = vpop.f32.mrf.mxu0
      %v2197 = vadd.f32 %v2141, %v2196
      %2198 = vdwg.mxu0
      %v2199 = vld [vmem:[#allocation2] sm:$0xe]
      %s2200 = scalar_lea.vmem %s3, 32
      %v2201 = vld [vmem:[%s2200] sm:$0xf]
      %v2202 = vld [vmem:[%s2200 + $0x4] sm:$0xf]
      %v2203 = vld [vmem:[%s2200 + $0x8] sm:$0xf]
      %v2204 = vld [vmem:[%s2200 + $0xc] sm:$0xf]
      %v2206 = vunpack.c.l.b16 %v2199
      %v2207 = vpack.c.b16 %v2021, %v2206
      %v2208 = vrot.slane %v2207, 1
      %v2209 = vrot.slane %v2032, 1
      %v2210 = vsel %vm1457, %v2208, %v2209
      %v2211 = vrot.slane %v2033, 1
      %v2212 = vsel %vm1457, %v2209, %v2211
      %v2213 = vrot.slane %v2034, 1
      %v2214 = vsel %vm1457, %v2211, %v2213
      %v2215 = vrot.slane %v2035, 1
      %v2216 = vsel %vm1457, %v2213, %v2215
      %v2217 = vrot.slane %v2036, 1
      %v2218 = vsel %vm1457, %v2215, %v2217
      %v2223 = vunpack.c.l.b16 %v2201
      %v2224 = vunpack.c.l.b16 %v2202
      %v2225 = vunpack.c.l.b16 %v2203
      %v2226 = vunpack.c.l.b16 %v2204
      %v2227 = vpack.c.b16 %v2224, %v2223
      %v2228 = vpack.c.b16 %v2226, %v2225
      %v2232 = vsel %vm2093, %v2210, 0
      %v2235 = vsel %vm2093, %v2212, 0
      %v2238 = vsel %vm2093, %v2214, 0
      %v2241 = vsel %vm2093, %v2216, 0
      %v2244 = vsel %vm2093, %v2218, 0
      %2246 = vmatpush.bf16.msra.mxu0 0
      %2247 = vmatpush.bf16.msra.mxu0 0
      %2248 = vmatpush.bf16.msra.mxu0 0
      %2249 = vmatpush.bf16.msra.mxu0 0
      %2250 = vmatpush.bf16.msra.mxu0 0
      %2251 = vmatpush.bf16.msra.mxu0 0
      %2252 = vmatpush.bf16.msra.mxu0 %v2228
      %2253 = vmatpush.bf16.msra.mxu0 %v2227
      %2254 = vmatmul.bf16.gmra.mxu0 %v2232
      %v2255 = vpop.f32.mrf.mxu0
      %v2256 = vadd.f32 0.0, %v2255
      %v2257 = vpop.f32.mrf.mxu0
      %v2258 = vadd.f32 0.0, %v2257
      %2259 = vmatmul.bf16.gmra.mxu0 %v2235
      %v2260 = vpop.f32.mrf.mxu0
      %v2261 = vadd.f32 0.0, %v2260
      %v2262 = vpop.f32.mrf.mxu0
      %v2263 = vadd.f32 0.0, %v2262
      %2264 = vmatmul.bf16.gmra.mxu0 %v2238
      %v2265 = vpop.f32.mrf.mxu0
      %v2266 = vadd.f32 0.0, %v2265
      %v2267 = vpop.f32.mrf.mxu0
      %v2268 = vadd.f32 0.0, %v2267
      %2269 = vmatmul.bf16.gmra.mxu0 %v2241
      %v2270 = vpop.f32.mrf.mxu0
      %v2271 = vadd.f32 0.0, %v2270
      %v2272 = vpop.f32.mrf.mxu0
      %v2273 = vadd.f32 0.0, %v2272
      %2274 = vmatmul.bf16.gmra.mxu0 %v2244
      %v2275 = vpop.f32.mrf.mxu0
      %v2276 = vadd.f32 0.0, %v2275
      %v2277 = vpop.f32.mrf.mxu0
      %v2278 = vadd.f32 0.0, %v2277
      %2279 = vdwg.mxu0
      %v2280 = vadd.f32 %v2175, %v2256
      %v2281 = vadd.f32 %v2177, %v2258
      %v2282 = vadd.f32 %v2180, %v2261
      %v2283 = vadd.f32 %v2182, %v2263
      %v2284 = vadd.f32 %v2185, %v2266
      %v2285 = vadd.f32 %v2187, %v2268
      %v2286 = vadd.f32 %v2190, %v2271
      %v2287 = vadd.f32 %v2192, %v2273
      %v2288 = vadd.f32 %v2195, %v2276
      %v2289 = vadd.f32 %v2197, %v2278
      %v2290 = vld [vmem:[#allocation2 + $0x4] sm:$0xe]
      %v2291 = vld [vmem:[#allocation2 + $0x8] sm:$0xf]
      %v2292 = vld [vmem:[#allocation2 + $0xc] sm:$0xf]
      %v2293 = vld [vmem:[#allocation2 + $0x10] sm:$0xf]
      %v2294 = vld [vmem:[#allocation2 + $0x14] sm:$0xf]
      %v2295 = vld [vmem:[#allocation2 + $0x18] sm:$0xf]
      %v2296 = vld [vmem:[#allocation2 + $0x1c] sm:$0xf]
      %v2297 = vld [vmem:[#allocation2 + $0x20] sm:$0xf]
      %v2298 = vld [vmem:[#allocation2 + $0x24] sm:$0xf]
      %v2299 = vld [vmem:[#allocation2 + $0x28] sm:$0xf]
      %v2300 = vld [vmem:[#allocation2 + $0x2c] sm:$0x1]
      %s2301 = scalar_lea.vmem %s3, 48
      %v2302 = vld [vmem:[%s2301] sm:$0xf]
      %v2303 = vld [vmem:[%s2301 + $0x4] sm:$0xf]
      %v2304 = vld [vmem:[%s2301 + $0x8] sm:$0xf]
      %v2305 = vld [vmem:[%s2301 + $0xc] sm:$0xf]
      %v2317 = vunpack.c.l.b16 %v2290
      %v2318 = vunpack.c.l.b16 %v2291
      %v2319 = vunpack.c.l.b16 %v2292
      %v2320 = vunpack.c.l.b16 %v2293
      %v2321 = vunpack.c.l.b16 %v2294
      %v2322 = vunpack.c.l.b16 %v2295
      %v2323 = vunpack.c.l.b16 %v2296
      %v2324 = vunpack.c.l.b16 %v2297
      %v2325 = vunpack.c.l.b16 %v2298
      %v2326 = vunpack.c.l.b16 %v2299
      %v2327 = vunpack.c.l.b16 %v2300
      %v2328 = vpack.c.b16 %v2318, %v2317
      %v2329 = vpack.c.b16 %v2320, %v2319
      %v2330 = vpack.c.b16 %v2322, %v2321
      %v2331 = vpack.c.b16 %v2324, %v2323
      %v2332 = vpack.c.b16 %v2326, %v2325
      %v2333 = vpack.c.b16 %v2327, %v2327
      %v2334 = vrot.slane %v2328, 1
      %v2335 = vrot.slane %v2329, 1
      %v2336 = vsel %vm1457, %v2334, %v2335
      %v2337 = vrot.slane %v2330, 1
      %v2338 = vsel %vm1457, %v2335, %v2337
      %v2339 = vrot.slane %v2331, 1
      %v2340 = vsel %vm1457, %v2337, %v2339
      %v2341 = vrot.slane %v2332, 1
      %v2342 = vsel %vm1457, %v2339, %v2341
      %v2343 = vrot.slane %v2333, 1
      %v2344 = vsel %vm1457, %v2341, %v2343
      %v2349 = vunpack.c.l.b16 %v2302
      %v2350 = vunpack.c.l.b16 %v2303
      %v2351 = vunpack.c.l.b16 %v2304
      %v2352 = vunpack.c.l.b16 %v2305
      %v2353 = vpack.c.b16 %v2350, %v2349
      %v2354 = vpack.c.b16 %v2352, %v2351
      %v2358 = vsel %vm2093, %v2336, 0
      %v2361 = vsel %vm2093, %v2338, 0
      %v2364 = vsel %vm2093, %v2340, 0
      %v2367 = vsel %vm2093, %v2342, 0
      %v2370 = vsel %vm2093, %v2344, 0
      %2372 = vmatpush.bf16.msra.mxu0 0
      %2373 = vmatpush.bf16.msra.mxu0 0
      %2374 = vmatpush.bf16.msra.mxu0 0
      %2375 = vmatpush.bf16.msra.mxu0 0
      %2376 = vmatpush.bf16.msra.mxu0 0
      %2377 = vmatpush.bf16.msra.mxu0 0
      %2378 = vmatpush.bf16.msra.mxu0 %v2354
      %2379 = vmatpush.bf16.msra.mxu0 %v2353
      %2380 = vmatmul.bf16.gmra.mxu0 %v2358
      %v2381 = vpop.f32.mrf.mxu0
      %v2382 = vadd.f32 0.0, %v2381
      %v2383 = vpop.f32.mrf.mxu0
      %v2384 = vadd.f32 0.0, %v2383
      %2385 = vmatmul.bf16.gmra.mxu0 %v2361
      %v2386 = vpop.f32.mrf.mxu0
      %v2387 = vadd.f32 0.0, %v2386
      %v2388 = vpop.f32.mrf.mxu0
      %v2389 = vadd.f32 0.0, %v2388
      %2390 = vmatmul.bf16.gmra.mxu0 %v2364
      %v2391 = vpop.f32.mrf.mxu0
      %v2392 = vadd.f32 0.0, %v2391
      %v2393 = vpop.f32.mrf.mxu0
      %v2394 = vadd.f32 0.0, %v2393
      %2395 = vmatmul.bf16.gmra.mxu0 %v2367
      %v2396 = vpop.f32.mrf.mxu0
      %v2397 = vadd.f32 0.0, %v2396
      %v2398 = vpop.f32.mrf.mxu0
      %v2399 = vadd.f32 0.0, %v2398
      %2400 = vmatmul.bf16.gmra.mxu0 %v2370
      %v2401 = vpop.f32.mrf.mxu0
      %v2402 = vadd.f32 0.0, %v2401
      %v2403 = vpop.f32.mrf.mxu0
      %v2404 = vadd.f32 0.0, %v2403
      %2405 = vdwg.mxu0
      %v2406 = vadd.f32 %v2280, %v2382
      %v2407 = vadd.f32 %v2281, %v2384
      %v2408 = vadd.f32 %v2282, %v2387
      %v2409 = vadd.f32 %v2283, %v2389
      %v2410 = vadd.f32 %v2284, %v2392
      %v2411 = vadd.f32 %v2285, %v2394
      %v2412 = vadd.f32 %v2286, %v2397
      %v2413 = vadd.f32 %v2287, %v2399
      %v2414 = vadd.f32 %v2288, %v2402
      %v2415 = vadd.f32 %v2289, %v2404
      %v2416 = vld [vmem:[#allocation2 + $0x2c] sm:$0x3]
      %s2417 = scalar_lea.vmem %s3, 64
      %v2418 = vld [vmem:[%s2417] sm:$0xf]
      %v2419 = vld [vmem:[%s2417 + $0x4] sm:$0xf]
      %v2420 = vld [vmem:[%s2417 + $0x8] sm:$0xf]
      %v2421 = vld [vmem:[%s2417 + $0xc] sm:$0xf]
      %v2423 = vunpack.c.l.b16 %v2416
      %v2424 = vpack.c.b16 %v2423, %v2423
      %v2426 = vshrl.u32 %v2328, 16
      %v2428 = vrot.slane %v2426, 1
      %v2429 = vshll.u32 %v2328, 16
      %v2431 = vrot.slane %v2429, 2
      %v2432 = vor.u32 %v2428, %v2431
      %v2434 = vshrl.u32 %v2329, 16
      %v2436 = vrot.slane %v2434, 1
      %v2437 = vshll.u32 %v2329, 16
      %v2439 = vrot.slane %v2437, 2
      %v2440 = vor.u32 %v2436, %v2439
      %v2441 = vsel %vm1659, %v2432, %v2440
      %v2443 = vshrl.u32 %v2330, 16
      %v2445 = vrot.slane %v2443, 1
      %v2446 = vshll.u32 %v2330, 16
      %v2448 = vrot.slane %v2446, 2
      %v2449 = vor.u32 %v2445, %v2448
      %v2450 = vsel %vm1659, %v2440, %v2449
      %v2452 = vshrl.u32 %v2331, 16
      %v2454 = vrot.slane %v2452, 1
      %v2455 = vshll.u32 %v2331, 16
      %v2457 = vrot.slane %v2455, 2
      %v2458 = vor.u32 %v2454, %v2457
      %v2459 = vsel %vm1659, %v2449, %v2458
      %v2461 = vshrl.u32 %v2332, 16
      %v2463 = vrot.slane %v2461, 1
      %v2464 = vshll.u32 %v2332, 16
      %v2466 = vrot.slane %v2464, 2
      %v2467 = vor.u32 %v2463, %v2466
      %v2468 = vsel %vm1659, %v2458, %v2467
      %v2470 = vshrl.u32 %v2424, 16
      %v2472 = vrot.slane %v2470, 1
      %v2473 = vshll.u32 %v2424, 16
      %v2475 = vrot.slane %v2473, 2
      %v2476 = vor.u32 %v2472, %v2475
      %v2477 = vsel %vm1659, %v2467, %v2476
      %v2482 = vunpack.c.l.b16 %v2418
      %v2483 = vunpack.c.l.b16 %v2419
      %v2484 = vunpack.c.l.b16 %v2420
      %v2485 = vunpack.c.l.b16 %v2421
      %v2486 = vpack.c.b16 %v2483, %v2482
      %v2487 = vpack.c.b16 %v2485, %v2484
      %v2491 = vsel %vm2093, %v2441, 0
      %v2494 = vsel %vm2093, %v2450, 0
      %v2497 = vsel %vm2093, %v2459, 0
      %v2500 = vsel %vm2093, %v2468, 0
      %v2503 = vsel %vm2093, %v2477, 0
      %2505 = vmatpush.bf16.msra.mxu0 0
      %2506 = vmatpush.bf16.msra.mxu0 0
      %2507 = vmatpush.bf16.msra.mxu0 0
      %2508 = vmatpush.bf16.msra.mxu0 0
      %2509 = vmatpush.bf16.msra.mxu0 0
      %2510 = vmatpush.bf16.msra.mxu0 0
      %2511 = vmatpush.bf16.msra.mxu0 %v2487
      %2512 = vmatpush.bf16.msra.mxu0 %v2486
      %2513 = vmatmul.bf16.gmra.mxu0 %v2491
      %v2514 = vpop.f32.mrf.mxu0
      %v2515 = vadd.f32 0.0, %v2514
      %v2516 = vpop.f32.mrf.mxu0
      %v2517 = vadd.f32 0.0, %v2516
      %2518 = vmatmul.bf16.gmra.mxu0 %v2494
      %v2519 = vpop.f32.mrf.mxu0
      %v2520 = vadd.f32 0.0, %v2519
      %v2521 = vpop.f32.mrf.mxu0
      %v2522 = vadd.f32 0.0, %v2521
      %2523 = vmatmul.bf16.gmra.mxu0 %v2497
      %v2524 = vpop.f32.mrf.mxu0
      %v2525 = vadd.f32 0.0, %v2524
      %v2526 = vpop.f32.mrf.mxu0
      %v2527 = vadd.f32 0.0, %v2526
      %2528 = vmatmul.bf16.gmra.mxu0 %v2500
      %v2529 = vpop.f32.mrf.mxu0
      %v2530 = vadd.f32 0.0, %v2529
      %v2531 = vpop.f32.mrf.mxu0
      %v2532 = vadd.f32 0.0, %v2531
      %2533 = vmatmul.bf16.gmra.mxu0 %v2503
      %v2534 = vpop.f32.mrf.mxu0
      %v2535 = vadd.f32 0.0, %v2534
      %v2536 = vpop.f32.mrf.mxu0
      %v2537 = vadd.f32 0.0, %v2536
      %2538 = vdwg.mxu0
      %v2539 = vadd.f32 %v2406, %v2515
      %v2540 = vadd.f32 %v2407, %v2517
      %v2541 = vadd.f32 %v2408, %v2520
      %v2542 = vadd.f32 %v2409, %v2522
      %v2543 = vadd.f32 %v2410, %v2525
      %v2544 = vadd.f32 %v2411, %v2527
      %v2545 = vadd.f32 %v2412, %v2530
      %v2546 = vadd.f32 %v2413, %v2532
      %v2547 = vadd.f32 %v2414, %v2535
      %v2548 = vadd.f32 %v2415, %v2537
      %v2549 = vld [vmem:[#allocation2 + $0x4] sm:$0xc]
      %s2550 = scalar_lea.vmem %s3, 80
      %v2551 = vld [vmem:[%s2550] sm:$0xf]
      %v2552 = vld [vmem:[%s2550 + $0x4] sm:$0xf]
      %v2553 = vld [vmem:[%s2550 + $0x8] sm:$0xf]
      %v2554 = vld [vmem:[%s2550 + $0xc] sm:$0xf]
      %v2556 = vunpack.c.l.b16 %v2549
      %v2557 = vpack.c.b16 %v2318, %v2556
      %vm2558 = vcmask 1045504
      %v2559 = vrot.slane %v2557, 2
      %v2560 = vrot.slane %v2329, 2
      %v2561 = vsel %vm2558, %v2559, %v2560
      %v2562 = vrot.slane %v2330, 2
      %v2563 = vsel %vm2558, %v2560, %v2562
      %v2564 = vrot.slane %v2331, 2
      %v2565 = vsel %vm2558, %v2562, %v2564
      %v2566 = vrot.slane %v2332, 2
      %v2567 = vsel %vm2558, %v2564, %v2566
      %v2568 = vrot.slane %v2424, 2
      %v2569 = vsel %vm2558, %v2566, %v2568
      %v2574 = vunpack.c.l.b16 %v2551
      %v2575 = vunpack.c.l.b16 %v2552
      %v2576 = vunpack.c.l.b16 %v2553
      %v2577 = vunpack.c.l.b16 %v2554
      %v2578 = vpack.c.b16 %v2575, %v2574
      %v2579 = vpack.c.b16 %v2577, %v2576
      %v2583 = vsel %vm2093, %v2561, 0
      %v2586 = vsel %vm2093, %v2563, 0
      %v2589 = vsel %vm2093, %v2565, 0
      %v2592 = vsel %vm2093, %v2567, 0
      %v2595 = vsel %vm2093, %v2569, 0
      %2597 = vmatpush.bf16.msra.mxu0 0
      %2598 = vmatpush.bf16.msra.mxu0 0
      %2599 = vmatpush.bf16.msra.mxu0 0
      %2600 = vmatpush.bf16.msra.mxu0 0
      %2601 = vmatpush.bf16.msra.mxu0 0
      %2602 = vmatpush.bf16.msra.mxu0 0
      %2603 = vmatpush.bf16.msra.mxu0 %v2579
      %2604 = vmatpush.bf16.msra.mxu0 %v2578
      %2605 = vmatmul.bf16.gmra.mxu0 %v2583
      %v2606 = vpop.f32.mrf.mxu0
      %v2607 = vadd.f32 0.0, %v2606
      %v2608 = vpop.f32.mrf.mxu0
      %v2609 = vadd.f32 0.0, %v2608
      %2610 = vmatmul.bf16.gmra.mxu0 %v2586
      %v2611 = vpop.f32.mrf.mxu0
      %v2612 = vadd.f32 0.0, %v2611
      %v2613 = vpop.f32.mrf.mxu0
      %v2614 = vadd.f32 0.0, %v2613
      %2615 = vmatmul.bf16.gmra.mxu0 %v2589
      %v2616 = vpop.f32.mrf.mxu0
      %v2617 = vadd.f32 0.0, %v2616
      %v2618 = vpop.f32.mrf.mxu0
      %v2619 = vadd.f32 0.0, %v2618
      %2620 = vmatmul.bf16.gmra.mxu0 %v2592
      %v2621 = vpop.f32.mrf.mxu0
      %v2622 = vadd.f32 0.0, %v2621
      %v2623 = vpop.f32.mrf.mxu0
      %v2624 = vadd.f32 0.0, %v2623
      %2625 = vmatmul.bf16.gmra.mxu0 %v2595
      %v2626 = vpop.f32.mrf.mxu0
      %v2627 = vadd.f32 0.0, %v2626
      %v2628 = vpop.f32.mrf.mxu0
      %v2629 = vadd.f32 0.0, %v2628
      %2630 = vdwg.mxu0
      %v2631 = vadd.f32 %v2539, %v2607
      %v2632 = vadd.f32 %v2540, %v2609
      %v2633 = vadd.f32 %v2541, %v2612
      %v2634 = vadd.f32 %v2542, %v2614
      %v2635 = vadd.f32 %v2543, %v2617
      %v2636 = vadd.f32 %v2544, %v2619
      %v2637 = vadd.f32 %v2545, %v2622
      %v2638 = vadd.f32 %v2546, %v2624
      %v2639 = vadd.f32 %v2547, %v2627
      %v2640 = vadd.f32 %v2548, %v2629
      %v2641 = vld [vmem:[#allocation2 + $0x8] sm:$0xc]
      %v2642 = vld [vmem:[#allocation2 + $0xc] sm:$0xf]
      %v2643 = vld [vmem:[#allocation2 + $0x10] sm:$0xf]
      %v2644 = vld [vmem:[#allocation2 + $0x14] sm:$0xf]
      %v2645 = vld [vmem:[#allocation2 + $0x18] sm:$0xf]
      %v2646 = vld [vmem:[#allocation2 + $0x1c] sm:$0xf]
      %v2647 = vld [vmem:[#allocation2 + $0x20] sm:$0xf]
      %v2648 = vld [vmem:[#allocation2 + $0x24] sm:$0xf]
      %v2649 = vld [vmem:[#allocation2 + $0x28] sm:$0xf]
      %v2650 = vld [vmem:[#allocation2 + $0x2c] sm:$0xf]
      %v2651 = vld [vmem:[#allocation2 + $0x30] sm:$0x3]
      %s2652 = scalar_lea.vmem %s3, 96
      %v2653 = vld [vmem:[%s2652] sm:$0xf]
      %v2654 = vld [vmem:[%s2652 + $0x4] sm:$0xf]
      %v2655 = vld [vmem:[%s2652 + $0x8] sm:$0xf]
      %v2656 = vld [vmem:[%s2652 + $0xc] sm:$0xf]
      %v2668 = vunpack.c.l.b16 %v2641
      %v2669 = vunpack.c.l.b16 %v2642
      %v2670 = vunpack.c.l.b16 %v2643
      %v2671 = vunpack.c.l.b16 %v2644
      %v2672 = vunpack.c.l.b16 %v2645
      %v2673 = vunpack.c.l.b16 %v2646
      %v2674 = vunpack.c.l.b16 %v2647
      %v2675 = vunpack.c.l.b16 %v2648
      %v2676 = vunpack.c.l.b16 %v2649
      %v2677 = vunpack.c.l.b16 %v2650
      %v2678 = vunpack.c.l.b16 %v2651
      %v2679 = vpack.c.b16 %v2669, %v2668
      %v2680 = vpack.c.b16 %v2671, %v2670
      %v2681 = vpack.c.b16 %v2673, %v2672
      %v2682 = vpack.c.b16 %v2675, %v2674
      %v2683 = vpack.c.b16 %v2677, %v2676
      %v2684 = vpack.c.b16 %v2678, %v2678
      %v2685 = vrot.slane %v2679, 2
      %v2686 = vrot.slane %v2680, 2
      %v2687 = vsel %vm2558, %v2685, %v2686
      %v2688 = vrot.slane %v2681, 2
      %v2689 = vsel %vm2558, %v2686, %v2688
      %v2690 = vrot.slane %v2682, 2
      %v2691 = vsel %vm2558, %v2688, %v2690
      %v2692 = vrot.slane %v2683, 2
      %v2693 = vsel %vm2558, %v2690, %v2692
      %v2694 = vrot.slane %v2684, 2
      %v2695 = vsel %vm2558, %v2692, %v2694
      %v2700 = vunpack.c.l.b16 %v2653
      %v2701 = vunpack.c.l.b16 %v2654
      %v2702 = vunpack.c.l.b16 %v2655
      %v2703 = vunpack.c.l.b16 %v2656
      %v2704 = vpack.c.b16 %v2701, %v2700
      %v2705 = vpack.c.b16 %v2703, %v2702
      %v2709 = vsel %vm2093, %v2687, 0
      %v2712 = vsel %vm2093, %v2689, 0
      %v2715 = vsel %vm2093, %v2691, 0
      %v2718 = vsel %vm2093, %v2693, 0
      %v2721 = vsel %vm2093, %v2695, 0
      %2723 = vmatpush.bf16.msra.mxu0 0
      %2724 = vmatpush.bf16.msra.mxu0 0
      %2725 = vmatpush.bf16.msra.mxu0 0
      %2726 = vmatpush.bf16.msra.mxu0 0
      %2727 = vmatpush.bf16.msra.mxu0 0
      %2728 = vmatpush.bf16.msra.mxu0 0
      %2729 = vmatpush.bf16.msra.mxu0 %v2705
      %2730 = vmatpush.bf16.msra.mxu0 %v2704
      %2731 = vmatmul.bf16.gmra.mxu0 %v2709
      %v2732 = vpop.f32.mrf.mxu0
      %v2733 = vadd.f32 0.0, %v2732
      %v2734 = vpop.f32.mrf.mxu0
      %v2735 = vadd.f32 0.0, %v2734
      %2736 = vmatmul.bf16.gmra.mxu0 %v2712
      %v2737 = vpop.f32.mrf.mxu0
      %v2738 = vadd.f32 0.0, %v2737
      %v2739 = vpop.f32.mrf.mxu0
      %v2740 = vadd.f32 0.0, %v2739
      %2741 = vmatmul.bf16.gmra.mxu0 %v2715
      %v2742 = vpop.f32.mrf.mxu0
      %v2743 = vadd.f32 0.0, %v2742
      %v2744 = vpop.f32.mrf.mxu0
      %v2745 = vadd.f32 0.0, %v2744
      %2746 = vmatmul.bf16.gmra.mxu0 %v2718
      %v2747 = vpop.f32.mrf.mxu0
      %v2748 = vadd.f32 0.0, %v2747
      %v2749 = vpop.f32.mrf.mxu0
      %v2750 = vadd.f32 0.0, %v2749
      %2751 = vmatmul.bf16.gmra.mxu0 %v2721
      %v2752 = vpop.f32.mrf.mxu0
      %v2753 = vadd.f32 0.0, %v2752
      %v2754 = vpop.f32.mrf.mxu0
      %v2755 = vadd.f32 0.0, %v2754
      %2756 = vdwg.mxu0
      %v2757 = vadd.f32 %v2631, %v2733
      %v2758 = vadd.f32 %v2632, %v2735
      %v2759 = vadd.f32 %v2633, %v2738
      %v2760 = vadd.f32 %v2634, %v2740
      %v2761 = vadd.f32 %v2635, %v2743
      %v2762 = vadd.f32 %v2636, %v2745
      %v2763 = vadd.f32 %v2637, %v2748
      %v2764 = vadd.f32 %v2638, %v2750
      %v2765 = vadd.f32 %v2639, %v2753
      %v2766 = vadd.f32 %v2640, %v2755
      %v2767 = vld [vmem:[#allocation2 + $0x30] sm:$0x7]
      %s2768 = scalar_lea.vmem %s3, 112
      %v2769 = vld [vmem:[%s2768] sm:$0xf]
      %v2770 = vld [vmem:[%s2768 + $0x4] sm:$0xf]
      %v2771 = vld [vmem:[%s2768 + $0x8] sm:$0xf]
      %v2772 = vld [vmem:[%s2768 + $0xc] sm:$0xf]
      %v2774 = vunpack.c.l.b16 %v2767
      %v2775 = vpack.c.b16 %v2774, %v2774
      %vm2776 = vsmask.f32 5376
      %v2778 = vshrl.u32 %v2679, 16
      %v2780 = vrot.slane %v2778, 2
      %v2781 = vshll.u32 %v2679, 16
      %v2783 = vrot.slane %v2781, 3
      %v2784 = vor.u32 %v2780, %v2783
      %v2786 = vshrl.u32 %v2680, 16
      %v2788 = vrot.slane %v2786, 2
      %v2789 = vshll.u32 %v2680, 16
      %v2791 = vrot.slane %v2789, 3
      %v2792 = vor.u32 %v2788, %v2791
      %v2793 = vsel %vm2776, %v2784, %v2792
      %v2795 = vshrl.u32 %v2681, 16
      %v2797 = vrot.slane %v2795, 2
      %v2798 = vshll.u32 %v2681, 16
      %v2800 = vrot.slane %v2798, 3
      %v2801 = vor.u32 %v2797, %v2800
      %v2802 = vsel %vm2776, %v2792, %v2801
      %v2804 = vshrl.u32 %v2682, 16
      %v2806 = vrot.slane %v2804, 2
      %v2807 = vshll.u32 %v2682, 16
      %v2809 = vrot.slane %v2807, 3
      %v2810 = vor.u32 %v2806, %v2809
      %v2811 = vsel %vm2776, %v2801, %v2810
      %v2813 = vshrl.u32 %v2683, 16
      %v2815 = vrot.slane %v2813, 2
      %v2816 = vshll.u32 %v2683, 16
      %v2818 = vrot.slane %v2816, 3
      %v2819 = vor.u32 %v2815, %v2818
      %v2820 = vsel %vm2776, %v2810, %v2819
      %v2822 = vshrl.u32 %v2775, 16
      %v2824 = vrot.slane %v2822, 2
      %v2825 = vshll.u32 %v2775, 16
      %v2827 = vrot.slane %v2825, 3
      %v2828 = vor.u32 %v2824, %v2827
      %v2829 = vsel %vm2776, %v2819, %v2828
      %v2834 = vunpack.c.l.b16 %v2769
      %v2835 = vunpack.c.l.b16 %v2770
      %v2836 = vunpack.c.l.b16 %v2771
      %v2837 = vunpack.c.l.b16 %v2772
      %v2838 = vpack.c.b16 %v2835, %v2834
      %v2839 = vpack.c.b16 %v2837, %v2836
      %v2843 = vsel %vm2093, %v2793, 0
      %v2846 = vsel %vm2093, %v2802, 0
      %v2849 = vsel %vm2093, %v2811, 0
      %v2852 = vsel %vm2093, %v2820, 0
      %v2855 = vsel %vm2093, %v2829, 0
      %2857 = vmatpush.bf16.msra.mxu0 0
      %2858 = vmatpush.bf16.msra.mxu0 0
      %2859 = vmatpush.bf16.msra.mxu0 0
      %2860 = vmatpush.bf16.msra.mxu0 0
      %2861 = vmatpush.bf16.msra.mxu0 0
      %2862 = vmatpush.bf16.msra.mxu0 0
      %2863 = vmatpush.bf16.msra.mxu0 %v2839
      %2864 = vmatpush.bf16.msra.mxu0 %v2838
      %2865 = vmatmul.bf16.gmra.mxu0 %v2843
      %v2866 = vpop.f32.mrf.mxu0
      %v2867 = vadd.f32 0.0, %v2866
      %v2868 = vpop.f32.mrf.mxu0
      %v2869 = vadd.f32 0.0, %v2868
      %2870 = vmatmul.bf16.gmra.mxu0 %v2846
      %v2871 = vpop.f32.mrf.mxu0
      %v2872 = vadd.f32 0.0, %v2871
      %v2873 = vpop.f32.mrf.mxu0
      %v2874 = vadd.f32 0.0, %v2873
      %2875 = vmatmul.bf16.gmra.mxu0 %v2849
      %v2876 = vpop.f32.mrf.mxu0
      %v2877 = vadd.f32 0.0, %v2876
      %v2878 = vpop.f32.mrf.mxu0
      %v2879 = vadd.f32 0.0, %v2878
      %2880 = vmatmul.bf16.gmra.mxu0 %v2852
      %v2881 = vpop.f32.mrf.mxu0
      %v2882 = vadd.f32 0.0, %v2881
      %v2883 = vpop.f32.mrf.mxu0
      %v2884 = vadd.f32 0.0, %v2883
      %2885 = vmatmul.bf16.gmra.mxu0 %v2855
      %v2886 = vpop.f32.mrf.mxu0
      %v2887 = vadd.f32 0.0, %v2886
      %v2888 = vpop.f32.mrf.mxu0
      %v2889 = vadd.f32 0.0, %v2888
      %2890 = vdwg.mxu0
      %v2891 = vadd.f32 %v2757, %v2867
      %v2892 = vadd.f32 %v2758, %v2869
      %v2893 = vadd.f32 %v2759, %v2872
      %v2894 = vadd.f32 %v2760, %v2874
      %v2895 = vadd.f32 %v2761, %v2877
      %v2896 = vadd.f32 %v2762, %v2879
      %v2897 = vadd.f32 %v2763, %v2882
      %v2898 = vadd.f32 %v2764, %v2884
      %v2899 = vadd.f32 %v2765, %v2887
      %v2900 = vadd.f32 %v2766, %v2889
      %v2901 = vld [vmem:[#allocation2 + $0x8] sm:$0x8]
      %s2902 = scalar_lea.vmem %s3, 128
      %v2903 = vld [vmem:[%s2902] sm:$0xf]
      %v2904 = vld [vmem:[%s2902 + $0x4] sm:$0xf]
      %v2905 = vld [vmem:[%s2902 + $0x8] sm:$0xf]
      %v2906 = vld [vmem:[%s2902 + $0xc] sm:$0xf]
      %v2908 = vunpack.c.l.b16 %v2901
      %v2909 = vpack.c.b16 %v2669, %v2908
      %vm2910 = vcmask 1044480
      %v2911 = vrot.slane %v2909, 3
      %v2912 = vrot.slane %v2680, 3
      %v2913 = vsel %vm2910, %v2911, %v2912
      %v2914 = vrot.slane %v2681, 3
      %v2915 = vsel %vm2910, %v2912, %v2914
      %v2916 = vrot.slane %v2682, 3
      %v2917 = vsel %vm2910, %v2914, %v2916
      %v2918 = vrot.slane %v2683, 3
      %v2919 = vsel %vm2910, %v2916, %v2918
      %v2920 = vrot.slane %v2775, 3
      %v2921 = vsel %vm2910, %v2918, %v2920
      %v2926 = vunpack.c.l.b16 %v2903
      %v2927 = vunpack.c.l.b16 %v2904
      %v2928 = vunpack.c.l.b16 %v2905
      %v2929 = vunpack.c.l.b16 %v2906
      %v2930 = vpack.c.b16 %v2927, %v2926
      %v2931 = vpack.c.b16 %v2929, %v2928
      %v2935 = vsel %vm2093, %v2913, 0
      %v2938 = vsel %vm2093, %v2915, 0
      %v2941 = vsel %vm2093, %v2917, 0
      %v2944 = vsel %vm2093, %v2919, 0
      %v2947 = vsel %vm2093, %v2921, 0
      %2949 = vmatpush.bf16.msra.mxu0 0
      %2950 = vmatpush.bf16.msra.mxu0 0
      %2951 = vmatpush.bf16.msra.mxu0 0
      %2952 = vmatpush.bf16.msra.mxu0 0
      %2953 = vmatpush.bf16.msra.mxu0 0
      %2954 = vmatpush.bf16.msra.mxu0 0
      %2955 = vmatpush.bf16.msra.mxu0 %v2931
      %2956 = vmatpush.bf16.msra.mxu0 %v2930
      %2957 = vmatmul.bf16.gmra.mxu0 %v2935
      %v2958 = vpop.f32.mrf.mxu0
      %v2959 = vadd.f32 0.0, %v2958
      %v2960 = vpop.f32.mrf.mxu0
      %v2961 = vadd.f32 0.0, %v2960
      %2962 = vmatmul.bf16.gmra.mxu0 %v2938
      %v2963 = vpop.f32.mrf.mxu0
      %v2964 = vadd.f32 0.0, %v2963
      %v2965 = vpop.f32.mrf.mxu0
      %v2966 = vadd.f32 0.0, %v2965
      %2967 = vmatmul.bf16.gmra.mxu0 %v2941
      %v2968 = vpop.f32.mrf.mxu0
      %v2969 = vadd.f32 0.0, %v2968
      %v2970 = vpop.f32.mrf.mxu0
      %v2971 = vadd.f32 0.0, %v2970
      %2972 = vmatmul.bf16.gmra.mxu0 %v2944
      %v2973 = vpop.f32.mrf.mxu0
      %v2974 = vadd.f32 0.0, %v2973
      %v2975 = vpop.f32.mrf.mxu0
      %v2976 = vadd.f32 0.0, %v2975
      %2977 = vmatmul.bf16.gmra.mxu0 %v2947
      %v2978 = vpop.f32.mrf.mxu0
      %v2979 = vadd.f32 0.0, %v2978
      %v2980 = vpop.f32.mrf.mxu0
      %v2981 = vadd.f32 0.0, %v2980
      %2982 = vdwg.mxu0
      %v2983 = vadd.f32 %v2891, %v2959
      %v2984 = vadd.f32 %v2892, %v2961
      %v2985 = vadd.f32 %v2893, %v2964
      %v2986 = vadd.f32 %v2894, %v2966
      %v2987 = vadd.f32 %v2895, %v2969
      %v2988 = vadd.f32 %v2896, %v2971
      %v2989 = vadd.f32 %v2897, %v2974
      %v2990 = vadd.f32 %v2898, %v2976
      %v2991 = vadd.f32 %v2899, %v2979
      %v2992 = vadd.f32 %v2900, %v2981
      %v2993 = vld [vmem:[%s4] sm:$0x1]
      %v2995 = vperm.slane %v2993, 0
      %v2997 = vadd.f32 %v2983, %v2995
      %v2998 = vadd.f32 %v2984, %v2995
      %v2999 = vadd.f32 %v2985, %v2995
      %v3000 = vadd.f32 %v2986, %v2995
      %v3001 = vadd.f32 %v2987, %v2995
      %v3002 = vadd.f32 %v2988, %v2995
      %v3003 = vadd.f32 %v2989, %v2995
      %v3004 = vadd.f32 %v2990, %v2995
      %v3005 = vadd.f32 %v2991, %v2995
      %v3006 = vadd.f32 %v2992, %v2995
      %vm3007 = vcmp.ge.f32.partialorder %v2997, 0.0
      %vm3008 = vcmp.ge.f32.partialorder %v2998, 0.0
      %vm3009 = vcmp.ge.f32.partialorder %v2999, 0.0
      %vm3010 = vcmp.ge.f32.partialorder %v3000, 0.0
      %vm3011 = vcmp.ge.f32.partialorder %v3001, 0.0
      %vm3012 = vcmp.ge.f32.partialorder %v3002, 0.0
      %vm3013 = vcmp.ge.f32.partialorder %v3003, 0.0
      %vm3014 = vcmp.ge.f32.partialorder %v3004, 0.0
      %vm3015 = vcmp.ge.f32.partialorder %v3005, 0.0
      %vm3016 = vcmp.ge.f32.partialorder %v3006, 0.0
      %v3017 = vmul.f32 %v2997, 0.01
      %v3018 = vmul.f32 %v2998, 0.01
      %v3019 = vmul.f32 %v2999, 0.01
      %v3020 = vmul.f32 %v3000, 0.01
      %v3021 = vmul.f32 %v3001, 0.01
      %v3022 = vmul.f32 %v3002, 0.01
      %v3023 = vmul.f32 %v3003, 0.01
      %v3024 = vmul.f32 %v3004, 0.01
      %v3025 = vmul.f32 %v3005, 0.01
      %v3026 = vmul.f32 %v3006, 0.01
      %v3027 = vsel %vm3007, %v2997, %v3017
      %v3028 = vsel %vm3008, %v2998, %v3018
      %v3029 = vsel %vm3009, %v2999, %v3019
      %v3030 = vsel %vm3010, %v3000, %v3020
      %v3031 = vsel %vm3011, %v3001, %v3021
      %v3032 = vsel %vm3012, %v3002, %v3022
      %v3033 = vsel %vm3013, %v3003, %v3023
      %v3034 = vsel %vm3014, %v3004, %v3024
      %v3035 = vsel %vm3015, %v3005, %v3025
      %v3036 = vsel %vm3016, %v3006, %v3026
      %v3037 = vsel %vm1832, %v3027, 0.0
      %v3038 = vsel %vm1833, %v3028, 0.0
      %v3039 = vsel %vm1834, %v3029, 0.0
      %v3040 = vsel %vm1835, %v3030, 0.0
      %v3041 = vsel %vm1836, %v3031, 0.0
      %v3042 = vsel %vm1837, %v3032, 0.0
      %v3043 = vsel %vm1838, %v3033, 0.0
      %v3044 = vsel %vm1839, %v3034, 0.0
      %v3045 = vsel %vm1840, %v3035, 0.0
      %v3046 = vsel %vm1841, %v3036, 0.0
      %v3047 = vpack.c.bf16 %v3037, %v3037
      %v3048 = vpack.c.bf16 %v3038, %v3038
      %v3049 = vpack.c.bf16 %v3039, %v3039
      %v3050 = vpack.c.bf16 %v3040, %v3040
      %v3051 = vpack.c.bf16 %v3041, %v3041
      %v3052 = vpack.c.bf16 %v3042, %v3042
      %v3053 = vpack.c.bf16 %v3043, %v3043
      %v3054 = vpack.c.bf16 %v3044, %v3044
      %v3055 = vpack.c.bf16 %v3045, %v3045
      %v3056 = vpack.c.bf16 %v3046, %v3046
      %v3058 = vshrl.u32 %v3047, 16
      %v3060 = vrot.slane %v3058, 6
      %v3061 = vshll.u32 %v3047, 16
      %v3063 = vrot.slane %v3061, 7
      %v3064 = vor.u32 %v3060, %v3063
      %v3065 = vrot.slane %v3064, 4
      %v3067 = vshrl.u32 %v3048, 16
      %v3069 = vrot.slane %v3067, 6
      %v3070 = vshll.u32 %v3048, 16
      %v3072 = vrot.slane %v3070, 7
      %v3073 = vor.u32 %v3069, %v3072
      %v3074 = vsel %vm1863, %v3065, %v3073
      %v3075 = vrot.slane %v3073, 4
      %v3077 = vshrl.u32 %v3049, 16
      %v3079 = vrot.slane %v3077, 6
      %v3080 = vshll.u32 %v3049, 16
      %v3082 = vrot.slane %v3080, 7
      %v3083 = vor.u32 %v3079, %v3082
      %v3084 = vsel %vm1863, %v3075, %v3083
      %v3085 = vrot.slane %v3083, 4
      %v3087 = vshrl.u32 %v3050, 16
      %v3089 = vrot.slane %v3087, 6
      %v3090 = vshll.u32 %v3050, 16
      %v3092 = vrot.slane %v3090, 7
      %v3093 = vor.u32 %v3089, %v3092
      %v3094 = vsel %vm1863, %v3085, %v3093
      %v3095 = vrot.slane %v3093, 4
      %v3097 = vshrl.u32 %v3051, 16
      %v3099 = vrot.slane %v3097, 6
      %v3100 = vshll.u32 %v3051, 16
      %v3102 = vrot.slane %v3100, 7
      %v3103 = vor.u32 %v3099, %v3102
      %v3104 = vsel %vm1863, %v3095, %v3103
      %v3105 = vrot.slane %v3103, 4
      %v3107 = vshrl.u32 %v3052, 16
      %v3109 = vrot.slane %v3107, 6
      %v3110 = vshll.u32 %v3052, 16
      %v3112 = vrot.slane %v3110, 7
      %v3113 = vor.u32 %v3109, %v3112
      %v3114 = vsel %vm1863, %v3105, %v3113
      %v3115 = vrot.slane %v3113, 4
      %v3117 = vshrl.u32 %v3053, 16
      %v3119 = vrot.slane %v3117, 6
      %v3120 = vshll.u32 %v3053, 16
      %v3122 = vrot.slane %v3120, 7
      %v3123 = vor.u32 %v3119, %v3122
      %v3124 = vsel %vm1863, %v3115, %v3123
      %v3125 = vrot.slane %v3123, 4
      %v3127 = vshrl.u32 %v3054, 16
      %v3129 = vrot.slane %v3127, 6
      %v3130 = vshll.u32 %v3054, 16
      %v3132 = vrot.slane %v3130, 7
      %v3133 = vor.u32 %v3129, %v3132
      %v3134 = vsel %vm1863, %v3125, %v3133
      %v3135 = vrot.slane %v3133, 4
      %v3137 = vshrl.u32 %v3055, 16
      %v3139 = vrot.slane %v3137, 6
      %v3140 = vshll.u32 %v3055, 16
      %v3142 = vrot.slane %v3140, 7
      %v3143 = vor.u32 %v3139, %v3142
      %v3144 = vsel %vm1863, %v3135, %v3143
      %v3145 = vrot.slane %v3143, 4
      %v3147 = vshrl.u32 %v3056, 16
      %v3149 = vrot.slane %v3147, 6
      %v3150 = vshll.u32 %v3056, 16
      %v3152 = vrot.slane %v3150, 7
      %v3153 = vor.u32 %v3149, %v3152
      %v3154 = vsel %vm1863, %v3145, %v3153
      %v3155 = vrot.slane %v3153, 4
      %v3167 = vld [vmem:[#allocation3 + $0x4] sm:$0xe]
      %v3168 = vsel %vm342, %v3064, %v3167
      %3169 = vst [vmem:[#allocation3 + $0x4] sm:$0xe] %v3168
      %3170 = vst.msk [vmem:[#allocation3 + $0x8] sm:$0xf] %vm332, %v3074
      %3171 = vst.msk [vmem:[#allocation3 + $0xc] sm:$0xf] %vm332, %v3084
      %3172 = vst.msk [vmem:[#allocation3 + $0x10] sm:$0xf] %vm332, %v3094
      %3173 = vst.msk [vmem:[#allocation3 + $0x14] sm:$0xf] %vm332, %v3104
      %3174 = vst.msk [vmem:[#allocation3 + $0x18] sm:$0xf] %vm332, %v3114
      %3175 = vst.msk [vmem:[#allocation3 + $0x1c] sm:$0xf] %vm332, %v3124
      %3176 = vst.msk [vmem:[#allocation3 + $0x20] sm:$0xf] %vm332, %v3134
      %3177 = vst.msk [vmem:[#allocation3 + $0x24] sm:$0xf] %vm332, %v3144
      %3178 = vst.msk [vmem:[#allocation3 + $0x28] sm:$0xf] %vm332, %v3154
      %v3179 = vld [vmem:[#allocation3 + $0x2c] sm:$0x3]
      %v3180 = vsel %vm336, %v3155, %v3179
      %3181 = vst [vmem:[#allocation3 + $0x2c] sm:$0x3] %v3180
      %v3182 = vld [vmem:[#allocation3] sm:$0xf]
      %v3183 = vld [vmem:[#allocation3 + $0x4] sm:$0xf]
      %v3184 = vld [vmem:[#allocation3 + $0x8] sm:$0xf]
      %v3185 = vld [vmem:[#allocation3 + $0xc] sm:$0xf]
      %v3186 = vld [vmem:[#allocation3 + $0x10] sm:$0xf]
      %v3187 = vld [vmem:[#allocation3 + $0x14] sm:$0xf]
      %v3188 = vld [vmem:[#allocation3 + $0x18] sm:$0xf]
      %v3189 = vld [vmem:[#allocation3 + $0x1c] sm:$0xf]
      %v3190 = vld [vmem:[#allocation3 + $0x20] sm:$0xf]
      %v3191 = vld [vmem:[#allocation3 + $0x24] sm:$0xf]
      %v3192 = vld [vmem:[%s5] sm:$0xf]
      %v3193 = vld [vmem:[%s5 + $0x4] sm:$0xf]
      %v3194 = vld [vmem:[%s5 + $0x8] sm:$0xf]
      %v3195 = vld [vmem:[%s5 + $0xc] sm:$0xf]
      %v3196 = vld [vmem:[#allocation3 + $0x28] sm:$0x1]
      %s3197 = scalar_lea.vmem %s5, 16
      %v3198 = vld [vmem:[%s3197] sm:$0xf]
      %v3199 = vld [vmem:[%s3197 + $0x4] sm:$0xf]
      %v3200 = vld [vmem:[%s3197 + $0x8] sm:$0xf]
      %v3201 = vld [vmem:[%s3197 + $0xc] sm:$0xf]
      %v3213 = vunpack.c.l.b16 %v3182
      %v3214 = vunpack.c.l.b16 %v3183
      %v3215 = vunpack.c.l.b16 %v3184
      %v3216 = vunpack.c.l.b16 %v3185
      %v3217 = vunpack.c.l.b16 %v3186
      %v3218 = vunpack.c.l.b16 %v3187
      %v3219 = vunpack.c.l.b16 %v3188
      %v3220 = vunpack.c.l.b16 %v3189
      %v3221 = vunpack.c.l.b16 %v3190
      %v3222 = vunpack.c.l.b16 %v3191
      %v3223 = vunpack.c.l.b16 %v3196
      %v3224 = vpack.c.b16 %v3214, %v3213
      %v3225 = vpack.c.b16 %v3216, %v3215
      %v3226 = vpack.c.b16 %v3218, %v3217
      %v3227 = vpack.c.b16 %v3220, %v3219
      %v3228 = vpack.c.b16 %v3222, %v3221
      %v3229 = vpack.c.b16 %v3223, %v3223
      %v3231 = vshrl.u32 %v3224, 16
      %v3233 = vshll.u32 %v3224, 16
      %v3235 = vrot.slane %v3233, 1
      %v3236 = vor.u32 %v3231, %v3235
      %v3238 = vshll.u32 %v3225, 16
      %v3240 = vrot.slane %v3238, 1
      %v3241 = vsel %vm946, %v3236, %v3240
      %v3242 = vshrl.u32 %v3225, 16
      %v3244 = vor.u32 %v3242, %v3240
      %v3246 = vshll.u32 %v3226, 16
      %v3248 = vrot.slane %v3246, 1
      %v3249 = vsel %vm946, %v3244, %v3248
      %v3250 = vshrl.u32 %v3226, 16
      %v3252 = vor.u32 %v3250, %v3248
      %v3254 = vshll.u32 %v3227, 16
      %v3256 = vrot.slane %v3254, 1
      %v3257 = vsel %vm946, %v3252, %v3256
      %v3258 = vshrl.u32 %v3227, 16
      %v3260 = vor.u32 %v3258, %v3256
      %v3262 = vshll.u32 %v3228, 16
      %v3264 = vrot.slane %v3262, 1
      %v3265 = vsel %vm946, %v3260, %v3264
      %v3266 = vshrl.u32 %v3228, 16
      %v3268 = vor.u32 %v3266, %v3264
      %v3270 = vshll.u32 %v3229, 16
      %v3272 = vrot.slane %v3270, 1
      %v3273 = vsel %vm946, %v3268, %v3272
      %v3278 = vunpack.c.l.b16 %v3198
      %v3279 = vunpack.c.l.b16 %v3199
      %v3280 = vunpack.c.l.b16 %v3200
      %v3281 = vunpack.c.l.b16 %v3201
      %v3282 = vpack.c.b16 %v3279, %v3278
      %v3283 = vpack.c.b16 %v3281, %v3280
      %v3287 = vsel %vm2093, %v3241, 0
      %v3290 = vsel %vm2093, %v3249, 0
      %v3293 = vsel %vm2093, %v3257, 0
      %v3296 = vsel %vm2093, %v3265, 0
      %v3299 = vsel %vm2093, %v3273, 0
      %3301 = vmatpush.bf16.msra.mxu0 0
      %3302 = vmatpush.bf16.msra.mxu0 0
      %3303 = vmatpush.bf16.msra.mxu0 0
      %3304 = vmatpush.bf16.msra.mxu0 0
      %3305 = vmatpush.bf16.msra.mxu0 0
      %3306 = vmatpush.bf16.msra.mxu0 0
      %3307 = vmatpush.bf16.msra.mxu0 %v3283
      %3308 = vmatpush.bf16.msra.mxu0 %v3282
      %3309 = vmatmul.bf16.gmra.mxu0 %v3287
      %v3310 = vpop.f32.mrf.mxu0
      %v3311 = vadd.f32 0.0, %v3310
      %v3312 = vpop.f32.mrf.mxu0
      %v3313 = vadd.f32 0.0, %v3312
      %3314 = vmatmul.bf16.gmra.mxu0 %v3290
      %v3315 = vpop.f32.mrf.mxu0
      %v3316 = vadd.f32 0.0, %v3315
      %v3317 = vpop.f32.mrf.mxu0
      %v3318 = vadd.f32 0.0, %v3317
      %3319 = vmatmul.bf16.gmra.mxu0 %v3293
      %v3320 = vpop.f32.mrf.mxu0
      %v3321 = vadd.f32 0.0, %v3320
      %v3322 = vpop.f32.mrf.mxu0
      %v3323 = vadd.f32 0.0, %v3322
      %3324 = vmatmul.bf16.gmra.mxu0 %v3296
      %v3325 = vpop.f32.mrf.mxu0
      %v3326 = vadd.f32 0.0, %v3325
      %v3327 = vpop.f32.mrf.mxu0
      %v3328 = vadd.f32 0.0, %v3327
      %3329 = vmatmul.bf16.gmra.mxu0 %v3299
      %v3330 = vpop.f32.mrf.mxu0
      %v3331 = vadd.f32 0.0, %v3330
      %v3332 = vpop.f32.mrf.mxu0
      %v3333 = vadd.f32 0.0, %v3332
      %3334 = vdwg.mxu0
      %v3339 = vunpack.c.l.b16 %v3192
      %v3340 = vunpack.c.l.b16 %v3193
      %v3341 = vunpack.c.l.b16 %v3194
      %v3342 = vunpack.c.l.b16 %v3195
      %v3343 = vpack.c.b16 %v3340, %v3339
      %v3344 = vpack.c.b16 %v3342, %v3341
      %v3347 = vsel %vm2093, %v3224, 0
      %v3349 = vsel %vm2093, %v3225, 0
      %v3351 = vsel %vm2093, %v3226, 0
      %v3353 = vsel %vm2093, %v3227, 0
      %v3355 = vsel %vm2093, %v3228, 0
      %3357 = vmatpush.bf16.msra.mxu0 0
      %3358 = vmatpush.bf16.msra.mxu0 0
      %3359 = vmatpush.bf16.msra.mxu0 0
      %3360 = vmatpush.bf16.msra.mxu0 0
      %3361 = vmatpush.bf16.msra.mxu0 0
      %3362 = vmatpush.bf16.msra.mxu0 0
      %3363 = vmatpush.bf16.msra.mxu0 %v3344
      %3364 = vmatpush.bf16.msra.mxu0 %v3343
      %3365 = vmatmul.bf16.gmra.mxu0 %v3347
      %v3366 = vpop.f32.mrf.mxu0
      %v3367 = vadd.f32 %v3311, %v3366
      %v3368 = vpop.f32.mrf.mxu0
      %v3369 = vadd.f32 %v3313, %v3368
      %3370 = vmatmul.bf16.gmra.mxu0 %v3349
      %v3371 = vpop.f32.mrf.mxu0
      %v3372 = vadd.f32 %v3316, %v3371
      %v3373 = vpop.f32.mrf.mxu0
      %v3374 = vadd.f32 %v3318, %v3373
      %3375 = vmatmul.bf16.gmra.mxu0 %v3351
      %v3376 = vpop.f32.mrf.mxu0
      %v3377 = vadd.f32 %v3321, %v3376
      %v3378 = vpop.f32.mrf.mxu0
      %v3379 = vadd.f32 %v3323, %v3378
      %3380 = vmatmul.bf16.gmra.mxu0 %v3353
      %v3381 = vpop.f32.mrf.mxu0
      %v3382 = vadd.f32 %v3326, %v3381
      %v3383 = vpop.f32.mrf.mxu0
      %v3384 = vadd.f32 %v3328, %v3383
      %3385 = vmatmul.bf16.gmra.mxu0 %v3355
      %v3386 = vpop.f32.mrf.mxu0
      %v3387 = vadd.f32 %v3331, %v3386
      %v3388 = vpop.f32.mrf.mxu0
      %v3389 = vadd.f32 %v3333, %v3388
      %3390 = vdwg.mxu0
      %v3391 = vld [vmem:[#allocation3] sm:$0xe]
      %s3392 = scalar_lea.vmem %s5, 32
      %v3393 = vld [vmem:[%s3392] sm:$0xf]
      %v3394 = vld [vmem:[%s3392 + $0x4] sm:$0xf]
      %v3395 = vld [vmem:[%s3392 + $0x8] sm:$0xf]
      %v3396 = vld [vmem:[%s3392 + $0xc] sm:$0xf]
      %v3398 = vunpack.c.l.b16 %v3391
      %v3399 = vpack.c.b16 %v3214, %v3398
      %v3400 = vrot.slane %v3399, 1
      %v3401 = vrot.slane %v3225, 1
      %v3402 = vsel %vm1457, %v3400, %v3401
      %v3403 = vrot.slane %v3226, 1
      %v3404 = vsel %vm1457, %v3401, %v3403
      %v3405 = vrot.slane %v3227, 1
      %v3406 = vsel %vm1457, %v3403, %v3405
      %v3407 = vrot.slane %v3228, 1
      %v3408 = vsel %vm1457, %v3405, %v3407
      %v3409 = vrot.slane %v3229, 1
      %v3410 = vsel %vm1457, %v3407, %v3409
      %v3415 = vunpack.c.l.b16 %v3393
      %v3416 = vunpack.c.l.b16 %v3394
      %v3417 = vunpack.c.l.b16 %v3395
      %v3418 = vunpack.c.l.b16 %v3396
      %v3419 = vpack.c.b16 %v3416, %v3415
      %v3420 = vpack.c.b16 %v3418, %v3417
      %v3424 = vsel %vm2093, %v3402, 0
      %v3427 = vsel %vm2093, %v3404, 0
      %v3430 = vsel %vm2093, %v3406, 0
      %v3433 = vsel %vm2093, %v3408, 0
      %v3436 = vsel %vm2093, %v3410, 0
      %3438 = vmatpush.bf16.msra.mxu0 0
      %3439 = vmatpush.bf16.msra.mxu0 0
      %3440 = vmatpush.bf16.msra.mxu0 0
      %3441 = vmatpush.bf16.msra.mxu0 0
      %3442 = vmatpush.bf16.msra.mxu0 0
      %3443 = vmatpush.bf16.msra.mxu0 0
      %3444 = vmatpush.bf16.msra.mxu0 %v3420
      %3445 = vmatpush.bf16.msra.mxu0 %v3419
      %3446 = vmatmul.bf16.gmra.mxu0 %v3424
      %v3447 = vpop.f32.mrf.mxu0
      %v3448 = vadd.f32 0.0, %v3447
      %v3449 = vpop.f32.mrf.mxu0
      %v3450 = vadd.f32 0.0, %v3449
      %3451 = vmatmul.bf16.gmra.mxu0 %v3427
      %v3452 = vpop.f32.mrf.mxu0
      %v3453 = vadd.f32 0.0, %v3452
      %v3454 = vpop.f32.mrf.mxu0
      %v3455 = vadd.f32 0.0, %v3454
      %3456 = vmatmul.bf16.gmra.mxu0 %v3430
      %v3457 = vpop.f32.mrf.mxu0
      %v3458 = vadd.f32 0.0, %v3457
      %v3459 = vpop.f32.mrf.mxu0
      %v3460 = vadd.f32 0.0, %v3459
      %3461 = vmatmul.bf16.gmra.mxu0 %v3433
      %v3462 = vpop.f32.mrf.mxu0
      %v3463 = vadd.f32 0.0, %v3462
      %v3464 = vpop.f32.mrf.mxu0
      %v3465 = vadd.f32 0.0, %v3464
      %3466 = vmatmul.bf16.gmra.mxu0 %v3436
      %v3467 = vpop.f32.mrf.mxu0
      %v3468 = vadd.f32 0.0, %v3467
      %v3469 = vpop.f32.mrf.mxu0
      %v3470 = vadd.f32 0.0, %v3469
      %3471 = vdwg.mxu0
      %v3472 = vadd.f32 %v3367, %v3448
      %v3473 = vadd.f32 %v3369, %v3450
      %v3474 = vadd.f32 %v3372, %v3453
      %v3475 = vadd.f32 %v3374, %v3455
      %v3476 = vadd.f32 %v3377, %v3458
      %v3477 = vadd.f32 %v3379, %v3460
      %v3478 = vadd.f32 %v3382, %v3463
      %v3479 = vadd.f32 %v3384, %v3465
      %v3480 = vadd.f32 %v3387, %v3468
      %v3481 = vadd.f32 %v3389, %v3470
      %v3482 = vld [vmem:[#allocation3 + $0x4] sm:$0xe]
      %v3483 = vld [vmem:[#allocation3 + $0x8] sm:$0xf]
      %v3484 = vld [vmem:[#allocation3 + $0xc] sm:$0xf]
      %v3485 = vld [vmem:[#allocation3 + $0x10] sm:$0xf]
      %v3486 = vld [vmem:[#allocation3 + $0x14] sm:$0xf]
      %v3487 = vld [vmem:[#allocation3 + $0x18] sm:$0xf]
      %v3488 = vld [vmem:[#allocation3 + $0x1c] sm:$0xf]
      %v3489 = vld [vmem:[#allocation3 + $0x20] sm:$0xf]
      %v3490 = vld [vmem:[#allocation3 + $0x24] sm:$0xf]
      %v3491 = vld [vmem:[#allocation3 + $0x28] sm:$0xf]
      %v3492 = vld [vmem:[#allocation3 + $0x2c] sm:$0x1]
      %s3493 = scalar_lea.vmem %s5, 48
      %v3494 = vld [vmem:[%s3493] sm:$0xf]
      %v3495 = vld [vmem:[%s3493 + $0x4] sm:$0xf]
      %v3496 = vld [vmem:[%s3493 + $0x8] sm:$0xf]
      %v3497 = vld [vmem:[%s3493 + $0xc] sm:$0xf]
      %v3509 = vunpack.c.l.b16 %v3482
      %v3510 = vunpack.c.l.b16 %v3483
      %v3511 = vunpack.c.l.b16 %v3484
      %v3512 = vunpack.c.l.b16 %v3485
      %v3513 = vunpack.c.l.b16 %v3486
      %v3514 = vunpack.c.l.b16 %v3487
      %v3515 = vunpack.c.l.b16 %v3488
      %v3516 = vunpack.c.l.b16 %v3489
      %v3517 = vunpack.c.l.b16 %v3490
      %v3518 = vunpack.c.l.b16 %v3491
      %v3519 = vunpack.c.l.b16 %v3492
      %v3520 = vpack.c.b16 %v3510, %v3509
      %v3521 = vpack.c.b16 %v3512, %v3511
      %v3522 = vpack.c.b16 %v3514, %v3513
      %v3523 = vpack.c.b16 %v3516, %v3515
      %v3524 = vpack.c.b16 %v3518, %v3517
      %v3525 = vpack.c.b16 %v3519, %v3519
      %v3526 = vrot.slane %v3520, 1
      %v3527 = vrot.slane %v3521, 1
      %v3528 = vsel %vm1457, %v3526, %v3527
      %v3529 = vrot.slane %v3522, 1
      %v3530 = vsel %vm1457, %v3527, %v3529
      %v3531 = vrot.slane %v3523, 1
      %v3532 = vsel %vm1457, %v3529, %v3531
      %v3533 = vrot.slane %v3524, 1
      %v3534 = vsel %vm1457, %v3531, %v3533
      %v3535 = vrot.slane %v3525, 1
      %v3536 = vsel %vm1457, %v3533, %v3535
      %v3541 = vunpack.c.l.b16 %v3494
      %v3542 = vunpack.c.l.b16 %v3495
      %v3543 = vunpack.c.l.b16 %v3496
      %v3544 = vunpack.c.l.b16 %v3497
      %v3545 = vpack.c.b16 %v3542, %v3541
      %v3546 = vpack.c.b16 %v3544, %v3543
      %v3550 = vsel %vm2093, %v3528, 0
      %v3553 = vsel %vm2093, %v3530, 0
      %v3556 = vsel %vm2093, %v3532, 0
      %v3559 = vsel %vm2093, %v3534, 0
      %v3562 = vsel %vm2093, %v3536, 0
      %3564 = vmatpush.bf16.msra.mxu0 0
      %3565 = vmatpush.bf16.msra.mxu0 0
      %3566 = vmatpush.bf16.msra.mxu0 0
      %3567 = vmatpush.bf16.msra.mxu0 0
      %3568 = vmatpush.bf16.msra.mxu0 0
      %3569 = vmatpush.bf16.msra.mxu0 0
      %3570 = vmatpush.bf16.msra.mxu0 %v3546
      %3571 = vmatpush.bf16.msra.mxu0 %v3545
      %3572 = vmatmul.bf16.gmra.mxu0 %v3550
      %v3573 = vpop.f32.mrf.mxu0
      %v3574 = vadd.f32 0.0, %v3573
      %v3575 = vpop.f32.mrf.mxu0
      %v3576 = vadd.f32 0.0, %v3575
      %3577 = vmatmul.bf16.gmra.mxu0 %v3553
      %v3578 = vpop.f32.mrf.mxu0
      %v3579 = vadd.f32 0.0, %v3578
      %v3580 = vpop.f32.mrf.mxu0
      %v3581 = vadd.f32 0.0, %v3580
      %3582 = vmatmul.bf16.gmra.mxu0 %v3556
      %v3583 = vpop.f32.mrf.mxu0
      %v3584 = vadd.f32 0.0, %v3583
      %v3585 = vpop.f32.mrf.mxu0
      %v3586 = vadd.f32 0.0, %v3585
      %3587 = vmatmul.bf16.gmra.mxu0 %v3559
      %v3588 = vpop.f32.mrf.mxu0
      %v3589 = vadd.f32 0.0, %v3588
      %v3590 = vpop.f32.mrf.mxu0
      %v3591 = vadd.f32 0.0, %v3590
      %3592 = vmatmul.bf16.gmra.mxu0 %v3562
      %v3593 = vpop.f32.mrf.mxu0
      %v3594 = vadd.f32 0.0, %v3593
      %v3595 = vpop.f32.mrf.mxu0
      %v3596 = vadd.f32 0.0, %v3595
      %3597 = vdwg.mxu0
      %v3598 = vadd.f32 %v3472, %v3574
      %v3599 = vadd.f32 %v3473, %v3576
      %v3600 = vadd.f32 %v3474, %v3579
      %v3601 = vadd.f32 %v3475, %v3581
      %v3602 = vadd.f32 %v3476, %v3584
      %v3603 = vadd.f32 %v3477, %v3586
      %v3604 = vadd.f32 %v3478, %v3589
      %v3605 = vadd.f32 %v3479, %v3591
      %v3606 = vadd.f32 %v3480, %v3594
      %v3607 = vadd.f32 %v3481, %v3596
      %v3608 = vld [vmem:[#allocation3 + $0x2c] sm:$0x3]
      %s3609 = scalar_lea.vmem %s5, 64
      %v3610 = vld [vmem:[%s3609] sm:$0xf]
      %v3611 = vld [vmem:[%s3609 + $0x4] sm:$0xf]
      %v3612 = vld [vmem:[%s3609 + $0x8] sm:$0xf]
      %v3613 = vld [vmem:[%s3609 + $0xc] sm:$0xf]
      %v3615 = vunpack.c.l.b16 %v3608
      %v3616 = vpack.c.b16 %v3615, %v3615
      %v3618 = vshrl.u32 %v3520, 16
      %v3620 = vrot.slane %v3618, 1
      %v3621 = vshll.u32 %v3520, 16
      %v3623 = vrot.slane %v3621, 2
      %v3624 = vor.u32 %v3620, %v3623
      %v3626 = vshrl.u32 %v3521, 16
      %v3628 = vrot.slane %v3626, 1
      %v3629 = vshll.u32 %v3521, 16
      %v3631 = vrot.slane %v3629, 2
      %v3632 = vor.u32 %v3628, %v3631
      %v3633 = vsel %vm1659, %v3624, %v3632
      %v3635 = vshrl.u32 %v3522, 16
      %v3637 = vrot.slane %v3635, 1
      %v3638 = vshll.u32 %v3522, 16
      %v3640 = vrot.slane %v3638, 2
      %v3641 = vor.u32 %v3637, %v3640
      %v3642 = vsel %vm1659, %v3632, %v3641
      %v3644 = vshrl.u32 %v3523, 16
      %v3646 = vrot.slane %v3644, 1
      %v3647 = vshll.u32 %v3523, 16
      %v3649 = vrot.slane %v3647, 2
      %v3650 = vor.u32 %v3646, %v3649
      %v3651 = vsel %vm1659, %v3641, %v3650
      %v3653 = vshrl.u32 %v3524, 16
      %v3655 = vrot.slane %v3653, 1
      %v3656 = vshll.u32 %v3524, 16
      %v3658 = vrot.slane %v3656, 2
      %v3659 = vor.u32 %v3655, %v3658
      %v3660 = vsel %vm1659, %v3650, %v3659
      %v3662 = vshrl.u32 %v3616, 16
      %v3664 = vrot.slane %v3662, 1
      %v3665 = vshll.u32 %v3616, 16
      %v3667 = vrot.slane %v3665, 2
      %v3668 = vor.u32 %v3664, %v3667
      %v3669 = vsel %vm1659, %v3659, %v3668
      %v3674 = vunpack.c.l.b16 %v3610
      %v3675 = vunpack.c.l.b16 %v3611
      %v3676 = vunpack.c.l.b16 %v3612
      %v3677 = vunpack.c.l.b16 %v3613
      %v3678 = vpack.c.b16 %v3675, %v3674
      %v3679 = vpack.c.b16 %v3677, %v3676
      %v3683 = vsel %vm2093, %v3633, 0
      %v3686 = vsel %vm2093, %v3642, 0
      %v3689 = vsel %vm2093, %v3651, 0
      %v3692 = vsel %vm2093, %v3660, 0
      %v3695 = vsel %vm2093, %v3669, 0
      %3697 = vmatpush.bf16.msra.mxu0 0
      %3698 = vmatpush.bf16.msra.mxu0 0
      %3699 = vmatpush.bf16.msra.mxu0 0
      %3700 = vmatpush.bf16.msra.mxu0 0
      %3701 = vmatpush.bf16.msra.mxu0 0
      %3702 = vmatpush.bf16.msra.mxu0 0
      %3703 = vmatpush.bf16.msra.mxu0 %v3679
      %3704 = vmatpush.bf16.msra.mxu0 %v3678
      %3705 = vmatmul.bf16.gmra.mxu0 %v3683
      %v3706 = vpop.f32.mrf.mxu0
      %v3707 = vadd.f32 0.0, %v3706
      %v3708 = vpop.f32.mrf.mxu0
      %v3709 = vadd.f32 0.0, %v3708
      %3710 = vmatmul.bf16.gmra.mxu0 %v3686
      %v3711 = vpop.f32.mrf.mxu0
      %v3712 = vadd.f32 0.0, %v3711
      %v3713 = vpop.f32.mrf.mxu0
      %v3714 = vadd.f32 0.0, %v3713
      %3715 = vmatmul.bf16.gmra.mxu0 %v3689
      %v3716 = vpop.f32.mrf.mxu0
      %v3717 = vadd.f32 0.0, %v3716
      %v3718 = vpop.f32.mrf.mxu0
      %v3719 = vadd.f32 0.0, %v3718
      %3720 = vmatmul.bf16.gmra.mxu0 %v3692
      %v3721 = vpop.f32.mrf.mxu0
      %v3722 = vadd.f32 0.0, %v3721
      %v3723 = vpop.f32.mrf.mxu0
      %v3724 = vadd.f32 0.0, %v3723
      %3725 = vmatmul.bf16.gmra.mxu0 %v3695
      %v3726 = vpop.f32.mrf.mxu0
      %v3727 = vadd.f32 0.0, %v3726
      %v3728 = vpop.f32.mrf.mxu0
      %v3729 = vadd.f32 0.0, %v3728
      %3730 = vdwg.mxu0
      %v3731 = vadd.f32 %v3598, %v3707
      %v3732 = vadd.f32 %v3599, %v3709
      %v3733 = vadd.f32 %v3600, %v3712
      %v3734 = vadd.f32 %v3601, %v3714
      %v3735 = vadd.f32 %v3602, %v3717
      %v3736 = vadd.f32 %v3603, %v3719
      %v3737 = vadd.f32 %v3604, %v3722
      %v3738 = vadd.f32 %v3605, %v3724
      %v3739 = vadd.f32 %v3606, %v3727
      %v3740 = vadd.f32 %v3607, %v3729
      %v3741 = vld [vmem:[#allocation3 + $0x4] sm:$0xc]
      %s3742 = scalar_lea.vmem %s5, 80
      %v3743 = vld [vmem:[%s3742] sm:$0xf]
      %v3744 = vld [vmem:[%s3742 + $0x4] sm:$0xf]
      %v3745 = vld [vmem:[%s3742 + $0x8] sm:$0xf]
      %v3746 = vld [vmem:[%s3742 + $0xc] sm:$0xf]
      %v3748 = vunpack.c.l.b16 %v3741
      %v3749 = vpack.c.b16 %v3510, %v3748
      %v3750 = vrot.slane %v3749, 2
      %v3751 = vrot.slane %v3521, 2
      %v3752 = vsel %vm2558, %v3750, %v3751
      %v3753 = vrot.slane %v3522, 2
      %v3754 = vsel %vm2558, %v3751, %v3753
      %v3755 = vrot.slane %v3523, 2
      %v3756 = vsel %vm2558, %v3753, %v3755
      %v3757 = vrot.slane %v3524, 2
      %v3758 = vsel %vm2558, %v3755, %v3757
      %v3759 = vrot.slane %v3616, 2
      %v3760 = vsel %vm2558, %v3757, %v3759
      %v3765 = vunpack.c.l.b16 %v3743
      %v3766 = vunpack.c.l.b16 %v3744
      %v3767 = vunpack.c.l.b16 %v3745
      %v3768 = vunpack.c.l.b16 %v3746
      %v3769 = vpack.c.b16 %v3766, %v3765
      %v3770 = vpack.c.b16 %v3768, %v3767
      %v3774 = vsel %vm2093, %v3752, 0
      %v3777 = vsel %vm2093, %v3754, 0
      %v3780 = vsel %vm2093, %v3756, 0
      %v3783 = vsel %vm2093, %v3758, 0
      %v3786 = vsel %vm2093, %v3760, 0
      %3788 = vmatpush.bf16.msra.mxu0 0
      %3789 = vmatpush.bf16.msra.mxu0 0
      %3790 = vmatpush.bf16.msra.mxu0 0
      %3791 = vmatpush.bf16.msra.mxu0 0
      %3792 = vmatpush.bf16.msra.mxu0 0
      %3793 = vmatpush.bf16.msra.mxu0 0
      %3794 = vmatpush.bf16.msra.mxu0 %v3770
      %3795 = vmatpush.bf16.msra.mxu0 %v3769
      %3796 = vmatmul.bf16.gmra.mxu0 %v3774
      %v3797 = vpop.f32.mrf.mxu0
      %v3798 = vadd.f32 0.0, %v3797
      %v3799 = vpop.f32.mrf.mxu0
      %v3800 = vadd.f32 0.0, %v3799
      %3801 = vmatmul.bf16.gmra.mxu0 %v3777
      %v3802 = vpop.f32.mrf.mxu0
      %v3803 = vadd.f32 0.0, %v3802
      %v3804 = vpop.f32.mrf.mxu0
      %v3805 = vadd.f32 0.0, %v3804
      %3806 = vmatmul.bf16.gmra.mxu0 %v3780
      %v3807 = vpop.f32.mrf.mxu0
      %v3808 = vadd.f32 0.0, %v3807
      %v3809 = vpop.f32.mrf.mxu0
      %v3810 = vadd.f32 0.0, %v3809
      %3811 = vmatmul.bf16.gmra.mxu0 %v3783
      %v3812 = vpop.f32.mrf.mxu0
      %v3813 = vadd.f32 0.0, %v3812
      %v3814 = vpop.f32.mrf.mxu0
      %v3815 = vadd.f32 0.0, %v3814
      %3816 = vmatmul.bf16.gmra.mxu0 %v3786
      %v3817 = vpop.f32.mrf.mxu0
      %v3818 = vadd.f32 0.0, %v3817
      %v3819 = vpop.f32.mrf.mxu0
      %v3820 = vadd.f32 0.0, %v3819
      %3821 = vdwg.mxu0
      %v3822 = vadd.f32 %v3731, %v3798
      %v3823 = vadd.f32 %v3732, %v3800
      %v3824 = vadd.f32 %v3733, %v3803
      %v3825 = vadd.f32 %v3734, %v3805
      %v3826 = vadd.f32 %v3735, %v3808
      %v3827 = vadd.f32 %v3736, %v3810
      %v3828 = vadd.f32 %v3737, %v3813
      %v3829 = vadd.f32 %v3738, %v3815
      %v3830 = vadd.f32 %v3739, %v3818
      %v3831 = vadd.f32 %v3740, %v3820
      %v3832 = vld [vmem:[#allocation3 + $0x8] sm:$0xc]
      %v3833 = vld [vmem:[#allocation3 + $0xc] sm:$0xf]
      %v3834 = vld [vmem:[#allocation3 + $0x10] sm:$0xf]
      %v3835 = vld [vmem:[#allocation3 + $0x14] sm:$0xf]
      %v3836 = vld [vmem:[#allocation3 + $0x18] sm:$0xf]
      %v3837 = vld [vmem:[#allocation3 + $0x1c] sm:$0xf]
      %v3838 = vld [vmem:[#allocation3 + $0x20] sm:$0xf]
      %v3839 = vld [vmem:[#allocation3 + $0x24] sm:$0xf]
      %v3840 = vld [vmem:[#allocation3 + $0x28] sm:$0xf]
      %v3841 = vld [vmem:[#allocation3 + $0x2c] sm:$0xf]
      %v3842 = vld [vmem:[#allocation3 + $0x30] sm:$0x3]
      %s3843 = scalar_lea.vmem %s5, 96
      %v3844 = vld [vmem:[%s3843] sm:$0xf]
      %v3845 = vld [vmem:[%s3843 + $0x4] sm:$0xf]
      %v3846 = vld [vmem:[%s3843 + $0x8] sm:$0xf]
      %v3847 = vld [vmem:[%s3843 + $0xc] sm:$0xf]
      %v3859 = vunpack.c.l.b16 %v3832
      %v3860 = vunpack.c.l.b16 %v3833
      %v3861 = vunpack.c.l.b16 %v3834
      %v3862 = vunpack.c.l.b16 %v3835
      %v3863 = vunpack.c.l.b16 %v3836
      %v3864 = vunpack.c.l.b16 %v3837
      %v3865 = vunpack.c.l.b16 %v3838
      %v3866 = vunpack.c.l.b16 %v3839
      %v3867 = vunpack.c.l.b16 %v3840
      %v3868 = vunpack.c.l.b16 %v3841
      %v3869 = vunpack.c.l.b16 %v3842
      %v3870 = vpack.c.b16 %v3860, %v3859
      %v3871 = vpack.c.b16 %v3862, %v3861
      %v3872 = vpack.c.b16 %v3864, %v3863
      %v3873 = vpack.c.b16 %v3866, %v3865
      %v3874 = vpack.c.b16 %v3868, %v3867
      %v3875 = vpack.c.b16 %v3869, %v3869
      %v3876 = vrot.slane %v3870, 2
      %v3877 = vrot.slane %v3871, 2
      %v3878 = vsel %vm2558, %v3876, %v3877
      %v3879 = vrot.slane %v3872, 2
      %v3880 = vsel %vm2558, %v3877, %v3879
      %v3881 = vrot.slane %v3873, 2
      %v3882 = vsel %vm2558, %v3879, %v3881
      %v3883 = vrot.slane %v3874, 2
      %v3884 = vsel %vm2558, %v3881, %v3883
      %v3885 = vrot.slane %v3875, 2
      %v3886 = vsel %vm2558, %v3883, %v3885
      %v3891 = vunpack.c.l.b16 %v3844
      %v3892 = vunpack.c.l.b16 %v3845
      %v3893 = vunpack.c.l.b16 %v3846
      %v3894 = vunpack.c.l.b16 %v3847
      %v3895 = vpack.c.b16 %v3892, %v3891
      %v3896 = vpack.c.b16 %v3894, %v3893
      %v3900 = vsel %vm2093, %v3878, 0
      %v3903 = vsel %vm2093, %v3880, 0
      %v3906 = vsel %vm2093, %v3882, 0
      %v3909 = vsel %vm2093, %v3884, 0
      %v3912 = vsel %vm2093, %v3886, 0
      %3914 = vmatpush.bf16.msra.mxu0 0
      %3915 = vmatpush.bf16.msra.mxu0 0
      %3916 = vmatpush.bf16.msra.mxu0 0
      %3917 = vmatpush.bf16.msra.mxu0 0
      %3918 = vmatpush.bf16.msra.mxu0 0
      %3919 = vmatpush.bf16.msra.mxu0 0
      %3920 = vmatpush.bf16.msra.mxu0 %v3896
      %3921 = vmatpush.bf16.msra.mxu0 %v3895
      %3922 = vmatmul.bf16.gmra.mxu0 %v3900
      %v3923 = vpop.f32.mrf.mxu0
      %v3924 = vadd.f32 0.0, %v3923
      %v3925 = vpop.f32.mrf.mxu0
      %v3926 = vadd.f32 0.0, %v3925
      %3927 = vmatmul.bf16.gmra.mxu0 %v3903
      %v3928 = vpop.f32.mrf.mxu0
      %v3929 = vadd.f32 0.0, %v3928
      %v3930 = vpop.f32.mrf.mxu0
      %v3931 = vadd.f32 0.0, %v3930
      %3932 = vmatmul.bf16.gmra.mxu0 %v3906
      %v3933 = vpop.f32.mrf.mxu0
      %v3934 = vadd.f32 0.0, %v3933
      %v3935 = vpop.f32.mrf.mxu0
      %v3936 = vadd.f32 0.0, %v3935
      %3937 = vmatmul.bf16.gmra.mxu0 %v3909
      %v3938 = vpop.f32.mrf.mxu0
      %v3939 = vadd.f32 0.0, %v3938
      %v3940 = vpop.f32.mrf.mxu0
      %v3941 = vadd.f32 0.0, %v3940
      %3942 = vmatmul.bf16.gmra.mxu0 %v3912
      %v3943 = vpop.f32.mrf.mxu0
      %v3944 = vadd.f32 0.0, %v3943
      %v3945 = vpop.f32.mrf.mxu0
      %v3946 = vadd.f32 0.0, %v3945
      %3947 = vdwg.mxu0
      %v3948 = vadd.f32 %v3822, %v3924
      %v3949 = vadd.f32 %v3823, %v3926
      %v3950 = vadd.f32 %v3824, %v3929
      %v3951 = vadd.f32 %v3825, %v3931
      %v3952 = vadd.f32 %v3826, %v3934
      %v3953 = vadd.f32 %v3827, %v3936
      %v3954 = vadd.f32 %v3828, %v3939
      %v3955 = vadd.f32 %v3829, %v3941
      %v3956 = vadd.f32 %v3830, %v3944
      %v3957 = vadd.f32 %v3831, %v3946
      %v3958 = vld [vmem:[#allocation3 + $0x30] sm:$0x7]
      %s3959 = scalar_lea.vmem %s5, 112
      %v3960 = vld [vmem:[%s3959] sm:$0xf]
      %v3961 = vld [vmem:[%s3959 + $0x4] sm:$0xf]
      %v3962 = vld [vmem:[%s3959 + $0x8] sm:$0xf]
      %v3963 = vld [vmem:[%s3959 + $0xc] sm:$0xf]
      %v3965 = vunpack.c.l.b16 %v3958
      %v3966 = vpack.c.b16 %v3965, %v3965
      %v3968 = vshrl.u32 %v3870, 16
      %v3970 = vrot.slane %v3968, 2
      %v3971 = vshll.u32 %v3870, 16
      %v3973 = vrot.slane %v3971, 3
      %v3974 = vor.u32 %v3970, %v3973
      %v3976 = vshrl.u32 %v3871, 16
      %v3978 = vrot.slane %v3976, 2
      %v3979 = vshll.u32 %v3871, 16
      %v3981 = vrot.slane %v3979, 3
      %v3982 = vor.u32 %v3978, %v3981
      %v3983 = vsel %vm2776, %v3974, %v3982
      %v3985 = vshrl.u32 %v3872, 16
      %v3987 = vrot.slane %v3985, 2
      %v3988 = vshll.u32 %v3872, 16
      %v3990 = vrot.slane %v3988, 3
      %v3991 = vor.u32 %v3987, %v3990
      %v3992 = vsel %vm2776, %v3982, %v3991
      %v3994 = vshrl.u32 %v3873, 16
      %v3996 = vrot.slane %v3994, 2
      %v3997 = vshll.u32 %v3873, 16
      %v3999 = vrot.slane %v3997, 3
      %v4000 = vor.u32 %v3996, %v3999
      %v4001 = vsel %vm2776, %v3991, %v4000
      %v4003 = vshrl.u32 %v3874, 16
      %v4005 = vrot.slane %v4003, 2
      %v4006 = vshll.u32 %v3874, 16
      %v4008 = vrot.slane %v4006, 3
      %v4009 = vor.u32 %v4005, %v4008
      %v4010 = vsel %vm2776, %v4000, %v4009
      %v4012 = vshrl.u32 %v3966, 16
      %v4014 = vrot.slane %v4012, 2
      %v4015 = vshll.u32 %v3966, 16
      %v4017 = vrot.slane %v4015, 3
      %v4018 = vor.u32 %v4014, %v4017
      %v4019 = vsel %vm2776, %v4009, %v4018
      %v4024 = vunpack.c.l.b16 %v3960
      %v4025 = vunpack.c.l.b16 %v3961
      %v4026 = vunpack.c.l.b16 %v3962
      %v4027 = vunpack.c.l.b16 %v3963
      %v4028 = vpack.c.b16 %v4025, %v4024
      %v4029 = vpack.c.b16 %v4027, %v4026
      %v4033 = vsel %vm2093, %v3983, 0
      %v4036 = vsel %vm2093, %v3992, 0
      %v4039 = vsel %vm2093, %v4001, 0
      %v4042 = vsel %vm2093, %v4010, 0
      %v4045 = vsel %vm2093, %v4019, 0
      %4047 = vmatpush.bf16.msra.mxu0 0
      %4048 = vmatpush.bf16.msra.mxu0 0
      %4049 = vmatpush.bf16.msra.mxu0 0
      %4050 = vmatpush.bf16.msra.mxu0 0
      %4051 = vmatpush.bf16.msra.mxu0 0
      %4052 = vmatpush.bf16.msra.mxu0 0
      %4053 = vmatpush.bf16.msra.mxu0 %v4029
      %4054 = vmatpush.bf16.msra.mxu0 %v4028
      %4055 = vmatmul.bf16.gmra.mxu0 %v4033
      %v4056 = vpop.f32.mrf.mxu0
      %v4057 = vadd.f32 0.0, %v4056
      %v4058 = vpop.f32.mrf.mxu0
      %v4059 = vadd.f32 0.0, %v4058
      %4060 = vmatmul.bf16.gmra.mxu0 %v4036
      %v4061 = vpop.f32.mrf.mxu0
      %v4062 = vadd.f32 0.0, %v4061
      %v4063 = vpop.f32.mrf.mxu0
      %v4064 = vadd.f32 0.0, %v4063
      %4065 = vmatmul.bf16.gmra.mxu0 %v4039
      %v4066 = vpop.f32.mrf.mxu0
      %v4067 = vadd.f32 0.0, %v4066
      %v4068 = vpop.f32.mrf.mxu0
      %v4069 = vadd.f32 0.0, %v4068
      %4070 = vmatmul.bf16.gmra.mxu0 %v4042
      %v4071 = vpop.f32.mrf.mxu0
      %v4072 = vadd.f32 0.0, %v4071
      %v4073 = vpop.f32.mrf.mxu0
      %v4074 = vadd.f32 0.0, %v4073
      %4075 = vmatmul.bf16.gmra.mxu0 %v4045
      %v4076 = vpop.f32.mrf.mxu0
      %v4077 = vadd.f32 0.0, %v4076
      %v4078 = vpop.f32.mrf.mxu0
      %v4079 = vadd.f32 0.0, %v4078
      %4080 = vdwg.mxu0
      %v4081 = vadd.f32 %v3948, %v4057
      %v4082 = vadd.f32 %v3949, %v4059
      %v4083 = vadd.f32 %v3950, %v4062
      %v4084 = vadd.f32 %v3951, %v4064
      %v4085 = vadd.f32 %v3952, %v4067
      %v4086 = vadd.f32 %v3953, %v4069
      %v4087 = vadd.f32 %v3954, %v4072
      %v4088 = vadd.f32 %v3955, %v4074
      %v4089 = vadd.f32 %v3956, %v4077
      %v4090 = vadd.f32 %v3957, %v4079
      %v4091 = vld [vmem:[#allocation3 + $0x8] sm:$0x8]
      %s4092 = scalar_lea.vmem %s5, 128
      %v4093 = vld [vmem:[%s4092] sm:$0xf]
      %v4094 = vld [vmem:[%s4092 + $0x4] sm:$0xf]
      %v4095 = vld [vmem:[%s4092 + $0x8] sm:$0xf]
      %v4096 = vld [vmem:[%s4092 + $0xc] sm:$0xf]
      %v4098 = vunpack.c.l.b16 %v4091
      %v4099 = vpack.c.b16 %v3860, %v4098
      %v4100 = vrot.slane %v4099, 3
      %v4101 = vrot.slane %v3871, 3
      %v4102 = vsel %vm2910, %v4100, %v4101
      %v4103 = vrot.slane %v3872, 3
      %v4104 = vsel %vm2910, %v4101, %v4103
      %v4105 = vrot.slane %v3873, 3
      %v4106 = vsel %vm2910, %v4103, %v4105
      %v4107 = vrot.slane %v3874, 3
      %v4108 = vsel %vm2910, %v4105, %v4107
      %v4109 = vrot.slane %v3966, 3
      %v4110 = vsel %vm2910, %v4107, %v4109
      %v4115 = vunpack.c.l.b16 %v4093
      %v4116 = vunpack.c.l.b16 %v4094
      %v4117 = vunpack.c.l.b16 %v4095
      %v4118 = vunpack.c.l.b16 %v4096
      %v4119 = vpack.c.b16 %v4116, %v4115
      %v4120 = vpack.c.b16 %v4118, %v4117
      %v4124 = vsel %vm2093, %v4102, 0
      %v4127 = vsel %vm2093, %v4104, 0
      %v4130 = vsel %vm2093, %v4106, 0
      %v4133 = vsel %vm2093, %v4108, 0
      %v4136 = vsel %vm2093, %v4110, 0
      %4138 = vmatpush.bf16.msra.mxu0 0
      %4139 = vmatpush.bf16.msra.mxu0 0
      %4140 = vmatpush.bf16.msra.mxu0 0
      %4141 = vmatpush.bf16.msra.mxu0 0
      %4142 = vmatpush.bf16.msra.mxu0 0
      %4143 = vmatpush.bf16.msra.mxu0 0
      %4144 = vmatpush.bf16.msra.mxu0 %v4120
      %4145 = vmatpush.bf16.msra.mxu0 %v4119
      %4146 = vmatmul.bf16.gmra.mxu0 %v4124
      %v4147 = vpop.f32.mrf.mxu0
      %v4148 = vadd.f32 0.0, %v4147
      %v4149 = vpop.f32.mrf.mxu0
      %v4150 = vadd.f32 0.0, %v4149
      %4151 = vmatmul.bf16.gmra.mxu0 %v4127
      %v4152 = vpop.f32.mrf.mxu0
      %v4153 = vadd.f32 0.0, %v4152
      %v4154 = vpop.f32.mrf.mxu0
      %v4155 = vadd.f32 0.0, %v4154
      %4156 = vmatmul.bf16.gmra.mxu0 %v4130
      %v4157 = vpop.f32.mrf.mxu0
      %v4158 = vadd.f32 0.0, %v4157
      %v4159 = vpop.f32.mrf.mxu0
      %v4160 = vadd.f32 0.0, %v4159
      %4161 = vmatmul.bf16.gmra.mxu0 %v4133
      %v4162 = vpop.f32.mrf.mxu0
      %v4163 = vadd.f32 0.0, %v4162
      %v4164 = vpop.f32.mrf.mxu0
      %v4165 = vadd.f32 0.0, %v4164
      %4166 = vmatmul.bf16.gmra.mxu0 %v4136
      %v4167 = vpop.f32.mrf.mxu0
      %v4168 = vadd.f32 0.0, %v4167
      %v4169 = vpop.f32.mrf.mxu0
      %v4170 = vadd.f32 0.0, %v4169
      %4171 = vdwg.mxu0
      %v4172 = vadd.f32 %v4081, %v4148
      %v4173 = vadd.f32 %v4082, %v4150
      %v4174 = vadd.f32 %v4083, %v4153
      %v4175 = vadd.f32 %v4084, %v4155
      %v4176 = vadd.f32 %v4085, %v4158
      %v4177 = vadd.f32 %v4086, %v4160
      %v4178 = vadd.f32 %v4087, %v4163
      %v4179 = vadd.f32 %v4088, %v4165
      %v4180 = vadd.f32 %v4089, %v4168
      %v4181 = vadd.f32 %v4090, %v4170
      %v4182 = vld [vmem:[%s6] sm:$0x1]
      %v4184 = vperm.slane %v4182, 0
      %v4186 = vadd.f32 %v4172, %v4184
      %v4187 = vadd.f32 %v4173, %v4184
      %v4188 = vadd.f32 %v4174, %v4184
      %v4189 = vadd.f32 %v4175, %v4184
      %v4190 = vadd.f32 %v4176, %v4184
      %v4191 = vadd.f32 %v4177, %v4184
      %v4192 = vadd.f32 %v4178, %v4184
      %v4193 = vadd.f32 %v4179, %v4184
      %v4194 = vadd.f32 %v4180, %v4184
      %v4195 = vadd.f32 %v4181, %v4184
      %v4196 = vld [vmem:[#allocation2 + $0x4] sm:$0xe]
      %v4197 = vld [vmem:[#allocation2 + $0x8] sm:$0xf]
      %v4198 = vld [vmem:[#allocation2 + $0xc] sm:$0xf]
      %v4199 = vld [vmem:[#allocation2 + $0x10] sm:$0xf]
      %v4200 = vld [vmem:[#allocation2 + $0x14] sm:$0xf]
      %v4201 = vld [vmem:[#allocation2 + $0x18] sm:$0xf]
      %v4202 = vld [vmem:[#allocation2 + $0x1c] sm:$0xf]
      %v4203 = vld [vmem:[#allocation2 + $0x20] sm:$0xf]
      %v4204 = vld [vmem:[#allocation2 + $0x24] sm:$0xf]
      %v4205 = vld [vmem:[#allocation2 + $0x28] sm:$0xf]
      %v4206 = vld [vmem:[#allocation2 + $0x2c] sm:$0x3]
      %v4207 = vunpack.c.l.bf16 %v4196
      %v4208 = vunpack.c.l.bf16 %v4197
      %v4209 = vunpack.c.l.bf16 %v4198
      %v4210 = vunpack.c.l.bf16 %v4199
      %v4211 = vunpack.c.l.bf16 %v4200
      %v4212 = vunpack.c.l.bf16 %v4201
      %v4213 = vunpack.c.l.bf16 %v4202
      %v4214 = vunpack.c.l.bf16 %v4203
      %v4215 = vunpack.c.l.bf16 %v4204
      %v4216 = vunpack.c.l.bf16 %v4205
      %v4217 = vunpack.c.l.bf16 %v4206
      %vm4229 = vcmask 1044480
      %v4230 = vrot.slane %v4207, 3
      %v4231 = vrot.slane %v4208, 3
      %v4232 = vsel %vm4229, %v4230, %v4231
      %v4233 = vrot.slane %v4209, 3
      %v4234 = vsel %vm4229, %v4231, %v4233
      %v4235 = vrot.slane %v4210, 3
      %v4236 = vsel %vm4229, %v4233, %v4235
      %v4237 = vrot.slane %v4211, 3
      %v4238 = vsel %vm4229, %v4235, %v4237
      %v4239 = vrot.slane %v4212, 3
      %v4240 = vsel %vm4229, %v4237, %v4239
      %v4241 = vrot.slane %v4213, 3
      %v4242 = vsel %vm4229, %v4239, %v4241
      %v4243 = vrot.slane %v4214, 3
      %v4244 = vsel %vm4229, %v4241, %v4243
      %v4245 = vrot.slane %v4215, 3
      %v4246 = vsel %vm4229, %v4243, %v4245
      %v4247 = vrot.slane %v4216, 3
      %v4248 = vsel %vm4229, %v4245, %v4247
      %v4249 = vrot.slane %v4217, 3
      %v4250 = vsel %vm4229, %v4247, %v4249
      %v4261 = vadd.f32 %v4186, %v4232
      %v4262 = vadd.f32 %v4187, %v4234
      %v4263 = vadd.f32 %v4188, %v4236
      %v4264 = vadd.f32 %v4189, %v4238
      %v4265 = vadd.f32 %v4190, %v4240
      %v4266 = vadd.f32 %v4191, %v4242
      %v4267 = vadd.f32 %v4192, %v4244
      %v4268 = vadd.f32 %v4193, %v4246
      %v4269 = vadd.f32 %v4194, %v4248
      %v4270 = vadd.f32 %v4195, %v4250
      %v4271 = vld [vmem:[%s7] sm:$0xf]
      %v4272 = vld [vmem:[%s8] sm:$0xf]
      %4274 = vset.pattern.permute.xlu0 0
      %4275 = vperm.xlu0 %4274, %v4272
      %v4276 = vpop.permute.xlu0 %4275
      %v4279 = vsel %vm2093, %v4271, 0
      %v4282 = vsel %vm2093, %v4261, 0
      %v4285 = vsel %vm2093, %v4262, 0
      %v4288 = vsel %vm2093, %v4263, 0
      %v4291 = vsel %vm2093, %v4264, 0
      %v4294 = vsel %vm2093, %v4265, 0
      %v4297 = vsel %vm2093, %v4266, 0
      %v4300 = vsel %vm2093, %v4267, 0
      %v4303 = vsel %vm2093, %v4268, 0
      %v4306 = vsel %vm2093, %v4269, 0
      %v4309 = vsel %vm2093, %v4270, 0
      %4311 = vmatpush.xpose.msra.mxu0 0.0
      %4312 = vmatpush.xpose.msra.mxu0 0.0
      %4313 = vmatpush.xpose.msra.mxu0 0.0
      %4314 = vmatpush.xpose.msra.mxu0 0.0
      %4315 = vmatpush.xpose.msra.mxu0 0.0
      %4316 = vmatpush.xpose.msra.mxu0 0.0
      %4317 = vmatpush.xpose.msra.mxu0 %v4309
      %4318 = vmatpush.xpose.msra.mxu0 %v4306
      %4319 = vmatpush.xpose.msra.mxu0 %v4303
      %4320 = vmatpush.xpose.msra.mxu0 %v4300
      %4321 = vmatpush.xpose.msra.mxu0 %v4297
      %4322 = vmatpush.xpose.msra.mxu0 %v4294
      %4323 = vmatpush.xpose.msra.mxu0 %v4291
      %4324 = vmatpush.xpose.msra.mxu0 %v4288
      %4325 = vmatpush.xpose.msra.mxu0 %v4285
      %4326 = vmatpush.xpose.msra.mxu0 %v4282
      %4327 = vmatmul.f32.gmra.mxu0 %v4279
      %v4328 = vpop.f32.mrf.mxu0
      %v4329 = vadd.f32 %v4276, %v4328
      %4330 = vdwg.mxu0
      %v4331 = vsub.f32 0.0, %v4329
      %v4332 = vmul.f32 %v4331, 1.442695
      %v4333 = vpow.pop %v4332
      %v4334 = vadd.f32 %v4333, 1.0
      %v4335 = vrcp.pop %v4334
      %v4336 = vmul.f32 %v4334, %v4335
      %v4337 = vsub.f32 1.0, %v4336
      %v4338 = vmul.f32 %v4335, %v4337
      %v4339 = vadd.f32 %v4335, %v4338
      %vm4340 = vweird.f32 %v4334
      %vm4341 = vweird.f32 %v4335
      %vm4342 = vmor %vm4340, %vm4341
      %v4343 = vsel %vm4342, %v4335, %v4339
      %v4344 = vand.u32 2147483647, %v4334
      %vm4345 = vcmp.eq.f32.partialorder %v4344, 8.507059e+37
      %v4346 = vand.u32 %v4334, 2147483648
      %v4347 = vor.u32 1.1754944e-38, %v4346
      %v4348 = vsel %vm4345, %v4347, %v4343
      %v4349 = vmul.f32 1.0, %v4348
      %vm4350 = vcmask 650240
      %4351 = vst.msk [vmem:[%s330] sm:$0xf] %vm4350, %v4349
      %p4352 = scmp.lt.s32.totalorder %s20, 1
      %s4353 = scalar_select %p4352, %s20, 1
      %s4354 = smul.addr %s4353, 4
      %s4355 = scalar_lea.vmem %s9, %s4354
      // Predicated region
      $region57: #{gan_dis_ae_patch_forward.1} parent=55 // pred_check
        %p4356 = pneg %p232
      $region58: #{gan_dis_ae_patch_forward.1} parent=55 // pred_check_branch
        %4358 = sbr.rel (%p4356) target = $region60
      $region59: #{gan_dis_ae_patch_forward.1} parent=55 // pred_region
        _
      $region60: #{gan_dis_ae_patch_forward.1} parent=55 // pred_fallthru
        _
    $region56: #{gan_dis_ae_patch_forward.1} parent=5 // pred_fallthru
      _
    %p4359 = scmp.le.s32.totalorder 2, %s15
    // Predicated region
    $region61: #{gan_dis_ae_patch_forward.1} parent=5 // pred_check
      %p4360 = pneg %p4359
    $region62: #{gan_dis_ae_patch_forward.1} parent=5 // pred_check_branch
      %4362 = sbr.rel (%p4360) target = $region64
    $region63: #{gan_dis_ae_patch_forward.1} parent=5 // pred_region
      %s4363 = ssub.s32 %s15, 2
      // Predicated region
      $region65: #{gan_dis_ae_patch_forward.1} parent=63 // pred_check
        %p4364 = pneg %p238
      $region66: #{gan_dis_ae_patch_forward.1} parent=63 // pred_check_branch
        %4366 = sbr.rel (%p4364) target = $region68
      $region67: #{gan_dis_ae_patch_forward.1} parent=63 // pred_region
        %p4367 = scmp.lt.s32.totalorder %s21, 1
        %s4368 = scalar_select %p4367, %s21, 1
        %s4369 = smul.addr %s4368, 4
        %s4370 = scalar_lea.vmem %s9, %s4369
      $region68: #{gan_dis_ae_patch_forward.1} parent=63 // pred_fallthru
        _
    $region64: #{gan_dis_ae_patch_forward.1} parent=5 // pred_fallthru
      _
  $region6: #{gan_dis_ae_patch_forward.1} parent=0 // loop_footer
    %s19 = sadd.s32 1, %s15
  $region7: #{gan_dis_ae_patch_forward.1} parent=0 // loop_footer_branch
    %14 = sbr.rel target = $region3
  $region8: #{gan_dis_ae_patch_forward.1} parent=0 // loop_exit
    _

</llo_original>
